<compile_context>
chip_gen: v5e
topology: v5e:2x2
jax: 0.10.0
libtpu: 0.0.40
codegen_flags: <defaults>
</compile_context>

<pallas_src>
import functools

import jax
import jax.numpy as jnp
from jax import lax
from jax.experimental import pallas as pl
from jax.experimental.pallas import tpu as pltpu

HID = 100              # PyTorch hidden size
PAD = 128              # lane-padded hidden size
G = 4 * PAD            # padded gate width (i|f|o|g)
GATE_PERM = (0, 1, 3, 2)   # PyTorch gate order i|f|g|o -> kernel order i|f|o|g


# ---------------------------------------------------------------------------
# Parameter construction (deterministic, PyTorch-default-like init)
# ---------------------------------------------------------------------------
def init_raw_params(key):
    """Raw parameters in PyTorch layout."""
    ks = jax.random.split(key, 10)
    s = 1.0 / float(jnp.sqrt(jnp.float32(HID)))
    u = lambda k, shape: jax.random.uniform(k, shape, jnp.float32, -s, s)
    w_ih1 = u(ks[0], (4 * HID, 1))
    w_hh1 = u(ks[1], (4 * HID, HID))
    b_ih1 = u(ks[2], (4 * HID,))
    b_hh1 = u(ks[3], (4 * HID,))
    w_ih2 = u(ks[4], (4 * HID, HID))
    w_hh2 = u(ks[5], (4 * HID, HID))
    b_ih2 = u(ks[6], (4 * HID,))
    b_hh2 = u(ks[7], (4 * HID,))
    w_lin = u(ks[8], (1, HID))
    b_lin = u(ks[9], (1,))
    return (w_ih1, w_hh1, b_ih1, b_hh1,
            w_ih2, w_hh2, b_ih2, b_hh2,
            w_lin, b_lin)


def _pad_gate_matrix(w, in_dim, in_pad):
    """(4*HID, in_dim) PyTorch weight -> transposed (in_pad, 4*PAD), gates i|f|o|g."""
    wt = w.T  # (in_dim, 4*HID), PyTorch gate order i|f|g|o
    parts = [
        jnp.pad(wt[:, g * HID:(g + 1) * HID],
                ((0, in_pad - in_dim), (0, PAD - HID)))
        for g in GATE_PERM
    ]
    return jnp.concatenate(parts, axis=1)


def _pad_gate_bias(b_ih, b_hh):
    b = (b_ih + b_hh).reshape(1, 4 * HID)
    parts = [jnp.pad(b[:, g * HID:(g + 1) * HID], ((0, 0), (0, PAD - HID)))
             for g in GATE_PERM]
    return jnp.concatenate(parts, axis=1)  # (1, 4*PAD)


def make_padded_params(raw):
    (w_ih1, w_hh1, b_ih1, b_hh1,
     w_ih2, w_hh2, b_ih2, b_hh2,
     w_lin, b_lin) = raw
    wih1 = _pad_gate_matrix(w_ih1, 1, 1)                     # (1, 512) f32 (VPU broadcast)
    whh1 = _pad_gate_matrix(w_hh1, HID, PAD)                 # (128, 512)
    b1 = _pad_gate_bias(b_ih1, b_hh1)                        # (1, 512) f32
    wih2 = _pad_gate_matrix(w_ih2, HID, PAD)                 # (128, 512)
    whh2 = _pad_gate_matrix(w_hh2, HID, PAD)                 # (128, 512)
    b2 = _pad_gate_bias(b_ih2, b_hh2)                        # (1, 512) f32

    # Block-diagonal recurrent weight: [h1|h2](1,256) @ (256,1024) -> [rec1|rec2]
    whh_blk = jnp.zeros((2 * PAD, 2 * G), jnp.float32)
    whh_blk = whh_blk.at[:PAD, :G].set(whh1).at[PAD:, G:].set(whh2)
    whh_blk = whh_blk.astype(jnp.bfloat16)                   # (256, 1024) bf16
    wih2_bf = wih2.astype(jnp.bfloat16)                      # (128, 512) bf16

    wlin = jnp.pad(w_lin, ((0, 0), (0, PAD - HID)))          # (1, 128) f32
    blin = b_lin.reshape(1).astype(jnp.float32)              # (1,)
    return (wih1, b1, wih2_bf, whh_blk, b2, wlin, blin)


# ---------------------------------------------------------------------------
# Pallas kernel
# ---------------------------------------------------------------------------
def _decoder_kernel(blin_sm, gx1_ref, h0_ref, c0_ref,
                    wih1_ref, b1_ref, wih2_ref, whh_blk_ref, b2_ref, wlin_ref,
                    out_ref, *, T, future):

    def lstm_gates(gates, c):
        # gates: (1, 4*PAD), order i|f|o|g
        sig = jax.nn.sigmoid(gates[:, :3 * PAD])          # one EUP launch for i,f,o
        i = sig[:, 0 * PAD:1 * PAD]
        f = sig[:, 1 * PAD:2 * PAD]
        o = sig[:, 2 * PAD:3 * PAD]
        g = jnp.tanh(gates[:, 3 * PAD:4 * PAD])           # one EUP launch for g
        c_new = f * c + i * g
        h_new = o * jnp.tanh(c_new)
        return h_new, c_new

    def step(t, gx1, h1, c1, h2, c2):
        # fused recurrent contributions for both layers (block-diag RHS, bf16 MXU)
        hh = jnp.concatenate([h1, h2], axis=-1).astype(jnp.bfloat16)      # (1, 256)
        rec = jnp.dot(hh, whh_blk_ref[...],
                      preferred_element_type=jnp.float32)                 # (1, 1024)
        h1, c1 = lstm_gates(gx1 + rec[:, :G], c1)
        gx2 = jnp.dot(h1.astype(jnp.bfloat16), wih2_ref[...],
                      preferred_element_type=jnp.float32)                 # (1, 512)
        h2, c2 = lstm_gates(gx2 + rec[:, G:] + b2_ref[...], c2)
        # linear1: padded lanes of h2 / wlin are zero
        y = jnp.sum(h2 * wlin_ref[...], axis=-1, keepdims=True) + blin_sm[0]
        out_ref[t] = y[0, 0]                               # scalar store to SMEM
        return h1, c1, h2, c2, y

    def teacher_step(t, carry):
        h1, c1, h2, c2 = carry
        gx1 = gx1_ref[pl.ds(t, 1), :]                      # x_t*W_ih1 + b1, precomputed
        h1, c1, h2, c2, _ = step(t, gx1, h1, c1, h2, c2)
        return h1, c1, h2, c2

    zeros = jnp.zeros((1, PAD), jnp.float32)
    carry = (h0_ref[...], c0_ref[...], zeros, zeros)

    # ---- teacher-forced loop over [0, T), unrolled by 4 ----
    UNROLL = 4
    n_blocks = T // UNROLL
    if n_blocks > 0:
        def teacher_block(i, c):
            t0 = i * UNROLL
            for u in range(UNROLL):
                c = teacher_step(t0 + u, c)
            return c
        carry = lax.fori_loop(0, n_blocks, teacher_block, carry)
    for t in range(n_blocks * UNROLL, T):                  # static remainder (< UNROLL)
        carry = teacher_step(t, carry)

    # ---- autoregressive loop over [T, T+future) ----
    if future > 0:
        h1, c1, h2, c2 = carry
        if T > 0:
            y = jnp.full((1, 1), out_ref[T - 1], jnp.float32)
        else:
            # degenerate T==0: feed 0.0 as the first "previous output"
            y = jnp.zeros((1, 1), jnp.float32)

        def ar_body(t, c):
            h1, c1, h2, c2, y = c
            gx1 = y * wih1_ref[...] + b1_ref[...]          # feedback kept in vregs
            return step(t, gx1, h1, c1, h2, c2)

        lax.fori_loop(T, T + future, ar_body, (h1, c1, h2, c2, y))


def decoder_forward(x, h0, c0, params, future=0):
    """x: (T, 1) f32; h0, c0: (1, 100) f32. Returns (1, T + future) f32."""
    T = int(x.shape[0])
    future = int(future)
    total = T + future
    assert total > 0

    wih1, b1, wih2, whh_blk, b2, wlin, blin = params
    h0p = jnp.pad(h0.astype(jnp.float32), ((0, 0), (0, PAD - HID)))
    c0p = jnp.pad(c0.astype(jnp.float32), ((0, 0), (0, PAD - HID)))

    # Precompute layer-1 input contributions for all teacher steps (bias folded in).
    T_eff = max(T, 1)
    x_col = jnp.zeros((T_eff, 1), jnp.float32).at[:T].set(
        x.astype(jnp.float32).reshape(T, 1))
    gx1_all = x_col * wih1 + b1                            # (T_eff, 512)

    kernel = functools.partial(_decoder_kernel, T=T, future=future)
    out = pl.pallas_call(
        kernel,
        out_shape=jax.ShapeDtypeStruct((total,), jnp.float32),
        in_specs=[
            pl.BlockSpec(memory_space=pltpu.MemorySpace.SMEM),   # blin (scalar)
        ] + [pl.BlockSpec(memory_space=pltpu.MemorySpace.VMEM)] * 9,
        out_specs=pl.BlockSpec(memory_space=pltpu.MemorySpace.SMEM),
    )(blin, gx1_all, h0p, c0p, wih1, b1, wih2, whh_blk, b2, wlin)

    # torch.stack(outputs, 1).squeeze(2) -> shape (1, T + future)
    return out.reshape(1, total)


# ---------------------------------------------------------------------------
# Pure-JAX reference (mirrors the PyTorch forward, no `optimize` branch)
# ---------------------------------------------------------------------------
# TODO(synk): the `optimize=True` path (scipy curve_fit line extrapolation with
# host round-trips) has no clean Pallas equivalent and is not implemented.
def decoder_reference(x, h0, c0, raw, future=0):
    (w_ih1, w_hh1, b_ih1, b_hh1,
     w_ih2, w_hh2, b_ih2, b_hh2,
     w_lin, b_lin) = raw

    def cell(xt, h, c, w_ih, w_hh, b_ih, b_hh):
        gates = xt @ w_ih.T + b_ih + h @ w_hh.T + b_hh
        i, f, g, o = jnp.split(gates, 4, axis=-1)
        c = jax.nn.sigmoid(f) * c + jax.nn.sigmoid(i) * jnp.tanh(g)
        return jax.nn.sigmoid(o) * jnp.tanh(c), c

    h1, c1 = h0, c0
    h2 = jnp.zeros((1, HID), jnp.float32)
    c2 = jnp.zeros((1, HID), jnp.float32)
    outs, out = [], None
    for t in range(x.shape[0]):
        xt = x[t:t + 1]
        h1, c1 = cell(xt, h1, c1, w_ih1, w_hh1, b_ih1, b_hh1)
        h2, c2 = cell(h1, h2, c2, w_ih2, w_hh2, b_ih2, b_hh2)
        out = h2 @ w_lin.T + b_lin
        outs.append(out)
    for _ in range(future):
        h1, c1 = cell(out, h1, c1, w_ih1, w_hh1, b_ih1, b_hh1)
        h2, c2 = cell(h1, h2, c2, w_ih2, w_hh2, b_ih2, b_hh2)
        out = h2 @ w_lin.T + b_lin
        outs.append(out)
    return jnp.concatenate(outs, axis=0).reshape(1, -1)


if __name__ == "__main__":
    key = jax.random.PRNGKey(0)
    kx, kh, kc, kp = jax.random.split(key, 4)

    T = 8
    FUTURE = 2
    x = jax.random.normal(kx, (T, 1), jnp.float32)
    h0 = 0.1 * jax.random.normal(kh, (1, HID), jnp.float32)
    c0 = 0.1 * jax.random.normal(kc, (1, HID), jnp.float32)

    raw_params = init_raw_params(kp)
    params = make_padded_params(raw_params)

    out = decoder_forward(x, h0, c0, params, future=FUTURE)
    out = jax.block_until_ready(out)

    ref = decoder_reference(x, h0, c0, raw_params, future=FUTURE)
    assert out.shape == (1, T + FUTURE), out.shape
    assert bool(jnp.all(jnp.isfinite(out)))
    assert bool(jnp.allclose(out, ref, atol=2e-2, rtol=2e-2)), (out, ref)

    print("KERNEL_OK")
</pallas_src>

<mosaic_0001>
module attributes {stable_mosaic.version = 11 : i64} {
  func.func @_decoder_kernel(%arg0: memref<1xf32, #tpu.memory_space<smem>>, %arg1: memref<8x512xf32, #tpu.memory_space<vmem>>, %arg2: memref<1x128xf32, #tpu.memory_space<vmem>>, %arg3: memref<1x128xf32, #tpu.memory_space<vmem>>, %arg4: memref<1x512xf32, #tpu.memory_space<vmem>>, %arg5: memref<1x512xf32, #tpu.memory_space<vmem>>, %arg6: memref<128x512xbf16, #tpu.memory_space<vmem>>, %arg7: memref<256x1024xbf16, #tpu.memory_space<vmem>>, %arg8: memref<1x512xf32, #tpu.memory_space<vmem>>, %arg9: memref<1x128xf32, #tpu.memory_space<vmem>>, %arg10: memref<10xf32, #tpu.memory_space<smem>>) attributes {dimension_semantics = [], scalar_prefetch = 0 : i64, scratch_operands = 0 : i64, tpu.core_type = #tpu.core_type<tc>} {
    %cst = arith.constant 0.000000e+00 : f32
    %0 = vector.broadcast %cst : f32 to vector<1x128xf32>
    %c0 = arith.constant 0 : index
    %c0_0 = arith.constant 0 : index
    %1 = vector.load %arg2[%c0, %c0_0] : memref<1x128xf32, #tpu.memory_space<vmem>>, vector<1x128xf32>
    %c0_1 = arith.constant 0 : index
    %c0_2 = arith.constant 0 : index
    %2 = vector.load %arg3[%c0_1, %c0_2] : memref<1x128xf32, #tpu.memory_space<vmem>>, vector<1x128xf32>
    %c0_i32 = arith.constant 0 : i32
    %c2_i32 = arith.constant 2 : i32
    %3 = arith.addi %c0_i32, %c2_i32 : i32
    %c1_i32 = arith.constant 1 : i32
    %4:4 = scf.for %arg11 = %c0_i32 to %3 step %c1_i32 iter_args(%arg12 = %1, %arg13 = %2, %arg14 = %0, %arg15 = %0) -> (vector<1x128xf32>, vector<1x128xf32>, vector<1x128xf32>, vector<1x128xf32>)  : i32 {
      %c4_i32 = arith.constant 4 : i32
      %9 = arith.muli %arg11, %c4_i32 : i32
      %c0_i32_7 = arith.constant 0 : i32
      %10 = arith.addi %9, %c0_i32_7 : i32
      %11 = arith.index_cast %10 : i32 to index
      %c0_8 = arith.constant 0 : index
      %12 = vector.load %arg1[%11, %c0_8] : memref<8x512xf32, #tpu.memory_space<vmem>>, vector<1x512xf32>
      %13 = tpu.concatenate %arg12, %arg14 in 1 : vector<1x128xf32>, vector<1x128xf32> -> vector<1x256xf32>
      %14 = arith.truncf %13 : vector<1x256xf32> to vector<1x256xbf16>
      %c0_9 = arith.constant 0 : index
      %c0_10 = arith.constant 0 : index
      %15 = vector.load %arg7[%c0_9, %c0_10] : memref<256x1024xbf16, #tpu.memory_space<vmem>>, vector<256x1024xbf16>
      %cst_11 = arith.constant dense<0.000000e+00> : vector<1x1024xf32>
      %16 = tpu.matmul %14, %15, %cst_11 {dimension_numbers = #tpu.dot_dimension_numbers<[1], [0], [0], [1], [0, 0, 1, 1], [], []>} : vector<1x256xbf16>, vector<256x1024xbf16>, vector<1x1024xf32> -> vector<1x1024xf32>
      %17 = vector.extract_strided_slice %16 {offsets = [0, 0], sizes = [1, 512], strides = [1, 1]} : vector<1x1024xf32> to vector<1x512xf32>
      %18 = arith.addf %12, %17 : vector<1x512xf32>
      %19 = vector.extract_strided_slice %18 {offsets = [0, 0], sizes = [1, 384], strides = [1, 1]} : vector<1x512xf32> to vector<1x384xf32>
      %20 = arith.negf %19 : vector<1x384xf32>
      %21 = math.exp %20 : vector<1x384xf32>
      %cst_12 = arith.constant 1.000000e+00 : f32
      %22 = vector.broadcast %cst_12 : f32 to vector<1x384xf32>
      %23 = arith.addf %22, %21 : vector<1x384xf32>
      %24 = arith.divf %22, %23 : vector<1x384xf32>
      %25 = vector.extract_strided_slice %24 {offsets = [0, 0], sizes = [1, 128], strides = [1, 1]} : vector<1x384xf32> to vector<1x128xf32>
      %26 = vector.extract_strided_slice %24 {offsets = [0, 128], sizes = [1, 128], strides = [1, 1]} : vector<1x384xf32> to vector<1x128xf32>
      %27 = vector.extract_strided_slice %24 {offsets = [0, 256], sizes = [1, 128], strides = [1, 1]} : vector<1x384xf32> to vector<1x128xf32>
      %28 = vector.extract_strided_slice %18 {offsets = [0, 384], sizes = [1, 128], strides = [1, 1]} : vector<1x512xf32> to vector<1x128xf32>
      %29 = math.tanh %28 : vector<1x128xf32>
      %30 = arith.mulf %26, %arg13 : vector<1x128xf32>
      %31 = arith.mulf %25, %29 : vector<1x128xf32>
      %32 = arith.addf %30, %31 : vector<1x128xf32>
      %33 = math.tanh %32 : vector<1x128xf32>
      %34 = arith.mulf %27, %33 : vector<1x128xf32>
      %35 = arith.truncf %34 : vector<1x128xf32> to vector<1x128xbf16>
      %c0_13 = arith.constant 0 : index
      %c0_14 = arith.constant 0 : index
      %36 = vector.load %arg6[%c0_13, %c0_14] : memref<128x512xbf16, #tpu.memory_space<vmem>>, vector<128x512xbf16>
      %cst_15 = arith.constant dense<0.000000e+00> : vector<1x512xf32>
      %37 = tpu.matmul %35, %36, %cst_15 {dimension_numbers = #tpu.dot_dimension_numbers<[1], [0], [0], [1], [0, 0, 1, 1], [], []>} : vector<1x128xbf16>, vector<128x512xbf16>, vector<1x512xf32> -> vector<1x512xf32>
      %38 = vector.extract_strided_slice %16 {offsets = [0, 512], sizes = [1, 512], strides = [1, 1]} : vector<1x1024xf32> to vector<1x512xf32>
      %39 = arith.addf %37, %38 : vector<1x512xf32>
      %c0_16 = arith.constant 0 : index
      %c0_17 = arith.constant 0 : index
      %40 = vector.load %arg8[%c0_16, %c0_17] : memref<1x512xf32, #tpu.memory_space<vmem>>, vector<1x512xf32>
      %41 = arith.addf %39, %40 : vector<1x512xf32>
      %42 = vector.extract_strided_slice %41 {offsets = [0, 0], sizes = [1, 384], strides = [1, 1]} : vector<1x512xf32> to vector<1x384xf32>
      %43 = arith.negf %42 : vector<1x384xf32>
      %44 = math.exp %43 : vector<1x384xf32>
      %cst_18 = arith.constant 1.000000e+00 : f32
      %45 = vector.broadcast %cst_18 : f32 to vector<1x384xf32>
      %46 = arith.addf %45, %44 : vector<1x384xf32>
      %47 = arith.divf %45, %46 : vector<1x384xf32>
      %48 = vector.extract_strided_slice %47 {offsets = [0, 0], sizes = [1, 128], strides = [1, 1]} : vector<1x384xf32> to vector<1x128xf32>
      %49 = vector.extract_strided_slice %47 {offsets = [0, 128], sizes = [1, 128], strides = [1, 1]} : vector<1x384xf32> to vector<1x128xf32>
      %50 = vector.extract_strided_slice %47 {offsets = [0, 256], sizes = [1, 128], strides = [1, 1]} : vector<1x384xf32> to vector<1x128xf32>
      %51 = vector.extract_strided_slice %41 {offsets = [0, 384], sizes = [1, 128], strides = [1, 1]} : vector<1x512xf32> to vector<1x128xf32>
      %52 = math.tanh %51 : vector<1x128xf32>
      %53 = arith.mulf %49, %arg15 : vector<1x128xf32>
      %54 = arith.mulf %48, %52 : vector<1x128xf32>
      %55 = arith.addf %53, %54 : vector<1x128xf32>
      %56 = math.tanh %55 : vector<1x128xf32>
      %57 = arith.mulf %50, %56 : vector<1x128xf32>
      %c0_19 = arith.constant 0 : index
      %c0_20 = arith.constant 0 : index
      %58 = vector.load %arg9[%c0_19, %c0_20] : memref<1x128xf32, #tpu.memory_space<vmem>>, vector<1x128xf32>
      %59 = arith.mulf %57, %58 : vector<1x128xf32>
      %cst_21 = arith.constant dense<0.000000e+00> : vector<1xf32>
      %60 = vector.multi_reduction <add>, %59, %cst_21 [1] : vector<1x128xf32> to vector<1xf32>
      %61 = vector.shape_cast %60 : vector<1xf32> to vector<1x1xf32>
      %c0_22 = arith.constant 0 : index
      %62 = memref.load %arg0[%c0_22] : memref<1xf32, #tpu.memory_space<smem>>
      %63 = vector.broadcast %62 : f32 to vector<1x1xf32>
      %64 = arith.addf %61, %63 : vector<1x1xf32>
      %65 = vector.extract %64[0, 0] : f32 from vector<1x1xf32>
      %66 = arith.index_cast %10 : i32 to index
      %67 = memref.load %arg10[%66] : memref<10xf32, #tpu.memory_space<smem>>
      memref.store %65, %arg10[%66] : memref<10xf32, #tpu.memory_space<smem>>
      %c1_i32_23 = arith.constant 1 : i32
      %68 = arith.addi %9, %c1_i32_23 : i32
      %69 = arith.index_cast %68 : i32 to index
      %c0_24 = arith.constant 0 : index
      %70 = vector.load %arg1[%69, %c0_24] : memref<8x512xf32, #tpu.memory_space<vmem>>, vector<1x512xf32>
      %71 = tpu.concatenate %34, %57 in 1 : vector<1x128xf32>, vector<1x128xf32> -> vector<1x256xf32>
      %72 = arith.truncf %71 : vector<1x256xf32> to vector<1x256xbf16>
      %c0_25 = arith.constant 0 : index
      %c0_26 = arith.constant 0 : index
      %73 = vector.load %arg7[%c0_25, %c0_26] : memref<256x1024xbf16, #tpu.memory_space<vmem>>, vector<256x1024xbf16>
      %cst_27 = arith.constant dense<0.000000e+00> : vector<1x1024xf32>
      %74 = tpu.matmul %72, %73, %cst_27 {dimension_numbers = #tpu.dot_dimension_numbers<[1], [0], [0], [1], [0, 0, 1, 1], [], []>} : vector<1x256xbf16>, vector<256x1024xbf16>, vector<1x1024xf32> -> vector<1x1024xf32>
      %75 = vector.extract_strided_slice %74 {offsets = [0, 0], sizes = [1, 512], strides = [1, 1]} : vector<1x1024xf32> to vector<1x512xf32>
      %76 = arith.addf %70, %75 : vector<1x512xf32>
      %77 = vector.extract_strided_slice %76 {offsets = [0, 0], sizes = [1, 384], strides = [1, 1]} : vector<1x512xf32> to vector<1x384xf32>
      %78 = arith.negf %77 : vector<1x384xf32>
      %79 = math.exp %78 : vector<1x384xf32>
      %cst_28 = arith.constant 1.000000e+00 : f32
      %80 = vector.broadcast %cst_28 : f32 to vector<1x384xf32>
      %81 = arith.addf %80, %79 : vector<1x384xf32>
      %82 = arith.divf %80, %81 : vector<1x384xf32>
      %83 = vector.extract_strided_slice %82 {offsets = [0, 0], sizes = [1, 128], strides = [1, 1]} : vector<1x384xf32> to vector<1x128xf32>
      %84 = vector.extract_strided_slice %82 {offsets = [0, 128], sizes = [1, 128], strides = [1, 1]} : vector<1x384xf32> to vector<1x128xf32>
      %85 = vector.extract_strided_slice %82 {offsets = [0, 256], sizes = [1, 128], strides = [1, 1]} : vector<1x384xf32> to vector<1x128xf32>
      %86 = vector.extract_strided_slice %76 {offsets = [0, 384], sizes = [1, 128], strides = [1, 1]} : vector<1x512xf32> to vector<1x128xf32>
      %87 = math.tanh %86 : vector<1x128xf32>
      %88 = arith.mulf %84, %32 : vector<1x128xf32>
      %89 = arith.mulf %83, %87 : vector<1x128xf32>
      %90 = arith.addf %88, %89 : vector<1x128xf32>
      %91 = math.tanh %90 : vector<1x128xf32>
      %92 = arith.mulf %85, %91 : vector<1x128xf32>
      %93 = arith.truncf %92 : vector<1x128xf32> to vector<1x128xbf16>
      %c0_29 = arith.constant 0 : index
      %c0_30 = arith.constant 0 : index
      %94 = vector.load %arg6[%c0_29, %c0_30] : memref<128x512xbf16, #tpu.memory_space<vmem>>, vector<128x512xbf16>
      %cst_31 = arith.constant dense<0.000000e+00> : vector<1x512xf32>
      %95 = tpu.matmul %93, %94, %cst_31 {dimension_numbers = #tpu.dot_dimension_numbers<[1], [0], [0], [1], [0, 0, 1, 1], [], []>} : vector<1x128xbf16>, vector<128x512xbf16>, vector<1x512xf32> -> vector<1x512xf32>
      %96 = vector.extract_strided_slice %74 {offsets = [0, 512], sizes = [1, 512], strides = [1, 1]} : vector<1x1024xf32> to vector<1x512xf32>
      %97 = arith.addf %95, %96 : vector<1x512xf32>
      %c0_32 = arith.constant 0 : index
      %c0_33 = arith.constant 0 : index
      %98 = vector.load %arg8[%c0_32, %c0_33] : memref<1x512xf32, #tpu.memory_space<vmem>>, vector<1x512xf32>
      %99 = arith.addf %97, %98 : vector<1x512xf32>
      %100 = vector.extract_strided_slice %99 {offsets = [0, 0], sizes = [1, 384], strides = [1, 1]} : vector<1x512xf32> to vector<1x384xf32>
      %101 = arith.negf %100 : vector<1x384xf32>
      %102 = math.exp %101 : vector<1x384xf32>
      %cst_34 = arith.constant 1.000000e+00 : f32
      %103 = vector.broadcast %cst_34 : f32 to vector<1x384xf32>
      %104 = arith.addf %103, %102 : vector<1x384xf32>
      %105 = arith.divf %103, %104 : vector<1x384xf32>
      %106 = vector.extract_strided_slice %105 {offsets = [0, 0], sizes = [1, 128], strides = [1, 1]} : vector<1x384xf32> to vector<1x128xf32>
      %107 = vector.extract_strided_slice %105 {offsets = [0, 128], sizes = [1, 128], strides = [1, 1]} : vector<1x384xf32> to vector<1x128xf32>
      %108 = vector.extract_strided_slice %105 {offsets = [0, 256], sizes = [1, 128], strides = [1, 1]} : vector<1x384xf32> to vector<1x128xf32>
      %109 = vector.extract_strided_slice %99 {offsets = [0, 384], sizes = [1, 128], strides = [1, 1]} : vector<1x512xf32> to vector<1x128xf32>
      %110 = math.tanh %109 : vector<1x128xf32>
      %111 = arith.mulf %107, %55 : vector<1x128xf32>
      %112 = arith.mulf %106, %110 : vector<1x128xf32>
      %113 = arith.addf %111, %112 : vector<1x128xf32>
      %114 = math.tanh %113 : vector<1x128xf32>
      %115 = arith.mulf %108, %114 : vector<1x128xf32>
      %c0_35 = arith.constant 0 : index
      %c0_36 = arith.constant 0 : index
      %116 = vector.load %arg9[%c0_35, %c0_36] : memref<1x128xf32, #tpu.memory_space<vmem>>, vector<1x128xf32>
      %117 = arith.mulf %115, %116 : vector<1x128xf32>
      %cst_37 = arith.constant dense<0.000000e+00> : vector<1xf32>
      %118 = vector.multi_reduction <add>, %117, %cst_37 [1] : vector<1x128xf32> to vector<1xf32>
      %119 = vector.shape_cast %118 : vector<1xf32> to vector<1x1xf32>
      %c0_38 = arith.constant 0 : index
      %120 = memref.load %arg0[%c0_38] : memref<1xf32, #tpu.memory_space<smem>>
      %121 = vector.broadcast %120 : f32 to vector<1x1xf32>
      %122 = arith.addf %119, %121 : vector<1x1xf32>
      %123 = vector.extract %122[0, 0] : f32 from vector<1x1xf32>
      %124 = arith.index_cast %68 : i32 to index
      %125 = memref.load %arg10[%124] : memref<10xf32, #tpu.memory_space<smem>>
      memref.store %123, %arg10[%124] : memref<10xf32, #tpu.memory_space<smem>>
      %c2_i32_39 = arith.constant 2 : i32
      %126 = arith.addi %9, %c2_i32_39 : i32
      %127 = arith.index_cast %126 : i32 to index
      %c0_40 = arith.constant 0 : index
      %128 = vector.load %arg1[%127, %c0_40] : memref<8x512xf32, #tpu.memory_space<vmem>>, vector<1x512xf32>
      %129 = tpu.concatenate %92, %115 in 1 : vector<1x128xf32>, vector<1x128xf32> -> vector<1x256xf32>
      %130 = arith.truncf %129 : vector<1x256xf32> to vector<1x256xbf16>
      %c0_41 = arith.constant 0 : index
      %c0_42 = arith.constant 0 : index
      %131 = vector.load %arg7[%c0_41, %c0_42] : memref<256x1024xbf16, #tpu.memory_space<vmem>>, vector<256x1024xbf16>
      %cst_43 = arith.constant dense<0.000000e+00> : vector<1x1024xf32>
      %132 = tpu.matmul %130, %131, %cst_43 {dimension_numbers = #tpu.dot_dimension_numbers<[1], [0], [0], [1], [0, 0, 1, 1], [], []>} : vector<1x256xbf16>, vector<256x1024xbf16>, vector<1x1024xf32> -> vector<1x1024xf32>
      %133 = vector.extract_strided_slice %132 {offsets = [0, 0], sizes = [1, 512], strides = [1, 1]} : vector<1x1024xf32> to vector<1x512xf32>
      %134 = arith.addf %128, %133 : vector<1x512xf32>
      %135 = vector.extract_strided_slice %134 {offsets = [0, 0], sizes = [1, 384], strides = [1, 1]} : vector<1x512xf32> to vector<1x384xf32>
      %136 = arith.negf %135 : vector<1x384xf32>
      %137 = math.exp %136 : vector<1x384xf32>
      %cst_44 = arith.constant 1.000000e+00 : f32
      %138 = vector.broadcast %cst_44 : f32 to vector<1x384xf32>
      %139 = arith.addf %138, %137 : vector<1x384xf32>
      %140 = arith.divf %138, %139 : vector<1x384xf32>
      %141 = vector.extract_strided_slice %140 {offsets = [0, 0], sizes = [1, 128], strides = [1, 1]} : vector<1x384xf32> to vector<1x128xf32>
      %142 = vector.extract_strided_slice %140 {offsets = [0, 128], sizes = [1, 128], strides = [1, 1]} : vector<1x384xf32> to vector<1x128xf32>
      %143 = vector.extract_strided_slice %140 {offsets = [0, 256], sizes = [1, 128], strides = [1, 1]} : vector<1x384xf32> to vector<1x128xf32>
      %144 = vector.extract_strided_slice %134 {offsets = [0, 384], sizes = [1, 128], strides = [1, 1]} : vector<1x512xf32> to vector<1x128xf32>
      %145 = math.tanh %144 : vector<1x128xf32>
      %146 = arith.mulf %142, %90 : vector<1x128xf32>
      %147 = arith.mulf %141, %145 : vector<1x128xf32>
      %148 = arith.addf %146, %147 : vector<1x128xf32>
      %149 = math.tanh %148 : vector<1x128xf32>
      %150 = arith.mulf %143, %149 : vector<1x128xf32>
      %151 = arith.truncf %150 : vector<1x128xf32> to vector<1x128xbf16>
      %c0_45 = arith.constant 0 : index
      %c0_46 = arith.constant 0 : index
      %152 = vector.load %arg6[%c0_45, %c0_46] : memref<128x512xbf16, #tpu.memory_space<vmem>>, vector<128x512xbf16>
      %cst_47 = arith.constant dense<0.000000e+00> : vector<1x512xf32>
      %153 = tpu.matmul %151, %152, %cst_47 {dimension_numbers = #tpu.dot_dimension_numbers<[1], [0], [0], [1], [0, 0, 1, 1], [], []>} : vector<1x128xbf16>, vector<128x512xbf16>, vector<1x512xf32> -> vector<1x512xf32>
      %154 = vector.extract_strided_slice %132 {offsets = [0, 512], sizes = [1, 512], strides = [1, 1]} : vector<1x1024xf32> to vector<1x512xf32>
      %155 = arith.addf %153, %154 : vector<1x512xf32>
      %c0_48 = arith.constant 0 : index
      %c0_49 = arith.constant 0 : index
      %156 = vector.load %arg8[%c0_48, %c0_49] : memref<1x512xf32, #tpu.memory_space<vmem>>, vector<1x512xf32>
      %157 = arith.addf %155, %156 : vector<1x512xf32>
      %158 = vector.extract_strided_slice %157 {offsets = [0, 0], sizes = [1, 384], strides = [1, 1]} : vector<1x512xf32> to vector<1x384xf32>
      %159 = arith.negf %158 : vector<1x384xf32>
      %160 = math.exp %159 : vector<1x384xf32>
      %cst_50 = arith.constant 1.000000e+00 : f32
      %161 = vector.broadcast %cst_50 : f32 to vector<1x384xf32>
      %162 = arith.addf %161, %160 : vector<1x384xf32>
      %163 = arith.divf %161, %162 : vector<1x384xf32>
      %164 = vector.extract_strided_slice %163 {offsets = [0, 0], sizes = [1, 128], strides = [1, 1]} : vector<1x384xf32> to vector<1x128xf32>
      %165 = vector.extract_strided_slice %163 {offsets = [0, 128], sizes = [1, 128], strides = [1, 1]} : vector<1x384xf32> to vector<1x128xf32>
      %166 = vector.extract_strided_slice %163 {offsets = [0, 256], sizes = [1, 128], strides = [1, 1]} : vector<1x384xf32> to vector<1x128xf32>
      %167 = vector.extract_strided_slice %157 {offsets = [0, 384], sizes = [1, 128], strides = [1, 1]} : vector<1x512xf32> to vector<1x128xf32>
      %168 = math.tanh %167 : vector<1x128xf32>
      %169 = arith.mulf %165, %113 : vector<1x128xf32>
      %170 = arith.mulf %164, %168 : vector<1x128xf32>
      %171 = arith.addf %169, %170 : vector<1x128xf32>
      %172 = math.tanh %171 : vector<1x128xf32>
      %173 = arith.mulf %166, %172 : vector<1x128xf32>
      %c0_51 = arith.constant 0 : index
      %c0_52 = arith.constant 0 : index
      %174 = vector.load %arg9[%c0_51, %c0_52] : memref<1x128xf32, #tpu.memory_space<vmem>>, vector<1x128xf32>
      %175 = arith.mulf %173, %174 : vector<1x128xf32>
      %cst_53 = arith.constant dense<0.000000e+00> : vector<1xf32>
      %176 = vector.multi_reduction <add>, %175, %cst_53 [1] : vector<1x128xf32> to vector<1xf32>
      %177 = vector.shape_cast %176 : vector<1xf32> to vector<1x1xf32>
      %c0_54 = arith.constant 0 : index
      %178 = memref.load %arg0[%c0_54] : memref<1xf32, #tpu.memory_space<smem>>
      %179 = vector.broadcast %178 : f32 to vector<1x1xf32>
      %180 = arith.addf %177, %179 : vector<1x1xf32>
      %181 = vector.extract %180[0, 0] : f32 from vector<1x1xf32>
      %182 = arith.index_cast %126 : i32 to index
      %183 = memref.load %arg10[%182] : memref<10xf32, #tpu.memory_space<smem>>
      memref.store %181, %arg10[%182] : memref<10xf32, #tpu.memory_space<smem>>
      %c3_i32 = arith.constant 3 : i32
      %184 = arith.addi %9, %c3_i32 : i32
      %185 = arith.index_cast %184 : i32 to index
      %c0_55 = arith.constant 0 : index
      %186 = vector.load %arg1[%185, %c0_55] : memref<8x512xf32, #tpu.memory_space<vmem>>, vector<1x512xf32>
      %187 = tpu.concatenate %150, %173 in 1 : vector<1x128xf32>, vector<1x128xf32> -> vector<1x256xf32>
      %188 = arith.truncf %187 : vector<1x256xf32> to vector<1x256xbf16>
      %c0_56 = arith.constant 0 : index
      %c0_57 = arith.constant 0 : index
      %189 = vector.load %arg7[%c0_56, %c0_57] : memref<256x1024xbf16, #tpu.memory_space<vmem>>, vector<256x1024xbf16>
      %cst_58 = arith.constant dense<0.000000e+00> : vector<1x1024xf32>
      %190 = tpu.matmul %188, %189, %cst_58 {dimension_numbers = #tpu.dot_dimension_numbers<[1], [0], [0], [1], [0, 0, 1, 1], [], []>} : vector<1x256xbf16>, vector<256x1024xbf16>, vector<1x1024xf32> -> vector<1x1024xf32>
      %191 = vector.extract_strided_slice %190 {offsets = [0, 0], sizes = [1, 512], strides = [1, 1]} : vector<1x1024xf32> to vector<1x512xf32>
      %192 = arith.addf %186, %191 : vector<1x512xf32>
      %193 = vector.extract_strided_slice %192 {offsets = [0, 0], sizes = [1, 384], strides = [1, 1]} : vector<1x512xf32> to vector<1x384xf32>
      %194 = arith.negf %193 : vector<1x384xf32>
      %195 = math.exp %194 : vector<1x384xf32>
      %cst_59 = arith.constant 1.000000e+00 : f32
      %196 = vector.broadcast %cst_59 : f32 to vector<1x384xf32>
      %197 = arith.addf %196, %195 : vector<1x384xf32>
      %198 = arith.divf %196, %197 : vector<1x384xf32>
      %199 = vector.extract_strided_slice %198 {offsets = [0, 0], sizes = [1, 128], strides = [1, 1]} : vector<1x384xf32> to vector<1x128xf32>
      %200 = vector.extract_strided_slice %198 {offsets = [0, 128], sizes = [1, 128], strides = [1, 1]} : vector<1x384xf32> to vector<1x128xf32>
      %201 = vector.extract_strided_slice %198 {offsets = [0, 256], sizes = [1, 128], strides = [1, 1]} : vector<1x384xf32> to vector<1x128xf32>
      %202 = vector.extract_strided_slice %192 {offsets = [0, 384], sizes = [1, 128], strides = [1, 1]} : vector<1x512xf32> to vector<1x128xf32>
      %203 = math.tanh %202 : vector<1x128xf32>
      %204 = arith.mulf %200, %148 : vector<1x128xf32>
      %205 = arith.mulf %199, %203 : vector<1x128xf32>
      %206 = arith.addf %204, %205 : vector<1x128xf32>
      %207 = math.tanh %206 : vector<1x128xf32>
      %208 = arith.mulf %201, %207 : vector<1x128xf32>
      %209 = arith.truncf %208 : vector<1x128xf32> to vector<1x128xbf16>
      %c0_60 = arith.constant 0 : index
      %c0_61 = arith.constant 0 : index
      %210 = vector.load %arg6[%c0_60, %c0_61] : memref<128x512xbf16, #tpu.memory_space<vmem>>, vector<128x512xbf16>
      %cst_62 = arith.constant dense<0.000000e+00> : vector<1x512xf32>
      %211 = tpu.matmul %209, %210, %cst_62 {dimension_numbers = #tpu.dot_dimension_numbers<[1], [0], [0], [1], [0, 0, 1, 1], [], []>} : vector<1x128xbf16>, vector<128x512xbf16>, vector<1x512xf32> -> vector<1x512xf32>
      %212 = vector.extract_strided_slice %190 {offsets = [0, 512], sizes = [1, 512], strides = [1, 1]} : vector<1x1024xf32> to vector<1x512xf32>
      %213 = arith.addf %211, %212 : vector<1x512xf32>
      %c0_63 = arith.constant 0 : index
      %c0_64 = arith.constant 0 : index
      %214 = vector.load %arg8[%c0_63, %c0_64] : memref<1x512xf32, #tpu.memory_space<vmem>>, vector<1x512xf32>
      %215 = arith.addf %213, %214 : vector<1x512xf32>
      %216 = vector.extract_strided_slice %215 {offsets = [0, 0], sizes = [1, 384], strides = [1, 1]} : vector<1x512xf32> to vector<1x384xf32>
      %217 = arith.negf %216 : vector<1x384xf32>
      %218 = math.exp %217 : vector<1x384xf32>
      %cst_65 = arith.constant 1.000000e+00 : f32
      %219 = vector.broadcast %cst_65 : f32 to vector<1x384xf32>
      %220 = arith.addf %219, %218 : vector<1x384xf32>
      %221 = arith.divf %219, %220 : vector<1x384xf32>
      %222 = vector.extract_strided_slice %221 {offsets = [0, 0], sizes = [1, 128], strides = [1, 1]} : vector<1x384xf32> to vector<1x128xf32>
      %223 = vector.extract_strided_slice %221 {offsets = [0, 128], sizes = [1, 128], strides = [1, 1]} : vector<1x384xf32> to vector<1x128xf32>
      %224 = vector.extract_strided_slice %221 {offsets = [0, 256], sizes = [1, 128], strides = [1, 1]} : vector<1x384xf32> to vector<1x128xf32>
      %225 = vector.extract_strided_slice %215 {offsets = [0, 384], sizes = [1, 128], strides = [1, 1]} : vector<1x512xf32> to vector<1x128xf32>
      %226 = math.tanh %225 : vector<1x128xf32>
      %227 = arith.mulf %223, %171 : vector<1x128xf32>
      %228 = arith.mulf %222, %226 : vector<1x128xf32>
      %229 = arith.addf %227, %228 : vector<1x128xf32>
      %230 = math.tanh %229 : vector<1x128xf32>
      %231 = arith.mulf %224, %230 : vector<1x128xf32>
      %c0_66 = arith.constant 0 : index
      %c0_67 = arith.constant 0 : index
      %232 = vector.load %arg9[%c0_66, %c0_67] : memref<1x128xf32, #tpu.memory_space<vmem>>, vector<1x128xf32>
      %233 = arith.mulf %231, %232 : vector<1x128xf32>
      %cst_68 = arith.constant dense<0.000000e+00> : vector<1xf32>
      %234 = vector.multi_reduction <add>, %233, %cst_68 [1] : vector<1x128xf32> to vector<1xf32>
      %235 = vector.shape_cast %234 : vector<1xf32> to vector<1x1xf32>
      %c0_69 = arith.constant 0 : index
      %236 = memref.load %arg0[%c0_69] : memref<1xf32, #tpu.memory_space<smem>>
      %237 = vector.broadcast %236 : f32 to vector<1x1xf32>
      %238 = arith.addf %235, %237 : vector<1x1xf32>
      %239 = vector.extract %238[0, 0] : f32 from vector<1x1xf32>
      %240 = arith.index_cast %184 : i32 to index
      %241 = memref.load %arg10[%240] : memref<10xf32, #tpu.memory_space<smem>>
      memref.store %239, %arg10[%240] : memref<10xf32, #tpu.memory_space<smem>>
      scf.yield %208, %206, %231, %229 : vector<1x128xf32>, vector<1x128xf32>, vector<1x128xf32>, vector<1x128xf32>
    }
    %c2_i32_3 = arith.constant 2 : i32
    %c7 = arith.constant 7 : index
    %5 = memref.load %arg10[%c7] : memref<10xf32, #tpu.memory_space<smem>>
    %6 = vector.broadcast %5 : f32 to vector<1x1xf32>
    %c8_i32 = arith.constant 8 : i32
    %c2_i32_4 = arith.constant 2 : i32
    %7 = arith.addi %c8_i32, %c2_i32_4 : i32
    %c1_i32_5 = arith.constant 1 : i32
    %8:5 = scf.for %arg11 = %c8_i32 to %7 step %c1_i32_5 iter_args(%arg12 = %4#0, %arg13 = %4#1, %arg14 = %4#2, %arg15 = %4#3, %arg16 = %6) -> (vector<1x128xf32>, vector<1x128xf32>, vector<1x128xf32>, vector<1x128xf32>, vector<1x1xf32>)  : i32 {
      %c0_7 = arith.constant 0 : index
      %c0_8 = arith.constant 0 : index
      %9 = vector.load %arg4[%c0_7, %c0_8] : memref<1x512xf32, #tpu.memory_space<vmem>>, vector<1x512xf32>
      %10 = vector.broadcast %arg16 : vector<1x1xf32> to vector<1x512xf32>
      %11 = arith.mulf %10, %9 : vector<1x512xf32>
      %c0_9 = arith.constant 0 : index
      %c0_10 = arith.constant 0 : index
      %12 = vector.load %arg5[%c0_9, %c0_10] : memref<1x512xf32, #tpu.memory_space<vmem>>, vector<1x512xf32>
      %13 = arith.addf %11, %12 : vector<1x512xf32>
      %14 = tpu.concatenate %arg12, %arg14 in 1 : vector<1x128xf32>, vector<1x128xf32> -> vector<1x256xf32>
      %15 = arith.truncf %14 : vector<1x256xf32> to vector<1x256xbf16>
      %c0_11 = arith.constant 0 : index
      %c0_12 = arith.constant 0 : index
      %16 = vector.load %arg7[%c0_11, %c0_12] : memref<256x1024xbf16, #tpu.memory_space<vmem>>, vector<256x1024xbf16>
      %cst_13 = arith.constant dense<0.000000e+00> : vector<1x1024xf32>
      %17 = tpu.matmul %15, %16, %cst_13 {dimension_numbers = #tpu.dot_dimension_numbers<[1], [0], [0], [1], [0, 0, 1, 1], [], []>} : vector<1x256xbf16>, vector<256x1024xbf16>, vector<1x1024xf32> -> vector<1x1024xf32>
      %18 = vector.extract_strided_slice %17 {offsets = [0, 0], sizes = [1, 512], strides = [1, 1]} : vector<1x1024xf32> to vector<1x512xf32>
      %19 = arith.addf %13, %18 : vector<1x512xf32>
      %20 = vector.extract_strided_slice %19 {offsets = [0, 0], sizes = [1, 384], strides = [1, 1]} : vector<1x512xf32> to vector<1x384xf32>
      %21 = arith.negf %20 : vector<1x384xf32>
      %22 = math.exp %21 : vector<1x384xf32>
      %cst_14 = arith.constant 1.000000e+00 : f32
      %23 = vector.broadcast %cst_14 : f32 to vector<1x384xf32>
      %24 = arith.addf %23, %22 : vector<1x384xf32>
      %25 = arith.divf %23, %24 : vector<1x384xf32>
      %26 = vector.extract_strided_slice %25 {offsets = [0, 0], sizes = [1, 128], strides = [1, 1]} : vector<1x384xf32> to vector<1x128xf32>
      %27 = vector.extract_strided_slice %25 {offsets = [0, 128], sizes = [1, 128], strides = [1, 1]} : vector<1x384xf32> to vector<1x128xf32>
      %28 = vector.extract_strided_slice %25 {offsets = [0, 256], sizes = [1, 128], strides = [1, 1]} : vector<1x384xf32> to vector<1x128xf32>
      %29 = vector.extract_strided_slice %19 {offsets = [0, 384], sizes = [1, 128], strides = [1, 1]} : vector<1x512xf32> to vector<1x128xf32>
      %30 = math.tanh %29 : vector<1x128xf32>
      %31 = arith.mulf %27, %arg13 : vector<1x128xf32>
      %32 = arith.mulf %26, %30 : vector<1x128xf32>
      %33 = arith.addf %31, %32 : vector<1x128xf32>
      %34 = math.tanh %33 : vector<1x128xf32>
      %35 = arith.mulf %28, %34 : vector<1x128xf32>
      %36 = arith.truncf %35 : vector<1x128xf32> to vector<1x128xbf16>
      %c0_15 = arith.constant 0 : index
      %c0_16 = arith.constant 0 : index
      %37 = vector.load %arg6[%c0_15, %c0_16] : memref<128x512xbf16, #tpu.memory_space<vmem>>, vector<128x512xbf16>
      %cst_17 = arith.constant dense<0.000000e+00> : vector<1x512xf32>
      %38 = tpu.matmul %36, %37, %cst_17 {dimension_numbers = #tpu.dot_dimension_numbers<[1], [0], [0], [1], [0, 0, 1, 1], [], []>} : vector<1x128xbf16>, vector<128x512xbf16>, vector<1x512xf32> -> vector<1x512xf32>
      %39 = vector.extract_strided_slice %17 {offsets = [0, 512], sizes = [1, 512], strides = [1, 1]} : vector<1x1024xf32> to vector<1x512xf32>
      %40 = arith.addf %38, %39 : vector<1x512xf32>
      %c0_18 = arith.constant 0 : index
      %c0_19 = arith.constant 0 : index
      %41 = vector.load %arg8[%c0_18, %c0_19] : memref<1x512xf32, #tpu.memory_space<vmem>>, vector<1x512xf32>
      %42 = arith.addf %40, %41 : vector<1x512xf32>
      %43 = vector.extract_strided_slice %42 {offsets = [0, 0], sizes = [1, 384], strides = [1, 1]} : vector<1x512xf32> to vector<1x384xf32>
      %44 = arith.negf %43 : vector<1x384xf32>
      %45 = math.exp %44 : vector<1x384xf32>
      %cst_20 = arith.constant 1.000000e+00 : f32
      %46 = vector.broadcast %cst_20 : f32 to vector<1x384xf32>
      %47 = arith.addf %46, %45 : vector<1x384xf32>
      %48 = arith.divf %46, %47 : vector<1x384xf32>
      %49 = vector.extract_strided_slice %48 {offsets = [0, 0], sizes = [1, 128], strides = [1, 1]} : vector<1x384xf32> to vector<1x128xf32>
      %50 = vector.extract_strided_slice %48 {offsets = [0, 128], sizes = [1, 128], strides = [1, 1]} : vector<1x384xf32> to vector<1x128xf32>
      %51 = vector.extract_strided_slice %48 {offsets = [0, 256], sizes = [1, 128], strides = [1, 1]} : vector<1x384xf32> to vector<1x128xf32>
      %52 = vector.extract_strided_slice %42 {offsets = [0, 384], sizes = [1, 128], strides = [1, 1]} : vector<1x512xf32> to vector<1x128xf32>
      %53 = math.tanh %52 : vector<1x128xf32>
      %54 = arith.mulf %50, %arg15 : vector<1x128xf32>
      %55 = arith.mulf %49, %53 : vector<1x128xf32>
      %56 = arith.addf %54, %55 : vector<1x128xf32>
      %57 = math.tanh %56 : vector<1x128xf32>
      %58 = arith.mulf %51, %57 : vector<1x128xf32>
      %c0_21 = arith.constant 0 : index
      %c0_22 = arith.constant 0 : index
      %59 = vector.load %arg9[%c0_21, %c0_22] : memref<1x128xf32, #tpu.memory_space<vmem>>, vector<1x128xf32>
      %60 = arith.mulf %58, %59 : vector<1x128xf32>
      %cst_23 = arith.constant dense<0.000000e+00> : vector<1xf32>
      %61 = vector.multi_reduction <add>, %60, %cst_23 [1] : vector<1x128xf32> to vector<1xf32>
      %62 = vector.shape_cast %61 : vector<1xf32> to vector<1x1xf32>
      %c0_24 = arith.constant 0 : index
      %63 = memref.load %arg0[%c0_24] : memref<1xf32, #tpu.memory_space<smem>>
      %64 = vector.broadcast %63 : f32 to vector<1x1xf32>
      %65 = arith.addf %62, %64 : vector<1x1xf32>
      %66 = vector.extract %65[0, 0] : f32 from vector<1x1xf32>
      %67 = arith.index_cast %arg11 : i32 to index
      %68 = memref.load %arg10[%67] : memref<10xf32, #tpu.memory_space<smem>>
      memref.store %66, %arg10[%67] : memref<10xf32, #tpu.memory_space<smem>>
      scf.yield %35, %33, %58, %56, %65 : vector<1x128xf32>, vector<1x128xf32>, vector<1x128xf32>, vector<1x128xf32>, vector<1x1xf32>
    }
    %c2_i32_6 = arith.constant 2 : i32
    return
  }
}

</mosaic_0001>

<llo_original>
// kernel: tpu_custom_call.1
$region0: #{tpu_custom_call.1}
  #allocation0 [shape = 'u32[]', space=smem, size = 0x4, offset = 0x4, fixed_abs, tag = 'smem constant byte address 0x4 - core index']
  #allocation1 [shape = 'u32[72,128]{1,0:T(1,128)}', space=vmem, size = 0x9000, scoped, tag = 'internal scratch']
  #allocation2 [shape = 'f32[1]{0:T(128)S(6)}', space=smem, size = 0x200, scoped, tag = 'scoped memory for tpu_custom_call.1']
  %s0 = inlined_call_operand.<no memory space> [shape: f32[1], index: 0, kind: input, shape index: {}]
  %s1 = inlined_call_operand.hbm [shape: f32[8,512], index: 1, kind: input, shape index: {}]
  %s2 = inlined_call_operand.hbm [shape: f32[1,128], index: 2, kind: input, shape index: {}]
  %s3 = inlined_call_operand.hbm [shape: f32[1,128], index: 3, kind: input, shape index: {}]
  %s4 = inlined_call_operand.vmem [shape: f32[1,512], index: 4, kind: input, shape index: {}]
  %s5 = inlined_call_operand.hbm [shape: f32[1,512], index: 5, kind: input, shape index: {}]
  %s6 = inlined_call_operand.hbm [shape: bf16[128,512], index: 6, kind: input, shape index: {}]
  %s7 = inlined_call_operand.hbm [shape: bf16[256,1024], index: 7, kind: input, shape index: {}]
  %s8 = inlined_call_operand.vmem [shape: f32[1,512], index: 8, kind: input, shape index: {}]
  %s9 = inlined_call_operand.vmem [shape: f32[1,128], index: 9, kind: input, shape index: {}]
  %s10 = inlined_call_operand.hbm [shape: f32[10], index: 10, kind: output, shape index: {}]
  %s11 = sld [smem:[#allocation0]]
  $region88: #{tpu_custom_call.1} parent=0
    _
  %s13 = ssub.s32 1, %s11
  %s14 = scalar_select 0, %s13, %s11
  %15 = sst [smem:[#allocation2]] %s0
  $region1: #{tpu_custom_call.1} parent=0
    #allocation3 [shape = 'u8[16384]{0}', space=vmem, size = 0x4000, scoped, tag = 'input window, operand 1, single buffered']
    #allocation4 [shape = 's32[1]{0}', space=sflag, size = 0x4, scoped, tag = 'scoped memory for tpu_custom_call.1']
    #allocation5 [shape = 's32[1]{0}', space=sflag, size = 0x4, scoped, tag = 'scoped memory for tpu_custom_call.1']
    #allocation6 [shape = 'u8[512]{0}', space=vmem, size = 0x400, scoped, tag = 'input window, operand 2, single buffered']
    #allocation7 [shape = 's32[1]{0}', space=sflag, size = 0x4, scoped, tag = 'scoped memory for tpu_custom_call.1']
    #allocation8 [shape = 'u8[512]{0}', space=vmem, size = 0x400, scoped, tag = 'input window, operand 3, single buffered']
    #allocation9 [shape = 'u8[2048]{0}', space=vmem, size = 0x800, scoped, tag = 'input window, operand 5, single buffered']
    #allocation10 [shape = 's32[1]{0}', space=sflag, size = 0x4, scoped, tag = 'scoped memory for tpu_custom_call.1']
    #allocation11 [shape = 'u8[131072]{0}', space=vmem, size = 0x20000, scoped, tag = 'input window, operand 6, single buffered']
    #allocation12 [shape = 'u8[524288]{0}', space=vmem, size = 0x80000, scoped, tag = 'input window, operand 7, single buffered']
    #allocation13 [shape = 's32[1]{0}', space=sflag, size = 0x4, scoped, tag = 'scoped memory for tpu_custom_call.1']
    #allocation14 [shape = 'u8[512]{0}', space=smem, size = 0x200, scoped, tag = 'output window, operand 0, single buffered']
    %16 = vsyncpa [#allocation4], 0
    %17 = vsyncpa [#allocation7], 0
    %18 = vsyncpa [#allocation10], 0
    %19 = vsyncpa [#allocation13], 0
    %20 = vsyncpa [#allocation5], 0
    // Predicated region
    $region2: #{tpu_custom_call.1} parent=1 // pred_check
      _
    $region3: #{tpu_custom_call.1} parent=1 // pred_check_branch
      %22 = sbr.rel (0) target = $region5
    $region4: #{tpu_custom_call.1} parent=1 // pred_region
      _
    $region5: #{tpu_custom_call.1} parent=1 // pred_fallthru
      _
    // Predicated region
    $region6: #{tpu_custom_call.1} parent=1 // pred_check
      _
    $region7: #{tpu_custom_call.1} parent=1 // pred_check_branch
      %24 = sbr.rel (0) target = $region9
    $region8: #{tpu_custom_call.1} parent=1 // pred_region
      %26 = vsyncadd [#allocation4], 0
      %s28 = sshll.u32 %s1, 4
      %s29 = int_to_ptr.hbm [resolvable:$true] %s28
      %s30 = sshll.u32 [#allocation3], 4
      %s31 = int_to_ptr.vmem [resolvable:$true] %s30
      %33 = dma.hbm_to_vmem [thread:$0]  %s29, 512, %s31, [#allocation4]
    $region9: #{tpu_custom_call.1} parent=1 // pred_fallthru
      _
    // Predicated region
    $region10: #{tpu_custom_call.1} parent=1 // pred_check
      _
    $region11: #{tpu_custom_call.1} parent=1 // pred_check_branch
      %35 = sbr.rel (0) target = $region13
    $region12: #{tpu_custom_call.1} parent=1 // pred_region
      %37 = vsyncadd [#allocation7], 0
      %s39 = sshll.u32 %s2, 4
      %s40 = int_to_ptr.hbm [resolvable:$true] %s39
      %s41 = sshll.u32 [#allocation6], 4
      %s42 = int_to_ptr.vmem [resolvable:$true] %s41
      %44 = dma.hbm_to_vmem [thread:$0]  %s40, 16, %s42, [#allocation7]
    $region13: #{tpu_custom_call.1} parent=1 // pred_fallthru
      _
    // Predicated region
    $region14: #{tpu_custom_call.1} parent=1 // pred_check
      _
    $region15: #{tpu_custom_call.1} parent=1 // pred_check_branch
      %46 = sbr.rel (0) target = $region17
    $region16: #{tpu_custom_call.1} parent=1 // pred_region
      %48 = vsyncadd [#allocation7], 0
      %s50 = sshll.u32 %s3, 4
      %s51 = int_to_ptr.hbm [resolvable:$true] %s50
      %s52 = sshll.u32 [#allocation8], 4
      %s53 = int_to_ptr.vmem [resolvable:$true] %s52
      %55 = dma.hbm_to_vmem [thread:$0]  %s51, 16, %s53, [#allocation7]
    $region17: #{tpu_custom_call.1} parent=1 // pred_fallthru
      _
    // Predicated region
    $region18: #{tpu_custom_call.1} parent=1 // pred_check
      _
    $region19: #{tpu_custom_call.1} parent=1 // pred_check_branch
      %57 = sbr.rel (0) target = $region21
    $region20: #{tpu_custom_call.1} parent=1 // pred_region
      _
    $region21: #{tpu_custom_call.1} parent=1 // pred_fallthru
      _
    // Predicated region
    $region22: #{tpu_custom_call.1} parent=1 // pred_check
      _
    $region23: #{tpu_custom_call.1} parent=1 // pred_check_branch
      %59 = sbr.rel (0) target = $region25
    $region24: #{tpu_custom_call.1} parent=1 // pred_region
      %61 = vsyncadd [#allocation10], 0
      %s63 = sshll.u32 %s5, 4
      %s64 = int_to_ptr.hbm [resolvable:$true] %s63
      %s65 = sshll.u32 [#allocation9], 4
      %s66 = int_to_ptr.vmem [resolvable:$true] %s65
      %68 = dma.hbm_to_vmem [thread:$0]  %s64, 64, %s66, [#allocation10]
    $region25: #{tpu_custom_call.1} parent=1 // pred_fallthru
      _
    // Predicated region
    $region26: #{tpu_custom_call.1} parent=1 // pred_check
      _
    $region27: #{tpu_custom_call.1} parent=1 // pred_check_branch
      %70 = sbr.rel (0) target = $region29
    $region28: #{tpu_custom_call.1} parent=1 // pred_region
      %72 = vsyncadd [#allocation10], 0
      %s73 = sshll.u32 %s6, 4
      %s74 = int_to_ptr.hbm [resolvable:$true] %s73
      %s75 = sshll.u32 [#allocation11], 4
      %s76 = int_to_ptr.vmem [resolvable:$true] %s75
      %81 = dma.hbm_to_vmem [thread:$0]  %s74, 4096, %s76, [#allocation10], 256, 256, 16
    $region29: #{tpu_custom_call.1} parent=1 // pred_fallthru
      _
    // Predicated region
    $region30: #{tpu_custom_call.1} parent=1 // pred_check
      _
    $region31: #{tpu_custom_call.1} parent=1 // pred_check_branch
      %83 = sbr.rel (0) target = $region33
    $region32: #{tpu_custom_call.1} parent=1 // pred_region
      %85 = vsyncadd [#allocation13], 0
      %s86 = sshll.u32 %s7, 4
      %s87 = int_to_ptr.hbm [resolvable:$true] %s86
      %s88 = sshll.u32 [#allocation12], 4
      %s89 = int_to_ptr.vmem [resolvable:$true] %s88
      %94 = dma.hbm_to_vmem [thread:$0]  %s87, 16384, %s89, [#allocation13], 512, 512, 32
    $region33: #{tpu_custom_call.1} parent=1 // pred_fallthru
      _
    // Predicated region
    $region34: #{tpu_custom_call.1} parent=1 // pred_check
      _
    $region35: #{tpu_custom_call.1} parent=1 // pred_check_branch
      %96 = sbr.rel (0) target = $region37
    $region36: #{tpu_custom_call.1} parent=1 // pred_region
      _
    $region37: #{tpu_custom_call.1} parent=1 // pred_fallthru
      _
    // Predicated region
    $region38: #{tpu_custom_call.1} parent=1 // pred_check
      _
    $region39: #{tpu_custom_call.1} parent=1 // pred_check_branch
      %98 = sbr.rel (0) target = $region41
    $region40: #{tpu_custom_call.1} parent=1 // pred_region
      _
    $region41: #{tpu_custom_call.1} parent=1 // pred_fallthru
      _
    // Predicated region
    $region42: #{tpu_custom_call.1} parent=1 // pred_check
      _
    $region43: #{tpu_custom_call.1} parent=1 // pred_check_branch
      %100 = sbr.rel (0) target = $region45
    $region44: #{tpu_custom_call.1} parent=1 // pred_region
      %102 = dma.done [#allocation4], 512
    $region45: #{tpu_custom_call.1} parent=1 // pred_fallthru
      _
    // Predicated region
    $region46: #{tpu_custom_call.1} parent=1 // pred_check
      _
    $region47: #{tpu_custom_call.1} parent=1 // pred_check_branch
      %104 = sbr.rel (0) target = $region49
    $region48: #{tpu_custom_call.1} parent=1 // pred_region
      %106 = dma.done [#allocation7], 16
    $region49: #{tpu_custom_call.1} parent=1 // pred_fallthru
      _
    // Predicated region
    $region50: #{tpu_custom_call.1} parent=1 // pred_check
      _
    $region51: #{tpu_custom_call.1} parent=1 // pred_check_branch
      %108 = sbr.rel (0) target = $region53
    $region52: #{tpu_custom_call.1} parent=1 // pred_region
      %110 = dma.done [#allocation7], 16
    $region53: #{tpu_custom_call.1} parent=1 // pred_fallthru
      _
    // Predicated region
    $region54: #{tpu_custom_call.1} parent=1 // pred_check
      _
    $region55: #{tpu_custom_call.1} parent=1 // pred_check_branch
      %112 = sbr.rel (0) target = $region57
    $region56: #{tpu_custom_call.1} parent=1 // pred_region
      %114 = dma.done [#allocation10], 64
    $region57: #{tpu_custom_call.1} parent=1 // pred_fallthru
      _
    // Predicated region
    $region58: #{tpu_custom_call.1} parent=1 // pred_check
      _
    $region59: #{tpu_custom_call.1} parent=1 // pred_check_branch
      %116 = sbr.rel (0) target = $region61
    $region60: #{tpu_custom_call.1} parent=1 // pred_region
      %118 = dma.done [#allocation10], 4096
    $region61: #{tpu_custom_call.1} parent=1 // pred_fallthru
      _
    // Predicated region
    $region62: #{tpu_custom_call.1} parent=1 // pred_check
      _
    $region63: #{tpu_custom_call.1} parent=1 // pred_check_branch
      %120 = sbr.rel (0) target = $region65
    $region64: #{tpu_custom_call.1} parent=1 // pred_region
      %122 = dma.done [#allocation13], 16384
    $region65: #{tpu_custom_call.1} parent=1 // pred_fallthru
      _
    %v123 = vld [vmem:[#allocation6] sm:$0x1]
    %v124 = vld [vmem:[#allocation8] sm:$0x1]
    loop: start=0, step=1, limit=2
    $region66: #{tpu_custom_call.1} parent=1 // loop_pre_header
      _
    $region67: #{tpu_custom_call.1} parent=1 // loop_header
      %s126 = sphi 0, %s130
      %p127 = scmp.ge.s32.totalorder %s126, 2
      %v131 = vphi %v123, %v5265
      %v132 = vphi %v124, %v5261
      %v133 = vphi 0.0, %v5587
      %v134 = vphi 0.0, %v5585
    $region68: #{tpu_custom_call.1} parent=1 // loop_header_branch
      %129 = sbr.rel (%p127) target = $region72
    $region69: #{tpu_custom_call.1} parent=1 // loop_body
      %s135 = smul.u32 %s126, 4
      %s136 = sshra.s32 %s135, 3
      %s137 = sand.u32 %s135, 7
      %s138 = sshra.s32 %s135, 3
      %s139 = sand.u32 %s135, 7
      %s140 = smul.u32 %s136, 4
      %s141 = smul.u32 %s140, 8
      %s142 = sadd.s32 %s141, %s139
      %s143 = scalar_lea.vmem [#allocation3], %s142
      %v144 = vld [vmem:[%s143] ss:$8 sm:$0xf]
      %v145 = vpack.c.bf16 %v131, %v131
      %v146 = vpack.c.bf16 %v133, %v133
      %v147 = vld [vmem:[#allocation12] sm:$0xff]
      %v148 = vld [vmem:[#allocation12 + $0x8] sm:$0xff]
      %v149 = vld [vmem:[#allocation12 + $0x10] sm:$0xff]
      %v150 = vld [vmem:[#allocation12 + $0x18] sm:$0xff]
      %v151 = vld [vmem:[#allocation12 + $0x20] sm:$0xff]
      %v152 = vld [vmem:[#allocation12 + $0x28] sm:$0xff]
      %v153 = vld [vmem:[#allocation12 + $0x30] sm:$0xff]
      %v154 = vld [vmem:[#allocation12 + $0x38] sm:$0xff]
      %v155 = vld [vmem:[#allocation12 + $0x40] sm:$0xff]
      %v156 = vld [vmem:[#allocation12 + $0x48] sm:$0xff]
      %v157 = vld [vmem:[#allocation12 + $0x50] sm:$0xff]
      %v158 = vld [vmem:[#allocation12 + $0x58] sm:$0xff]
      %v159 = vld [vmem:[#allocation12 + $0x60] sm:$0xff]
      %v160 = vld [vmem:[#allocation12 + $0x68] sm:$0xff]
      %v161 = vld [vmem:[#allocation12 + $0x70] sm:$0xff]
      %v162 = vld [vmem:[#allocation12 + $0x78] sm:$0xff]
      %v163 = vld [vmem:[#allocation12 + $0x80] sm:$0xff]
      %v164 = vld [vmem:[#allocation12 + $0x88] sm:$0xff]
      %v165 = vld [vmem:[#allocation12 + $0x90] sm:$0xff]
      %v166 = vld [vmem:[#allocation12 + $0x98] sm:$0xff]
      %v167 = vld [vmem:[#allocation12 + $0xa0] sm:$0xff]
      %v168 = vld [vmem:[#allocation12 + $0xa8] sm:$0xff]
      %v169 = vld [vmem:[#allocation12 + $0xb0] sm:$0xff]
      %v170 = vld [vmem:[#allocation12 + $0xb8] sm:$0xff]
      %v171 = vld [vmem:[#allocation12 + $0xc0] sm:$0xff]
      %v172 = vld [vmem:[#allocation12 + $0xc8] sm:$0xff]
      %v173 = vld [vmem:[#allocation12 + $0xd0] sm:$0xff]
      %v174 = vld [vmem:[#allocation12 + $0xd8] sm:$0xff]
      %v175 = vld [vmem:[#allocation12 + $0xe0] sm:$0xff]
      %v176 = vld [vmem:[#allocation12 + $0xe8] sm:$0xff]
      %v177 = vld [vmem:[#allocation12 + $0xf0] sm:$0xff]
      %v178 = vld [vmem:[#allocation12 + $0xf8] sm:$0xff]
      %v179 = vld [vmem:[#allocation12 + $0x100] sm:$0xff]
      %v180 = vld [vmem:[#allocation12 + $0x108] sm:$0xff]
      %v181 = vld [vmem:[#allocation12 + $0x110] sm:$0xff]
      %v182 = vld [vmem:[#allocation12 + $0x118] sm:$0xff]
      %v183 = vld [vmem:[#allocation12 + $0x120] sm:$0xff]
      %v184 = vld [vmem:[#allocation12 + $0x128] sm:$0xff]
      %v185 = vld [vmem:[#allocation12 + $0x130] sm:$0xff]
      %v186 = vld [vmem:[#allocation12 + $0x138] sm:$0xff]
      %v187 = vld [vmem:[#allocation12 + $0x140] sm:$0xff]
      %v188 = vld [vmem:[#allocation12 + $0x148] sm:$0xff]
      %v189 = vld [vmem:[#allocation12 + $0x150] sm:$0xff]
      %v190 = vld [vmem:[#allocation12 + $0x158] sm:$0xff]
      %v191 = vld [vmem:[#allocation12 + $0x160] sm:$0xff]
      %v192 = vld [vmem:[#allocation12 + $0x168] sm:$0xff]
      %v193 = vld [vmem:[#allocation12 + $0x170] sm:$0xff]
      %v194 = vld [vmem:[#allocation12 + $0x178] sm:$0xff]
      %v195 = vld [vmem:[#allocation12 + $0x180] sm:$0xff]
      %v196 = vld [vmem:[#allocation12 + $0x188] sm:$0xff]
      %v197 = vld [vmem:[#allocation12 + $0x190] sm:$0xff]
      %v198 = vld [vmem:[#allocation12 + $0x198] sm:$0xff]
      %v199 = vld [vmem:[#allocation12 + $0x1a0] sm:$0xff]
      %v200 = vld [vmem:[#allocation12 + $0x1a8] sm:$0xff]
      %v201 = vld [vmem:[#allocation12 + $0x1b0] sm:$0xff]
      %v202 = vld [vmem:[#allocation12 + $0x1b8] sm:$0xff]
      %v203 = vld [vmem:[#allocation12 + $0x1c0] sm:$0xff]
      %v204 = vld [vmem:[#allocation12 + $0x1c8] sm:$0xff]
      %v205 = vld [vmem:[#allocation12 + $0x1d0] sm:$0xff]
      %v206 = vld [vmem:[#allocation12 + $0x1d8] sm:$0xff]
      %v207 = vld [vmem:[#allocation12 + $0x1e0] sm:$0xff]
      %v208 = vld [vmem:[#allocation12 + $0x1e8] sm:$0xff]
      %v209 = vld [vmem:[#allocation12 + $0x1f0] sm:$0xff]
      %v210 = vld [vmem:[#allocation12 + $0x1f8] sm:$0xff]
      %v211 = vld [vmem:[#allocation12 + $0x200] sm:$0xff]
      %v212 = vld [vmem:[#allocation12 + $0x208] sm:$0xff]
      %v213 = vld [vmem:[#allocation12 + $0x210] sm:$0xff]
      %v214 = vld [vmem:[#allocation12 + $0x218] sm:$0xff]
      %v215 = vld [vmem:[#allocation12 + $0x220] sm:$0xff]
      %v216 = vld [vmem:[#allocation12 + $0x228] sm:$0xff]
      %v217 = vld [vmem:[#allocation12 + $0x230] sm:$0xff]
      %v218 = vld [vmem:[#allocation12 + $0x238] sm:$0xff]
      %v219 = vld [vmem:[#allocation12 + $0x240] sm:$0xff]
      %v220 = vld [vmem:[#allocation12 + $0x248] sm:$0xff]
      %v221 = vld [vmem:[#allocation12 + $0x250] sm:$0xff]
      %v222 = vld [vmem:[#allocation12 + $0x258] sm:$0xff]
      %v223 = vld [vmem:[#allocation12 + $0x260] sm:$0xff]
      %v224 = vld [vmem:[#allocation12 + $0x268] sm:$0xff]
      %v225 = vld [vmem:[#allocation12 + $0x270] sm:$0xff]
      %v226 = vld [vmem:[#allocation12 + $0x278] sm:$0xff]
      %v227 = vld [vmem:[#allocation12 + $0x280] sm:$0xff]
      %v228 = vld [vmem:[#allocation12 + $0x288] sm:$0xff]
      %v229 = vld [vmem:[#allocation12 + $0x290] sm:$0xff]
      %v230 = vld [vmem:[#allocation12 + $0x298] sm:$0xff]
      %v231 = vld [vmem:[#allocation12 + $0x2a0] sm:$0xff]
      %v232 = vld [vmem:[#allocation12 + $0x2a8] sm:$0xff]
      %v233 = vld [vmem:[#allocation12 + $0x2b0] sm:$0xff]
      %v234 = vld [vmem:[#allocation12 + $0x2b8] sm:$0xff]
      %v235 = vld [vmem:[#allocation12 + $0x2c0] sm:$0xff]
      %v236 = vld [vmem:[#allocation12 + $0x2c8] sm:$0xff]
      %v237 = vld [vmem:[#allocation12 + $0x2d0] sm:$0xff]
      %v238 = vld [vmem:[#allocation12 + $0x2d8] sm:$0xff]
      %v239 = vld [vmem:[#allocation12 + $0x2e0] sm:$0xff]
      %v240 = vld [vmem:[#allocation12 + $0x2e8] sm:$0xff]
      %v241 = vld [vmem:[#allocation12 + $0x2f0] sm:$0xff]
      %v242 = vld [vmem:[#allocation12 + $0x2f8] sm:$0xff]
      %v243 = vld [vmem:[#allocation12 + $0x300] sm:$0xff]
      %v244 = vld [vmem:[#allocation12 + $0x308] sm:$0xff]
      %v245 = vld [vmem:[#allocation12 + $0x310] sm:$0xff]
      %v246 = vld [vmem:[#allocation12 + $0x318] sm:$0xff]
      %v247 = vld [vmem:[#allocation12 + $0x320] sm:$0xff]
      %v248 = vld [vmem:[#allocation12 + $0x328] sm:$0xff]
      %v249 = vld [vmem:[#allocation12 + $0x330] sm:$0xff]
      %v250 = vld [vmem:[#allocation12 + $0x338] sm:$0xff]
      %v251 = vld [vmem:[#allocation12 + $0x340] sm:$0xff]
      %v252 = vld [vmem:[#allocation12 + $0x348] sm:$0xff]
      %v253 = vld [vmem:[#allocation12 + $0x350] sm:$0xff]
      %v254 = vld [vmem:[#allocation12 + $0x358] sm:$0xff]
      %v255 = vld [vmem:[#allocation12 + $0x360] sm:$0xff]
      %v256 = vld [vmem:[#allocation12 + $0x368] sm:$0xff]
      %v257 = vld [vmem:[#allocation12 + $0x370] sm:$0xff]
      %v258 = vld [vmem:[#allocation12 + $0x378] sm:$0xff]
      %v259 = vld [vmem:[#allocation12 + $0x380] sm:$0xff]
      %v260 = vld [vmem:[#allocation12 + $0x388] sm:$0xff]
      %v261 = vld [vmem:[#allocation12 + $0x390] sm:$0xff]
      %v262 = vld [vmem:[#allocation12 + $0x398] sm:$0xff]
      %v263 = vld [vmem:[#allocation12 + $0x3a0] sm:$0xff]
      %v264 = vld [vmem:[#allocation12 + $0x3a8] sm:$0xff]
      %v265 = vld [vmem:[#allocation12 + $0x3b0] sm:$0xff]
      %v266 = vld [vmem:[#allocation12 + $0x3b8] sm:$0xff]
      %v267 = vld [vmem:[#allocation12 + $0x3c0] sm:$0xff]
      %v268 = vld [vmem:[#allocation12 + $0x3c8] sm:$0xff]
      %v269 = vld [vmem:[#allocation12 + $0x3d0] sm:$0xff]
      %v270 = vld [vmem:[#allocation12 + $0x3d8] sm:$0xff]
      %v271 = vld [vmem:[#allocation12 + $0x3e0] sm:$0xff]
      %v272 = vld [vmem:[#allocation12 + $0x3e8] sm:$0xff]
      %v273 = vld [vmem:[#allocation12 + $0x3f0] sm:$0xff]
      %v274 = vld [vmem:[#allocation12 + $0x3f8] sm:$0xff]
      %v403 = vunpack.c.l.b16 %v147
      %v404 = vunpack.c.h.b16 %v147
      %v405 = vunpack.c.l.b16 %v148
      %v406 = vunpack.c.h.b16 %v148
      %v407 = vunpack.c.l.b16 %v149
      %v408 = vunpack.c.h.b16 %v149
      %v409 = vunpack.c.l.b16 %v150
      %v410 = vunpack.c.h.b16 %v150
      %v411 = vunpack.c.l.b16 %v151
      %v412 = vunpack.c.h.b16 %v151
      %v413 = vunpack.c.l.b16 %v152
      %v414 = vunpack.c.h.b16 %v152
      %v415 = vunpack.c.l.b16 %v153
      %v416 = vunpack.c.h.b16 %v153
      %v417 = vunpack.c.l.b16 %v154
      %v418 = vunpack.c.h.b16 %v154
      %v419 = vunpack.c.l.b16 %v155
      %v420 = vunpack.c.h.b16 %v155
      %v421 = vunpack.c.l.b16 %v156
      %v422 = vunpack.c.h.b16 %v156
      %v423 = vunpack.c.l.b16 %v157
      %v424 = vunpack.c.h.b16 %v157
      %v425 = vunpack.c.l.b16 %v158
      %v426 = vunpack.c.h.b16 %v158
      %v427 = vunpack.c.l.b16 %v159
      %v428 = vunpack.c.h.b16 %v159
      %v429 = vunpack.c.l.b16 %v160
      %v430 = vunpack.c.h.b16 %v160
      %v431 = vunpack.c.l.b16 %v161
      %v432 = vunpack.c.h.b16 %v161
      %v433 = vunpack.c.l.b16 %v162
      %v434 = vunpack.c.h.b16 %v162
      %v435 = vunpack.c.l.b16 %v163
      %v436 = vunpack.c.h.b16 %v163
      %v437 = vunpack.c.l.b16 %v164
      %v438 = vunpack.c.h.b16 %v164
      %v439 = vunpack.c.l.b16 %v165
      %v440 = vunpack.c.h.b16 %v165
      %v441 = vunpack.c.l.b16 %v166
      %v442 = vunpack.c.h.b16 %v166
      %v443 = vunpack.c.l.b16 %v167
      %v444 = vunpack.c.h.b16 %v167
      %v445 = vunpack.c.l.b16 %v168
      %v446 = vunpack.c.h.b16 %v168
      %v447 = vunpack.c.l.b16 %v169
      %v448 = vunpack.c.h.b16 %v169
      %v449 = vunpack.c.l.b16 %v170
      %v450 = vunpack.c.h.b16 %v170
      %v451 = vunpack.c.l.b16 %v171
      %v452 = vunpack.c.h.b16 %v171
      %v453 = vunpack.c.l.b16 %v172
      %v454 = vunpack.c.h.b16 %v172
      %v455 = vunpack.c.l.b16 %v173
      %v456 = vunpack.c.h.b16 %v173
      %v457 = vunpack.c.l.b16 %v174
      %v458 = vunpack.c.h.b16 %v174
      %v459 = vunpack.c.l.b16 %v175
      %v460 = vunpack.c.h.b16 %v175
      %v461 = vunpack.c.l.b16 %v176
      %v462 = vunpack.c.h.b16 %v176
      %v463 = vunpack.c.l.b16 %v177
      %v464 = vunpack.c.h.b16 %v177
      %v465 = vunpack.c.l.b16 %v178
      %v466 = vunpack.c.h.b16 %v178
      %v467 = vunpack.c.l.b16 %v179
      %v468 = vunpack.c.h.b16 %v179
      %v469 = vunpack.c.l.b16 %v180
      %v470 = vunpack.c.h.b16 %v180
      %v471 = vunpack.c.l.b16 %v181
      %v472 = vunpack.c.h.b16 %v181
      %v473 = vunpack.c.l.b16 %v182
      %v474 = vunpack.c.h.b16 %v182
      %v475 = vunpack.c.l.b16 %v183
      %v476 = vunpack.c.h.b16 %v183
      %v477 = vunpack.c.l.b16 %v184
      %v478 = vunpack.c.h.b16 %v184
      %v479 = vunpack.c.l.b16 %v185
      %v480 = vunpack.c.h.b16 %v185
      %v481 = vunpack.c.l.b16 %v186
      %v482 = vunpack.c.h.b16 %v186
      %v483 = vunpack.c.l.b16 %v187
      %v484 = vunpack.c.h.b16 %v187
      %v485 = vunpack.c.l.b16 %v188
      %v486 = vunpack.c.h.b16 %v188
      %v487 = vunpack.c.l.b16 %v189
      %v488 = vunpack.c.h.b16 %v189
      %v489 = vunpack.c.l.b16 %v190
      %v490 = vunpack.c.h.b16 %v190
      %v491 = vunpack.c.l.b16 %v191
      %v492 = vunpack.c.h.b16 %v191
      %v493 = vunpack.c.l.b16 %v192
      %v494 = vunpack.c.h.b16 %v192
      %v495 = vunpack.c.l.b16 %v193
      %v496 = vunpack.c.h.b16 %v193
      %v497 = vunpack.c.l.b16 %v194
      %v498 = vunpack.c.h.b16 %v194
      %v499 = vunpack.c.l.b16 %v195
      %v500 = vunpack.c.h.b16 %v195
      %v501 = vunpack.c.l.b16 %v196
      %v502 = vunpack.c.h.b16 %v196
      %v503 = vunpack.c.l.b16 %v197
      %v504 = vunpack.c.h.b16 %v197
      %v505 = vunpack.c.l.b16 %v198
      %v506 = vunpack.c.h.b16 %v198
      %v507 = vunpack.c.l.b16 %v199
      %v508 = vunpack.c.h.b16 %v199
      %v509 = vunpack.c.l.b16 %v200
      %v510 = vunpack.c.h.b16 %v200
      %v511 = vunpack.c.l.b16 %v201
      %v512 = vunpack.c.h.b16 %v201
      %v513 = vunpack.c.l.b16 %v202
      %v514 = vunpack.c.h.b16 %v202
      %v515 = vunpack.c.l.b16 %v203
      %v516 = vunpack.c.h.b16 %v203
      %v517 = vunpack.c.l.b16 %v204
      %v518 = vunpack.c.h.b16 %v204
      %v519 = vunpack.c.l.b16 %v205
      %v520 = vunpack.c.h.b16 %v205
      %v521 = vunpack.c.l.b16 %v206
      %v522 = vunpack.c.h.b16 %v206
      %v523 = vunpack.c.l.b16 %v207
      %v524 = vunpack.c.h.b16 %v207
      %v525 = vunpack.c.l.b16 %v208
      %v526 = vunpack.c.h.b16 %v208
      %v527 = vunpack.c.l.b16 %v209
      %v528 = vunpack.c.h.b16 %v209
      %v529 = vunpack.c.l.b16 %v210
      %v530 = vunpack.c.h.b16 %v210
      %v531 = vunpack.c.l.b16 %v211
      %v532 = vunpack.c.h.b16 %v211
      %v533 = vunpack.c.l.b16 %v212
      %v534 = vunpack.c.h.b16 %v212
      %v535 = vunpack.c.l.b16 %v213
      %v536 = vunpack.c.h.b16 %v213
      %v537 = vunpack.c.l.b16 %v214
      %v538 = vunpack.c.h.b16 %v214
      %v539 = vunpack.c.l.b16 %v215
      %v540 = vunpack.c.h.b16 %v215
      %v541 = vunpack.c.l.b16 %v216
      %v542 = vunpack.c.h.b16 %v216
      %v543 = vunpack.c.l.b16 %v217
      %v544 = vunpack.c.h.b16 %v217
      %v545 = vunpack.c.l.b16 %v218
      %v546 = vunpack.c.h.b16 %v218
      %v547 = vunpack.c.l.b16 %v219
      %v548 = vunpack.c.h.b16 %v219
      %v549 = vunpack.c.l.b16 %v220
      %v550 = vunpack.c.h.b16 %v220
      %v551 = vunpack.c.l.b16 %v221
      %v552 = vunpack.c.h.b16 %v221
      %v553 = vunpack.c.l.b16 %v222
      %v554 = vunpack.c.h.b16 %v222
      %v555 = vunpack.c.l.b16 %v223
      %v556 = vunpack.c.h.b16 %v223
      %v557 = vunpack.c.l.b16 %v224
      %v558 = vunpack.c.h.b16 %v224
      %v559 = vunpack.c.l.b16 %v225
      %v560 = vunpack.c.h.b16 %v225
      %v561 = vunpack.c.l.b16 %v226
      %v562 = vunpack.c.h.b16 %v226
      %v563 = vunpack.c.l.b16 %v227
      %v564 = vunpack.c.h.b16 %v227
      %v565 = vunpack.c.l.b16 %v228
      %v566 = vunpack.c.h.b16 %v228
      %v567 = vunpack.c.l.b16 %v229
      %v568 = vunpack.c.h.b16 %v229
      %v569 = vunpack.c.l.b16 %v230
      %v570 = vunpack.c.h.b16 %v230
      %v571 = vunpack.c.l.b16 %v231
      %v572 = vunpack.c.h.b16 %v231
      %v573 = vunpack.c.l.b16 %v232
      %v574 = vunpack.c.h.b16 %v232
      %v575 = vunpack.c.l.b16 %v233
      %v576 = vunpack.c.h.b16 %v233
      %v577 = vunpack.c.l.b16 %v234
      %v578 = vunpack.c.h.b16 %v234
      %v579 = vunpack.c.l.b16 %v235
      %v580 = vunpack.c.h.b16 %v235
      %v581 = vunpack.c.l.b16 %v236
      %v582 = vunpack.c.h.b16 %v236
      %v583 = vunpack.c.l.b16 %v237
      %v584 = vunpack.c.h.b16 %v237
      %v585 = vunpack.c.l.b16 %v238
      %v586 = vunpack.c.h.b16 %v238
      %v587 = vunpack.c.l.b16 %v239
      %v588 = vunpack.c.h.b16 %v239
      %v589 = vunpack.c.l.b16 %v240
      %v590 = vunpack.c.h.b16 %v240
      %v591 = vunpack.c.l.b16 %v241
      %v592 = vunpack.c.h.b16 %v241
      %v593 = vunpack.c.l.b16 %v242
      %v594 = vunpack.c.h.b16 %v242
      %v595 = vunpack.c.l.b16 %v243
      %v596 = vunpack.c.h.b16 %v243
      %v597 = vunpack.c.l.b16 %v244
      %v598 = vunpack.c.h.b16 %v244
      %v599 = vunpack.c.l.b16 %v245
      %v600 = vunpack.c.h.b16 %v245
      %v601 = vunpack.c.l.b16 %v246
      %v602 = vunpack.c.h.b16 %v246
      %v603 = vunpack.c.l.b16 %v247
      %v604 = vunpack.c.h.b16 %v247
      %v605 = vunpack.c.l.b16 %v248
      %v606 = vunpack.c.h.b16 %v248
      %v607 = vunpack.c.l.b16 %v249
      %v608 = vunpack.c.h.b16 %v249
      %v609 = vunpack.c.l.b16 %v250
      %v610 = vunpack.c.h.b16 %v250
      %v611 = vunpack.c.l.b16 %v251
      %v612 = vunpack.c.h.b16 %v251
      %v613 = vunpack.c.l.b16 %v252
      %v614 = vunpack.c.h.b16 %v252
      %v615 = vunpack.c.l.b16 %v253
      %v616 = vunpack.c.h.b16 %v253
      %v617 = vunpack.c.l.b16 %v254
      %v618 = vunpack.c.h.b16 %v254
      %v619 = vunpack.c.l.b16 %v255
      %v620 = vunpack.c.h.b16 %v255
      %v621 = vunpack.c.l.b16 %v256
      %v622 = vunpack.c.h.b16 %v256
      %v623 = vunpack.c.l.b16 %v257
      %v624 = vunpack.c.h.b16 %v257
      %v625 = vunpack.c.l.b16 %v258
      %v626 = vunpack.c.h.b16 %v258
      %v627 = vunpack.c.l.b16 %v259
      %v628 = vunpack.c.h.b16 %v259
      %v629 = vunpack.c.l.b16 %v260
      %v630 = vunpack.c.h.b16 %v260
      %v631 = vunpack.c.l.b16 %v261
      %v632 = vunpack.c.h.b16 %v261
      %v633 = vunpack.c.l.b16 %v262
      %v634 = vunpack.c.h.b16 %v262
      %v635 = vunpack.c.l.b16 %v263
      %v636 = vunpack.c.h.b16 %v263
      %v637 = vunpack.c.l.b16 %v264
      %v638 = vunpack.c.h.b16 %v264
      %v639 = vunpack.c.l.b16 %v265
      %v640 = vunpack.c.h.b16 %v265
      %v641 = vunpack.c.l.b16 %v266
      %v642 = vunpack.c.h.b16 %v266
      %v643 = vunpack.c.l.b16 %v267
      %v644 = vunpack.c.h.b16 %v267
      %v645 = vunpack.c.l.b16 %v268
      %v646 = vunpack.c.h.b16 %v268
      %v647 = vunpack.c.l.b16 %v269
      %v648 = vunpack.c.h.b16 %v269
      %v649 = vunpack.c.l.b16 %v270
      %v650 = vunpack.c.h.b16 %v270
      %v651 = vunpack.c.l.b16 %v271
      %v652 = vunpack.c.h.b16 %v271
      %v653 = vunpack.c.l.b16 %v272
      %v654 = vunpack.c.h.b16 %v272
      %v655 = vunpack.c.l.b16 %v273
      %v656 = vunpack.c.h.b16 %v273
      %v657 = vunpack.c.l.b16 %v274
      %v658 = vunpack.c.h.b16 %v274
      %v659 = vpack.c.b16 %v411, %v403
      %v660 = vpack.c.b16 %v412, %v404
      %v661 = vpack.c.b16 %v413, %v405
      %v662 = vpack.c.b16 %v414, %v406
      %v663 = vpack.c.b16 %v415, %v407
      %v664 = vpack.c.b16 %v416, %v408
      %v665 = vpack.c.b16 %v417, %v409
      %v666 = vpack.c.b16 %v418, %v410
      %v667 = vpack.c.b16 %v427, %v419
      %v668 = vpack.c.b16 %v428, %v420
      %v669 = vpack.c.b16 %v429, %v421
      %v670 = vpack.c.b16 %v430, %v422
      %v671 = vpack.c.b16 %v431, %v423
      %v672 = vpack.c.b16 %v432, %v424
      %v673 = vpack.c.b16 %v433, %v425
      %v674 = vpack.c.b16 %v434, %v426
      %v675 = vpack.c.b16 %v443, %v435
      %v676 = vpack.c.b16 %v444, %v436
      %v677 = vpack.c.b16 %v445, %v437
      %v678 = vpack.c.b16 %v446, %v438
      %v679 = vpack.c.b16 %v447, %v439
      %v680 = vpack.c.b16 %v448, %v440
      %v681 = vpack.c.b16 %v449, %v441
      %v682 = vpack.c.b16 %v450, %v442
      %v683 = vpack.c.b16 %v459, %v451
      %v684 = vpack.c.b16 %v460, %v452
      %v685 = vpack.c.b16 %v461, %v453
      %v686 = vpack.c.b16 %v462, %v454
      %v687 = vpack.c.b16 %v463, %v455
      %v688 = vpack.c.b16 %v464, %v456
      %v689 = vpack.c.b16 %v465, %v457
      %v690 = vpack.c.b16 %v466, %v458
      %v691 = vpack.c.b16 %v475, %v467
      %v692 = vpack.c.b16 %v476, %v468
      %v693 = vpack.c.b16 %v477, %v469
      %v694 = vpack.c.b16 %v478, %v470
      %v695 = vpack.c.b16 %v479, %v471
      %v696 = vpack.c.b16 %v480, %v472
      %v697 = vpack.c.b16 %v481, %v473
      %v698 = vpack.c.b16 %v482, %v474
      %v699 = vpack.c.b16 %v491, %v483
      %v700 = vpack.c.b16 %v492, %v484
      %v701 = vpack.c.b16 %v493, %v485
      %v702 = vpack.c.b16 %v494, %v486
      %v703 = vpack.c.b16 %v495, %v487
      %v704 = vpack.c.b16 %v496, %v488
      %v705 = vpack.c.b16 %v497, %v489
      %v706 = vpack.c.b16 %v498, %v490
      %v707 = vpack.c.b16 %v507, %v499
      %v708 = vpack.c.b16 %v508, %v500
      %v709 = vpack.c.b16 %v509, %v501
      %v710 = vpack.c.b16 %v510, %v502
      %v711 = vpack.c.b16 %v511, %v503
      %v712 = vpack.c.b16 %v512, %v504
      %v713 = vpack.c.b16 %v513, %v505
      %v714 = vpack.c.b16 %v514, %v506
      %v715 = vpack.c.b16 %v523, %v515
      %v716 = vpack.c.b16 %v524, %v516
      %v717 = vpack.c.b16 %v525, %v517
      %v718 = vpack.c.b16 %v526, %v518
      %v719 = vpack.c.b16 %v527, %v519
      %v720 = vpack.c.b16 %v528, %v520
      %v721 = vpack.c.b16 %v529, %v521
      %v722 = vpack.c.b16 %v530, %v522
      %v723 = vpack.c.b16 %v539, %v531
      %v724 = vpack.c.b16 %v540, %v532
      %v725 = vpack.c.b16 %v541, %v533
      %v726 = vpack.c.b16 %v542, %v534
      %v727 = vpack.c.b16 %v543, %v535
      %v728 = vpack.c.b16 %v544, %v536
      %v729 = vpack.c.b16 %v545, %v537
      %v730 = vpack.c.b16 %v546, %v538
      %v731 = vpack.c.b16 %v555, %v547
      %v732 = vpack.c.b16 %v556, %v548
      %v733 = vpack.c.b16 %v557, %v549
      %v734 = vpack.c.b16 %v558, %v550
      %v735 = vpack.c.b16 %v559, %v551
      %v736 = vpack.c.b16 %v560, %v552
      %v737 = vpack.c.b16 %v561, %v553
      %v738 = vpack.c.b16 %v562, %v554
      %v739 = vpack.c.b16 %v571, %v563
      %v740 = vpack.c.b16 %v572, %v564
      %v741 = vpack.c.b16 %v573, %v565
      %v742 = vpack.c.b16 %v574, %v566
      %v743 = vpack.c.b16 %v575, %v567
      %v744 = vpack.c.b16 %v576, %v568
      %v745 = vpack.c.b16 %v577, %v569
      %v746 = vpack.c.b16 %v578, %v570
      %v747 = vpack.c.b16 %v587, %v579
      %v748 = vpack.c.b16 %v588, %v580
      %v749 = vpack.c.b16 %v589, %v581
      %v750 = vpack.c.b16 %v590, %v582
      %v751 = vpack.c.b16 %v591, %v583
      %v752 = vpack.c.b16 %v592, %v584
      %v753 = vpack.c.b16 %v593, %v585
      %v754 = vpack.c.b16 %v594, %v586
      %v755 = vpack.c.b16 %v603, %v595
      %v756 = vpack.c.b16 %v604, %v596
      %v757 = vpack.c.b16 %v605, %v597
      %v758 = vpack.c.b16 %v606, %v598
      %v759 = vpack.c.b16 %v607, %v599
      %v760 = vpack.c.b16 %v608, %v600
      %v761 = vpack.c.b16 %v609, %v601
      %v762 = vpack.c.b16 %v610, %v602
      %v763 = vpack.c.b16 %v619, %v611
      %v764 = vpack.c.b16 %v620, %v612
      %v765 = vpack.c.b16 %v621, %v613
      %v766 = vpack.c.b16 %v622, %v614
      %v767 = vpack.c.b16 %v623, %v615
      %v768 = vpack.c.b16 %v624, %v616
      %v769 = vpack.c.b16 %v625, %v617
      %v770 = vpack.c.b16 %v626, %v618
      %v771 = vpack.c.b16 %v635, %v627
      %v772 = vpack.c.b16 %v636, %v628
      %v773 = vpack.c.b16 %v637, %v629
      %v774 = vpack.c.b16 %v638, %v630
      %v775 = vpack.c.b16 %v639, %v631
      %v776 = vpack.c.b16 %v640, %v632
      %v777 = vpack.c.b16 %v641, %v633
      %v778 = vpack.c.b16 %v642, %v634
      %v779 = vpack.c.b16 %v651, %v643
      %v780 = vpack.c.b16 %v652, %v644
      %v781 = vpack.c.b16 %v653, %v645
      %v782 = vpack.c.b16 %v654, %v646
      %v783 = vpack.c.b16 %v655, %v647
      %v784 = vpack.c.b16 %v656, %v648
      %v785 = vpack.c.b16 %v657, %v649
      %v786 = vpack.c.b16 %v658, %v650
      %915 = vmatpush.bf16.msra.mxu0 %v715
      %916 = vmatpush.bf16.msra.mxu0 %v707
      %917 = vmatpush.bf16.msra.mxu0 %v699
      %918 = vmatpush.bf16.msra.mxu0 %v691
      %919 = vmatpush.bf16.msra.mxu0 %v683
      %920 = vmatpush.bf16.msra.mxu0 %v675
      %921 = vmatpush.bf16.msra.mxu0 %v667
      %922 = vmatpush.bf16.msra.mxu0 %v659
      %923 = vmatmul.bf16.gmra.mxu0 %v145
      %v924 = vpop.f32.mrf.mxu0
      %v925 = vadd.f32 0.0, %v924
      %v926 = vpop.f32.mrf.mxu0
      %927 = vdwg.mxu0
      %928 = vmatpush.bf16.msra.mxu0 %v779
      %929 = vmatpush.bf16.msra.mxu0 %v771
      %930 = vmatpush.bf16.msra.mxu0 %v763
      %931 = vmatpush.bf16.msra.mxu0 %v755
      %932 = vmatpush.bf16.msra.mxu0 %v747
      %933 = vmatpush.bf16.msra.mxu0 %v739
      %934 = vmatpush.bf16.msra.mxu0 %v731
      %935 = vmatpush.bf16.msra.mxu0 %v723
      %936 = vmatmul.bf16.gmra.mxu0 %v146
      %v937 = vpop.f32.mrf.mxu0
      %v938 = vadd.f32 %v925, %v937
      %v939 = vpop.f32.mrf.mxu0
      %940 = vdwg.mxu0
      %941 = vmatpush.bf16.msra.mxu0 %v716
      %942 = vmatpush.bf16.msra.mxu0 %v708
      %943 = vmatpush.bf16.msra.mxu0 %v700
      %944 = vmatpush.bf16.msra.mxu0 %v692
      %945 = vmatpush.bf16.msra.mxu0 %v684
      %946 = vmatpush.bf16.msra.mxu0 %v676
      %947 = vmatpush.bf16.msra.mxu0 %v668
      %948 = vmatpush.bf16.msra.mxu0 %v660
      %949 = vmatmul.bf16.gmra.mxu0 %v145
      %v950 = vpop.f32.mrf.mxu0
      %v951 = vadd.f32 0.0, %v950
      %v952 = vpop.f32.mrf.mxu0
      %953 = vdwg.mxu0
      %954 = vmatpush.bf16.msra.mxu0 %v780
      %955 = vmatpush.bf16.msra.mxu0 %v772
      %956 = vmatpush.bf16.msra.mxu0 %v764
      %957 = vmatpush.bf16.msra.mxu0 %v756
      %958 = vmatpush.bf16.msra.mxu0 %v748
      %959 = vmatpush.bf16.msra.mxu0 %v740
      %960 = vmatpush.bf16.msra.mxu0 %v732
      %961 = vmatpush.bf16.msra.mxu0 %v724
      %962 = vmatmul.bf16.gmra.mxu0 %v146
      %v963 = vpop.f32.mrf.mxu0
      %v964 = vadd.f32 %v951, %v963
      %v965 = vpop.f32.mrf.mxu0
      %966 = vdwg.mxu0
      %967 = vmatpush.bf16.msra.mxu0 %v717
      %968 = vmatpush.bf16.msra.mxu0 %v709
      %969 = vmatpush.bf16.msra.mxu0 %v701
      %970 = vmatpush.bf16.msra.mxu0 %v693
      %971 = vmatpush.bf16.msra.mxu0 %v685
      %972 = vmatpush.bf16.msra.mxu0 %v677
      %973 = vmatpush.bf16.msra.mxu0 %v669
      %974 = vmatpush.bf16.msra.mxu0 %v661
      %975 = vmatmul.bf16.gmra.mxu0 %v145
      %v976 = vpop.f32.mrf.mxu0
      %v977 = vadd.f32 0.0, %v976
      %v978 = vpop.f32.mrf.mxu0
      %979 = vdwg.mxu0
      %980 = vmatpush.bf16.msra.mxu0 %v781
      %981 = vmatpush.bf16.msra.mxu0 %v773
      %982 = vmatpush.bf16.msra.mxu0 %v765
      %983 = vmatpush.bf16.msra.mxu0 %v757
      %984 = vmatpush.bf16.msra.mxu0 %v749
      %985 = vmatpush.bf16.msra.mxu0 %v741
      %986 = vmatpush.bf16.msra.mxu0 %v733
      %987 = vmatpush.bf16.msra.mxu0 %v725
      %988 = vmatmul.bf16.gmra.mxu0 %v146
      %v989 = vpop.f32.mrf.mxu0
      %v990 = vadd.f32 %v977, %v989
      %v991 = vpop.f32.mrf.mxu0
      %992 = vdwg.mxu0
      %993 = vmatpush.bf16.msra.mxu0 %v718
      %994 = vmatpush.bf16.msra.mxu0 %v710
      %995 = vmatpush.bf16.msra.mxu0 %v702
      %996 = vmatpush.bf16.msra.mxu0 %v694
      %997 = vmatpush.bf16.msra.mxu0 %v686
      %998 = vmatpush.bf16.msra.mxu0 %v678
      %999 = vmatpush.bf16.msra.mxu0 %v670
      %1000 = vmatpush.bf16.msra.mxu0 %v662
      %1001 = vmatmul.bf16.gmra.mxu0 %v145
      %v1002 = vpop.f32.mrf.mxu0
      %v1003 = vadd.f32 0.0, %v1002
      %v1004 = vpop.f32.mrf.mxu0
      %1005 = vdwg.mxu0
      %1006 = vmatpush.bf16.msra.mxu0 %v782
      %1007 = vmatpush.bf16.msra.mxu0 %v774
      %1008 = vmatpush.bf16.msra.mxu0 %v766
      %1009 = vmatpush.bf16.msra.mxu0 %v758
      %1010 = vmatpush.bf16.msra.mxu0 %v750
      %1011 = vmatpush.bf16.msra.mxu0 %v742
      %1012 = vmatpush.bf16.msra.mxu0 %v734
      %1013 = vmatpush.bf16.msra.mxu0 %v726
      %1014 = vmatmul.bf16.gmra.mxu0 %v146
      %v1015 = vpop.f32.mrf.mxu0
      %v1016 = vadd.f32 %v1003, %v1015
      %v1017 = vpop.f32.mrf.mxu0
      %1018 = vdwg.mxu0
      %1019 = vmatpush.bf16.msra.mxu0 %v719
      %1020 = vmatpush.bf16.msra.mxu0 %v711
      %1021 = vmatpush.bf16.msra.mxu0 %v703
      %1022 = vmatpush.bf16.msra.mxu0 %v695
      %1023 = vmatpush.bf16.msra.mxu0 %v687
      %1024 = vmatpush.bf16.msra.mxu0 %v679
      %1025 = vmatpush.bf16.msra.mxu0 %v671
      %1026 = vmatpush.bf16.msra.mxu0 %v663
      %1027 = vmatmul.bf16.gmra.mxu0 %v145
      %v1028 = vpop.f32.mrf.mxu0
      %v1029 = vadd.f32 0.0, %v1028
      %v1030 = vpop.f32.mrf.mxu0
      %1031 = vdwg.mxu0
      %1032 = vmatpush.bf16.msra.mxu0 %v783
      %1033 = vmatpush.bf16.msra.mxu0 %v775
      %1034 = vmatpush.bf16.msra.mxu0 %v767
      %1035 = vmatpush.bf16.msra.mxu0 %v759
      %1036 = vmatpush.bf16.msra.mxu0 %v751
      %1037 = vmatpush.bf16.msra.mxu0 %v743
      %1038 = vmatpush.bf16.msra.mxu0 %v735
      %1039 = vmatpush.bf16.msra.mxu0 %v727
      %1040 = vmatmul.bf16.gmra.mxu0 %v146
      %v1041 = vpop.f32.mrf.mxu0
      %v1042 = vadd.f32 %v1029, %v1041
      %v1043 = vpop.f32.mrf.mxu0
      %1044 = vdwg.mxu0
      %1045 = vmatpush.bf16.msra.mxu0 %v720
      %1046 = vmatpush.bf16.msra.mxu0 %v712
      %1047 = vmatpush.bf16.msra.mxu0 %v704
      %1048 = vmatpush.bf16.msra.mxu0 %v696
      %1049 = vmatpush.bf16.msra.mxu0 %v688
      %1050 = vmatpush.bf16.msra.mxu0 %v680
      %1051 = vmatpush.bf16.msra.mxu0 %v672
      %1052 = vmatpush.bf16.msra.mxu0 %v664
      %1053 = vmatmul.bf16.gmra.mxu0 %v145
      %v1054 = vpop.f32.mrf.mxu0
      %v1055 = vadd.f32 0.0, %v1054
      %v1056 = vpop.f32.mrf.mxu0
      %1057 = vdwg.mxu0
      %1058 = vmatpush.bf16.msra.mxu0 %v784
      %1059 = vmatpush.bf16.msra.mxu0 %v776
      %1060 = vmatpush.bf16.msra.mxu0 %v768
      %1061 = vmatpush.bf16.msra.mxu0 %v760
      %1062 = vmatpush.bf16.msra.mxu0 %v752
      %1063 = vmatpush.bf16.msra.mxu0 %v744
      %1064 = vmatpush.bf16.msra.mxu0 %v736
      %1065 = vmatpush.bf16.msra.mxu0 %v728
      %1066 = vmatmul.bf16.gmra.mxu0 %v146
      %v1067 = vpop.f32.mrf.mxu0
      %v1068 = vadd.f32 %v1055, %v1067
      %v1069 = vpop.f32.mrf.mxu0
      %1070 = vdwg.mxu0
      %1071 = vmatpush.bf16.msra.mxu0 %v721
      %1072 = vmatpush.bf16.msra.mxu0 %v713
      %1073 = vmatpush.bf16.msra.mxu0 %v705
      %1074 = vmatpush.bf16.msra.mxu0 %v697
      %1075 = vmatpush.bf16.msra.mxu0 %v689
      %1076 = vmatpush.bf16.msra.mxu0 %v681
      %1077 = vmatpush.bf16.msra.mxu0 %v673
      %1078 = vmatpush.bf16.msra.mxu0 %v665
      %1079 = vmatmul.bf16.gmra.mxu0 %v145
      %v1080 = vpop.f32.mrf.mxu0
      %v1081 = vadd.f32 0.0, %v1080
      %v1082 = vpop.f32.mrf.mxu0
      %1083 = vdwg.mxu0
      %1084 = vmatpush.bf16.msra.mxu0 %v785
      %1085 = vmatpush.bf16.msra.mxu0 %v777
      %1086 = vmatpush.bf16.msra.mxu0 %v769
      %1087 = vmatpush.bf16.msra.mxu0 %v761
      %1088 = vmatpush.bf16.msra.mxu0 %v753
      %1089 = vmatpush.bf16.msra.mxu0 %v745
      %1090 = vmatpush.bf16.msra.mxu0 %v737
      %1091 = vmatpush.bf16.msra.mxu0 %v729
      %1092 = vmatmul.bf16.gmra.mxu0 %v146
      %v1093 = vpop.f32.mrf.mxu0
      %v1094 = vadd.f32 %v1081, %v1093
      %v1095 = vpop.f32.mrf.mxu0
      %1096 = vdwg.mxu0
      %1097 = vmatpush.bf16.msra.mxu0 %v722
      %1098 = vmatpush.bf16.msra.mxu0 %v714
      %1099 = vmatpush.bf16.msra.mxu0 %v706
      %1100 = vmatpush.bf16.msra.mxu0 %v698
      %1101 = vmatpush.bf16.msra.mxu0 %v690
      %1102 = vmatpush.bf16.msra.mxu0 %v682
      %1103 = vmatpush.bf16.msra.mxu0 %v674
      %1104 = vmatpush.bf16.msra.mxu0 %v666
      %1105 = vmatmul.bf16.gmra.mxu0 %v145
      %v1106 = vpop.f32.mrf.mxu0
      %v1107 = vadd.f32 0.0, %v1106
      %v1108 = vpop.f32.mrf.mxu0
      %1109 = vdwg.mxu0
      %1110 = vmatpush.bf16.msra.mxu0 %v786
      %1111 = vmatpush.bf16.msra.mxu0 %v778
      %1112 = vmatpush.bf16.msra.mxu0 %v770
      %1113 = vmatpush.bf16.msra.mxu0 %v762
      %1114 = vmatpush.bf16.msra.mxu0 %v754
      %1115 = vmatpush.bf16.msra.mxu0 %v746
      %1116 = vmatpush.bf16.msra.mxu0 %v738
      %1117 = vmatpush.bf16.msra.mxu0 %v730
      %1118 = vmatmul.bf16.gmra.mxu0 %v146
      %v1119 = vpop.f32.mrf.mxu0
      %v1120 = vadd.f32 %v1107, %v1119
      %v1121 = vpop.f32.mrf.mxu0
      %1122 = vdwg.mxu0
      %v1127 = vrot.slane %v964, 7
      %v1128 = vrot.slane %v990, 6
      %v1129 = vrot.slane %v1016, 5
      %vm1130 = vcmask 1040384
      %v1131 = vsel %vm1130, %v938, %v1127
      %vm1132 = vcmask 1042434
      %v1133 = vsel %vm1132, %v1128, %v1129
      %vm1134 = vcmask 1041408
      %v1135 = vsel %vm1134, %v1131, %v1133
      %v1137 = vadd.f32 %v144, %v1135
      %v1138 = vxor.u32 %v1137, 2147483648
      %v1139 = vmul.f32 %v1138, 1.442695
      %v1140 = vpow.pop %v1139
      %v1141 = vadd.f32 %v1140, 1.0
      %v1142 = vrcp.pop %v1141
      %v1143 = vmul.f32 %v1141, %v1142
      %v1144 = vsub.f32 1.0, %v1143
      %v1145 = vmul.f32 %v1142, %v1144
      %v1146 = vadd.f32 %v1142, %v1145
      %vm1147 = vweird.f32 %v1141
      %vm1148 = vweird.f32 %v1142
      %vm1149 = vmor %vm1147, %vm1148
      %v1150 = vsel %vm1149, %v1142, %v1146
      %v1151 = vand.u32 2147483647, %v1141
      %vm1152 = vcmp.eq.f32.partialorder %v1151, 8.507059e+37
      %v1153 = vand.u32 %v1141, 2147483648
      %v1154 = vor.u32 1.1754944e-38, %v1153
      %v1155 = vsel %vm1152, %v1154, %v1150
      %v1156 = vmul.f32 1.0, %v1155
      %v1158 = vrot.slane %v1137, 3
      %v1160 = vtanh.pop %v1158
      %v1162 = vrot.slane %v1156, 1
      %v1164 = vmul.f32 %v1162, %v132
      %v1165 = vmul.f32 %v1156, %v1160
      %v1166 = vadd.f32 %v1164, %v1165
      %v1167 = vtanh.pop %v1166
      %v1168 = vrot.slane %v1156, 2
      %v1170 = vmul.f32 %v1168, %v1167
      %v1171 = vpack.c.bf16 %v1170, %v1170
      %v1172 = vld [vmem:[#allocation11] sm:$0xff]
      %v1173 = vld [vmem:[#allocation11 + $0x8] sm:$0xff]
      %v1174 = vld [vmem:[#allocation11 + $0x10] sm:$0xff]
      %v1175 = vld [vmem:[#allocation11 + $0x18] sm:$0xff]
      %v1176 = vld [vmem:[#allocation11 + $0x20] sm:$0xff]
      %v1177 = vld [vmem:[#allocation11 + $0x28] sm:$0xff]
      %v1178 = vld [vmem:[#allocation11 + $0x30] sm:$0xff]
      %v1179 = vld [vmem:[#allocation11 + $0x38] sm:$0xff]
      %v1180 = vld [vmem:[#allocation11 + $0x40] sm:$0xff]
      %v1181 = vld [vmem:[#allocation11 + $0x48] sm:$0xff]
      %v1182 = vld [vmem:[#allocation11 + $0x50] sm:$0xff]
      %v1183 = vld [vmem:[#allocation11 + $0x58] sm:$0xff]
      %v1184 = vld [vmem:[#allocation11 + $0x60] sm:$0xff]
      %v1185 = vld [vmem:[#allocation11 + $0x68] sm:$0xff]
      %v1186 = vld [vmem:[#allocation11 + $0x70] sm:$0xff]
      %v1187 = vld [vmem:[#allocation11 + $0x78] sm:$0xff]
      %v1188 = vld [vmem:[#allocation11 + $0x80] sm:$0xff]
      %v1189 = vld [vmem:[#allocation11 + $0x88] sm:$0xff]
      %v1190 = vld [vmem:[#allocation11 + $0x90] sm:$0xff]
      %v1191 = vld [vmem:[#allocation11 + $0x98] sm:$0xff]
      %v1192 = vld [vmem:[#allocation11 + $0xa0] sm:$0xff]
      %v1193 = vld [vmem:[#allocation11 + $0xa8] sm:$0xff]
      %v1194 = vld [vmem:[#allocation11 + $0xb0] sm:$0xff]
      %v1195 = vld [vmem:[#allocation11 + $0xb8] sm:$0xff]
      %v1196 = vld [vmem:[#allocation11 + $0xc0] sm:$0xff]
      %v1197 = vld [vmem:[#allocation11 + $0xc8] sm:$0xff]
      %v1198 = vld [vmem:[#allocation11 + $0xd0] sm:$0xff]
      %v1199 = vld [vmem:[#allocation11 + $0xd8] sm:$0xff]
      %v1200 = vld [vmem:[#allocation11 + $0xe0] sm:$0xff]
      %v1201 = vld [vmem:[#allocation11 + $0xe8] sm:$0xff]
      %v1202 = vld [vmem:[#allocation11 + $0xf0] sm:$0xff]
      %v1203 = vld [vmem:[#allocation11 + $0xf8] sm:$0xff]
      %v1236 = vunpack.c.l.b16 %v1172
      %v1237 = vunpack.c.h.b16 %v1172
      %v1238 = vunpack.c.l.b16 %v1173
      %v1239 = vunpack.c.h.b16 %v1173
      %v1240 = vunpack.c.l.b16 %v1174
      %v1241 = vunpack.c.h.b16 %v1174
      %v1242 = vunpack.c.l.b16 %v1175
      %v1243 = vunpack.c.h.b16 %v1175
      %v1244 = vunpack.c.l.b16 %v1176
      %v1245 = vunpack.c.h.b16 %v1176
      %v1246 = vunpack.c.l.b16 %v1177
      %v1247 = vunpack.c.h.b16 %v1177
      %v1248 = vunpack.c.l.b16 %v1178
      %v1249 = vunpack.c.h.b16 %v1178
      %v1250 = vunpack.c.l.b16 %v1179
      %v1251 = vunpack.c.h.b16 %v1179
      %v1252 = vunpack.c.l.b16 %v1180
      %v1253 = vunpack.c.h.b16 %v1180
      %v1254 = vunpack.c.l.b16 %v1181
      %v1255 = vunpack.c.h.b16 %v1181
      %v1256 = vunpack.c.l.b16 %v1182
      %v1257 = vunpack.c.h.b16 %v1182
      %v1258 = vunpack.c.l.b16 %v1183
      %v1259 = vunpack.c.h.b16 %v1183
      %v1260 = vunpack.c.l.b16 %v1184
      %v1261 = vunpack.c.h.b16 %v1184
      %v1262 = vunpack.c.l.b16 %v1185
      %v1263 = vunpack.c.h.b16 %v1185
      %v1264 = vunpack.c.l.b16 %v1186
      %v1265 = vunpack.c.h.b16 %v1186
      %v1266 = vunpack.c.l.b16 %v1187
      %v1267 = vunpack.c.h.b16 %v1187
      %v1268 = vunpack.c.l.b16 %v1188
      %v1269 = vunpack.c.h.b16 %v1188
      %v1270 = vunpack.c.l.b16 %v1189
      %v1271 = vunpack.c.h.b16 %v1189
      %v1272 = vunpack.c.l.b16 %v1190
      %v1273 = vunpack.c.h.b16 %v1190
      %v1274 = vunpack.c.l.b16 %v1191
      %v1275 = vunpack.c.h.b16 %v1191
      %v1276 = vunpack.c.l.b16 %v1192
      %v1277 = vunpack.c.h.b16 %v1192
      %v1278 = vunpack.c.l.b16 %v1193
      %v1279 = vunpack.c.h.b16 %v1193
      %v1280 = vunpack.c.l.b16 %v1194
      %v1281 = vunpack.c.h.b16 %v1194
      %v1282 = vunpack.c.l.b16 %v1195
      %v1283 = vunpack.c.h.b16 %v1195
      %v1284 = vunpack.c.l.b16 %v1196
      %v1285 = vunpack.c.h.b16 %v1196
      %v1286 = vunpack.c.l.b16 %v1197
      %v1287 = vunpack.c.h.b16 %v1197
      %v1288 = vunpack.c.l.b16 %v1198
      %v1289 = vunpack.c.h.b16 %v1198
      %v1290 = vunpack.c.l.b16 %v1199
      %v1291 = vunpack.c.h.b16 %v1199
      %v1292 = vunpack.c.l.b16 %v1200
      %v1293 = vunpack.c.h.b16 %v1200
      %v1294 = vunpack.c.l.b16 %v1201
      %v1295 = vunpack.c.h.b16 %v1201
      %v1296 = vunpack.c.l.b16 %v1202
      %v1297 = vunpack.c.h.b16 %v1202
      %v1298 = vunpack.c.l.b16 %v1203
      %v1299 = vunpack.c.h.b16 %v1203
      %v1300 = vpack.c.b16 %v1240, %v1236
      %v1301 = vpack.c.b16 %v1241, %v1237
      %v1302 = vpack.c.b16 %v1242, %v1238
      %v1303 = vpack.c.b16 %v1243, %v1239
      %v1304 = vpack.c.b16 %v1248, %v1244
      %v1305 = vpack.c.b16 %v1249, %v1245
      %v1306 = vpack.c.b16 %v1250, %v1246
      %v1307 = vpack.c.b16 %v1251, %v1247
      %v1308 = vpack.c.b16 %v1256, %v1252
      %v1309 = vpack.c.b16 %v1257, %v1253
      %v1310 = vpack.c.b16 %v1258, %v1254
      %v1311 = vpack.c.b16 %v1259, %v1255
      %v1312 = vpack.c.b16 %v1264, %v1260
      %v1313 = vpack.c.b16 %v1265, %v1261
      %v1314 = vpack.c.b16 %v1266, %v1262
      %v1315 = vpack.c.b16 %v1267, %v1263
      %v1316 = vpack.c.b16 %v1272, %v1268
      %v1317 = vpack.c.b16 %v1273, %v1269
      %v1318 = vpack.c.b16 %v1274, %v1270
      %v1319 = vpack.c.b16 %v1275, %v1271
      %v1320 = vpack.c.b16 %v1280, %v1276
      %v1321 = vpack.c.b16 %v1281, %v1277
      %v1322 = vpack.c.b16 %v1282, %v1278
      %v1323 = vpack.c.b16 %v1283, %v1279
      %v1324 = vpack.c.b16 %v1288, %v1284
      %v1325 = vpack.c.b16 %v1289, %v1285
      %v1326 = vpack.c.b16 %v1290, %v1286
      %v1327 = vpack.c.b16 %v1291, %v1287
      %v1328 = vpack.c.b16 %v1296, %v1292
      %v1329 = vpack.c.b16 %v1297, %v1293
      %v1330 = vpack.c.b16 %v1298, %v1294
      %v1331 = vpack.c.b16 %v1299, %v1295
      %1364 = vmatpush.bf16.msra.mxu0 %v1328
      %1365 = vmatpush.bf16.msra.mxu0 %v1324
      %1366 = vmatpush.bf16.msra.mxu0 %v1320
      %1367 = vmatpush.bf16.msra.mxu0 %v1316
      %1368 = vmatpush.bf16.msra.mxu0 %v1312
      %1369 = vmatpush.bf16.msra.mxu0 %v1308
      %1370 = vmatpush.bf16.msra.mxu0 %v1304
      %1371 = vmatpush.bf16.msra.mxu0 %v1300
      %1372 = vmatmul.bf16.gmra.mxu0 %v1171
      %v1373 = vpop.f32.mrf.mxu0
      %v1374 = vadd.f32 %v1042, %v1373
      %v1375 = vpop.f32.mrf.mxu0
      %1376 = vdwg.mxu0
      %1377 = vmatpush.bf16.msra.mxu0 %v1329
      %1378 = vmatpush.bf16.msra.mxu0 %v1325
      %1379 = vmatpush.bf16.msra.mxu0 %v1321
      %1380 = vmatpush.bf16.msra.mxu0 %v1317
      %1381 = vmatpush.bf16.msra.mxu0 %v1313
      %1382 = vmatpush.bf16.msra.mxu0 %v1309
      %1383 = vmatpush.bf16.msra.mxu0 %v1305
      %1384 = vmatpush.bf16.msra.mxu0 %v1301
      %1385 = vmatmul.bf16.gmra.mxu0 %v1171
      %v1386 = vpop.f32.mrf.mxu0
      %v1387 = vadd.f32 %v1068, %v1386
      %v1388 = vpop.f32.mrf.mxu0
      %1389 = vdwg.mxu0
      %1390 = vmatpush.bf16.msra.mxu0 %v1330
      %1391 = vmatpush.bf16.msra.mxu0 %v1326
      %1392 = vmatpush.bf16.msra.mxu0 %v1322
      %1393 = vmatpush.bf16.msra.mxu0 %v1318
      %1394 = vmatpush.bf16.msra.mxu0 %v1314
      %1395 = vmatpush.bf16.msra.mxu0 %v1310
      %1396 = vmatpush.bf16.msra.mxu0 %v1306
      %1397 = vmatpush.bf16.msra.mxu0 %v1302
      %1398 = vmatmul.bf16.gmra.mxu0 %v1171
      %v1399 = vpop.f32.mrf.mxu0
      %v1400 = vadd.f32 %v1094, %v1399
      %v1401 = vpop.f32.mrf.mxu0
      %1402 = vdwg.mxu0
      %1403 = vmatpush.bf16.msra.mxu0 %v1331
      %1404 = vmatpush.bf16.msra.mxu0 %v1327
      %1405 = vmatpush.bf16.msra.mxu0 %v1323
      %1406 = vmatpush.bf16.msra.mxu0 %v1319
      %1407 = vmatpush.bf16.msra.mxu0 %v1315
      %1408 = vmatpush.bf16.msra.mxu0 %v1311
      %1409 = vmatpush.bf16.msra.mxu0 %v1307
      %1410 = vmatpush.bf16.msra.mxu0 %v1303
      %1411 = vmatmul.bf16.gmra.mxu0 %v1171
      %v1412 = vpop.f32.mrf.mxu0
      %v1413 = vadd.f32 %v1120, %v1412
      %v1414 = vpop.f32.mrf.mxu0
      %1415 = vdwg.mxu0
      %v1416 = vld [vmem:[%s8] sm:$0xf]
      %v1418 = vperm.slane %v1416, 0
      %v1419 = vperm.slane %v1416, 1
      %v1420 = vperm.slane %v1416, 2
      %v1421 = vperm.slane %v1416, 3
      %v1426 = vadd.f32 %v1374, %v1418
      %v1427 = vadd.f32 %v1387, %v1419
      %v1428 = vadd.f32 %v1400, %v1420
      %v1429 = vadd.f32 %v1413, %v1421
      %v1430 = vxor.u32 %v1426, 2147483648
      %v1431 = vxor.u32 %v1427, 2147483648
      %v1432 = vxor.u32 %v1428, 2147483648
      %v1433 = vmul.f32 %v1430, 1.442695
      %v1434 = vpow.pop %v1433
      %v1435 = vmul.f32 %v1431, 1.442695
      %v1436 = vpow.pop %v1435
      %v1437 = vmul.f32 %v1432, 1.442695
      %v1438 = vpow.pop %v1437
      %v1439 = vadd.f32 %v1434, 1.0
      %v1440 = vadd.f32 %v1436, 1.0
      %v1441 = vadd.f32 %v1438, 1.0
      %v1442 = vrcp.pop %v1439
      %v1443 = vmul.f32 %v1439, %v1442
      %v1444 = vsub.f32 1.0, %v1443
      %v1445 = vmul.f32 %v1442, %v1444
      %v1446 = vadd.f32 %v1442, %v1445
      %vm1447 = vweird.f32 %v1439
      %vm1448 = vweird.f32 %v1442
      %vm1449 = vmor %vm1447, %vm1448
      %v1450 = vsel %vm1449, %v1442, %v1446
      %v1451 = vand.u32 2147483647, %v1439
      %vm1452 = vcmp.eq.f32.partialorder %v1451, 8.507059e+37
      %v1453 = vand.u32 %v1439, 2147483648
      %v1454 = vor.u32 1.1754944e-38, %v1453
      %v1455 = vsel %vm1452, %v1454, %v1450
      %v1456 = vmul.f32 1.0, %v1455
      %v1457 = vrcp.pop %v1440
      %v1458 = vmul.f32 %v1440, %v1457
      %v1459 = vsub.f32 1.0, %v1458
      %v1460 = vmul.f32 %v1457, %v1459
      %v1461 = vadd.f32 %v1457, %v1460
      %vm1462 = vweird.f32 %v1440
      %vm1463 = vweird.f32 %v1457
      %vm1464 = vmor %vm1462, %vm1463
      %v1465 = vsel %vm1464, %v1457, %v1461
      %v1466 = vand.u32 2147483647, %v1440
      %vm1467 = vcmp.eq.f32.partialorder %v1466, 8.507059e+37
      %v1468 = vand.u32 %v1440, 2147483648
      %v1469 = vor.u32 1.1754944e-38, %v1468
      %v1470 = vsel %vm1467, %v1469, %v1465
      %v1471 = vmul.f32 1.0, %v1470
      %v1472 = vrcp.pop %v1441
      %v1473 = vmul.f32 %v1441, %v1472
      %v1474 = vsub.f32 1.0, %v1473
      %v1475 = vmul.f32 %v1472, %v1474
      %v1476 = vadd.f32 %v1472, %v1475
      %vm1477 = vweird.f32 %v1441
      %vm1478 = vweird.f32 %v1472
      %vm1479 = vmor %vm1477, %vm1478
      %v1480 = vsel %vm1479, %v1472, %v1476
      %v1481 = vand.u32 2147483647, %v1441
      %vm1482 = vcmp.eq.f32.partialorder %v1481, 8.507059e+37
      %v1483 = vand.u32 %v1441, 2147483648
      %v1484 = vor.u32 1.1754944e-38, %v1483
      %v1485 = vsel %vm1482, %v1484, %v1480
      %v1486 = vmul.f32 1.0, %v1485
      %v1487 = vtanh.pop %v1429
      %v1488 = vmul.f32 %v1471, %v134
      %v1489 = vmul.f32 %v1456, %v1487
      %v1490 = vadd.f32 %v1488, %v1489
      %v1491 = vtanh.pop %v1490
      %v1492 = vmul.f32 %v1486, %v1491
      %v1493 = vld [vmem:[%s9] sm:$0x1]
      %v1494 = vmul.f32 %v1492, %v1493
      %v1495 = vsel %vm1130, %v1494, 0.0
      %1496 = vadd.xlane.f32.xlu0 %v1495
      %v1497 = vpop.xlane.xlu0 %1496
      %s1498 = sld [smem:[#allocation2]]
      %v1499 = vstv %s1498
      %v1500 = vadd.f32 %v1497, %v1499
      %s1501 = vtos %v1500
      %s1502 = scalar_lea.smem [#allocation14], %s135
      %1503 = sst [smem:[%s1502]] %s1501
      %s1504 = sadd.s32 %s135, 1
      %s1505 = sshra.s32 %s1504, 3
      %s1506 = sand.u32 %s1504, 7
      %s1507 = sshra.s32 %s1504, 3
      %s1508 = sand.u32 %s1504, 7
      %s1509 = smul.u32 %s1505, 4
      %s1510 = smul.u32 %s1509, 8
      %s1511 = sadd.s32 %s1510, %s1508
      %s1512 = scalar_lea.vmem [#allocation3], %s1511
      %v1513 = vld [vmem:[%s1512] ss:$8 sm:$0xf]
      %v1514 = vpack.c.bf16 %v1492, %v1492
      %v1515 = vld [vmem:[#allocation12] sm:$0xff]
      %v1516 = vld [vmem:[#allocation12 + $0x8] sm:$0xff]
      %v1517 = vld [vmem:[#allocation12 + $0x10] sm:$0xff]
      %v1518 = vld [vmem:[#allocation12 + $0x18] sm:$0xff]
      %v1519 = vld [vmem:[#allocation12 + $0x20] sm:$0xff]
      %v1520 = vld [vmem:[#allocation12 + $0x28] sm:$0xff]
      %v1521 = vld [vmem:[#allocation12 + $0x30] sm:$0xff]
      %v1522 = vld [vmem:[#allocation12 + $0x38] sm:$0xff]
      %v1523 = vld [vmem:[#allocation12 + $0x40] sm:$0xff]
      %v1524 = vld [vmem:[#allocation12 + $0x48] sm:$0xff]
      %v1525 = vld [vmem:[#allocation12 + $0x50] sm:$0xff]
      %v1526 = vld [vmem:[#allocation12 + $0x58] sm:$0xff]
      %v1527 = vld [vmem:[#allocation12 + $0x60] sm:$0xff]
      %v1528 = vld [vmem:[#allocation12 + $0x68] sm:$0xff]
      %v1529 = vld [vmem:[#allocation12 + $0x70] sm:$0xff]
      %v1530 = vld [vmem:[#allocation12 + $0x78] sm:$0xff]
      %v1531 = vld [vmem:[#allocation12 + $0x80] sm:$0xff]
      %v1532 = vld [vmem:[#allocation12 + $0x88] sm:$0xff]
      %v1533 = vld [vmem:[#allocation12 + $0x90] sm:$0xff]
      %v1534 = vld [vmem:[#allocation12 + $0x98] sm:$0xff]
      %v1535 = vld [vmem:[#allocation12 + $0xa0] sm:$0xff]
      %v1536 = vld [vmem:[#allocation12 + $0xa8] sm:$0xff]
      %v1537 = vld [vmem:[#allocation12 + $0xb0] sm:$0xff]
      %v1538 = vld [vmem:[#allocation12 + $0xb8] sm:$0xff]
      %v1539 = vld [vmem:[#allocation12 + $0xc0] sm:$0xff]
      %v1540 = vld [vmem:[#allocation12 + $0xc8] sm:$0xff]
      %v1541 = vld [vmem:[#allocation12 + $0xd0] sm:$0xff]
      %v1542 = vld [vmem:[#allocation12 + $0xd8] sm:$0xff]
      %v1543 = vld [vmem:[#allocation12 + $0xe0] sm:$0xff]
      %v1544 = vld [vmem:[#allocation12 + $0xe8] sm:$0xff]
      %v1545 = vld [vmem:[#allocation12 + $0xf0] sm:$0xff]
      %v1546 = vld [vmem:[#allocation12 + $0xf8] sm:$0xff]
      %v1547 = vld [vmem:[#allocation12 + $0x100] sm:$0xff]
      %v1548 = vld [vmem:[#allocation12 + $0x108] sm:$0xff]
      %v1549 = vld [vmem:[#allocation12 + $0x110] sm:$0xff]
      %v1550 = vld [vmem:[#allocation12 + $0x118] sm:$0xff]
      %v1551 = vld [vmem:[#allocation12 + $0x120] sm:$0xff]
      %v1552 = vld [vmem:[#allocation12 + $0x128] sm:$0xff]
      %v1553 = vld [vmem:[#allocation12 + $0x130] sm:$0xff]
      %v1554 = vld [vmem:[#allocation12 + $0x138] sm:$0xff]
      %v1555 = vld [vmem:[#allocation12 + $0x140] sm:$0xff]
      %v1556 = vld [vmem:[#allocation12 + $0x148] sm:$0xff]
      %v1557 = vld [vmem:[#allocation12 + $0x150] sm:$0xff]
      %v1558 = vld [vmem:[#allocation12 + $0x158] sm:$0xff]
      %v1559 = vld [vmem:[#allocation12 + $0x160] sm:$0xff]
      %v1560 = vld [vmem:[#allocation12 + $0x168] sm:$0xff]
      %v1561 = vld [vmem:[#allocation12 + $0x170] sm:$0xff]
      %v1562 = vld [vmem:[#allocation12 + $0x178] sm:$0xff]
      %v1563 = vld [vmem:[#allocation12 + $0x180] sm:$0xff]
      %v1564 = vld [vmem:[#allocation12 + $0x188] sm:$0xff]
      %v1565 = vld [vmem:[#allocation12 + $0x190] sm:$0xff]
      %v1566 = vld [vmem:[#allocation12 + $0x198] sm:$0xff]
      %v1567 = vld [vmem:[#allocation12 + $0x1a0] sm:$0xff]
      %v1568 = vld [vmem:[#allocation12 + $0x1a8] sm:$0xff]
      %v1569 = vld [vmem:[#allocation12 + $0x1b0] sm:$0xff]
      %v1570 = vld [vmem:[#allocation12 + $0x1b8] sm:$0xff]
      %v1571 = vld [vmem:[#allocation12 + $0x1c0] sm:$0xff]
      %v1572 = vld [vmem:[#allocation12 + $0x1c8] sm:$0xff]
      %v1573 = vld [vmem:[#allocation12 + $0x1d0] sm:$0xff]
      %v1574 = vld [vmem:[#allocation12 + $0x1d8] sm:$0xff]
      %v1575 = vld [vmem:[#allocation12 + $0x1e0] sm:$0xff]
      %v1576 = vld [vmem:[#allocation12 + $0x1e8] sm:$0xff]
      %v1577 = vld [vmem:[#allocation12 + $0x1f0] sm:$0xff]
      %v1578 = vld [vmem:[#allocation12 + $0x1f8] sm:$0xff]
      %v1579 = vld [vmem:[#allocation12 + $0x200] sm:$0xff]
      %v1580 = vld [vmem:[#allocation12 + $0x208] sm:$0xff]
      %v1581 = vld [vmem:[#allocation12 + $0x210] sm:$0xff]
      %v1582 = vld [vmem:[#allocation12 + $0x218] sm:$0xff]
      %v1583 = vld [vmem:[#allocation12 + $0x220] sm:$0xff]
      %v1584 = vld [vmem:[#allocation12 + $0x228] sm:$0xff]
      %v1585 = vld [vmem:[#allocation12 + $0x230] sm:$0xff]
      %v1586 = vld [vmem:[#allocation12 + $0x238] sm:$0xff]
      %v1587 = vld [vmem:[#allocation12 + $0x240] sm:$0xff]
      %v1588 = vld [vmem:[#allocation12 + $0x248] sm:$0xff]
      %v1589 = vld [vmem:[#allocation12 + $0x250] sm:$0xff]
      %v1590 = vld [vmem:[#allocation12 + $0x258] sm:$0xff]
      %v1591 = vld [vmem:[#allocation12 + $0x260] sm:$0xff]
      %v1592 = vld [vmem:[#allocation12 + $0x268] sm:$0xff]
      %v1593 = vld [vmem:[#allocation12 + $0x270] sm:$0xff]
      %v1594 = vld [vmem:[#allocation12 + $0x278] sm:$0xff]
      %v1595 = vld [vmem:[#allocation12 + $0x280] sm:$0xff]
      %v1596 = vld [vmem:[#allocation12 + $0x288] sm:$0xff]
      %v1597 = vld [vmem:[#allocation12 + $0x290] sm:$0xff]
      %v1598 = vld [vmem:[#allocation12 + $0x298] sm:$0xff]
      %v1599 = vld [vmem:[#allocation12 + $0x2a0] sm:$0xff]
      %v1600 = vld [vmem:[#allocation12 + $0x2a8] sm:$0xff]
      %v1601 = vld [vmem:[#allocation12 + $0x2b0] sm:$0xff]
      %v1602 = vld [vmem:[#allocation12 + $0x2b8] sm:$0xff]
      %v1603 = vld [vmem:[#allocation12 + $0x2c0] sm:$0xff]
      %v1604 = vld [vmem:[#allocation12 + $0x2c8] sm:$0xff]
      %v1605 = vld [vmem:[#allocation12 + $0x2d0] sm:$0xff]
      %v1606 = vld [vmem:[#allocation12 + $0x2d8] sm:$0xff]
      %v1607 = vld [vmem:[#allocation12 + $0x2e0] sm:$0xff]
      %v1608 = vld [vmem:[#allocation12 + $0x2e8] sm:$0xff]
      %v1609 = vld [vmem:[#allocation12 + $0x2f0] sm:$0xff]
      %v1610 = vld [vmem:[#allocation12 + $0x2f8] sm:$0xff]
      %v1611 = vld [vmem:[#allocation12 + $0x300] sm:$0xff]
      %v1612 = vld [vmem:[#allocation12 + $0x308] sm:$0xff]
      %v1613 = vld [vmem:[#allocation12 + $0x310] sm:$0xff]
      %v1614 = vld [vmem:[#allocation12 + $0x318] sm:$0xff]
      %v1615 = vld [vmem:[#allocation12 + $0x320] sm:$0xff]
      %v1616 = vld [vmem:[#allocation12 + $0x328] sm:$0xff]
      %v1617 = vld [vmem:[#allocation12 + $0x330] sm:$0xff]
      %v1618 = vld [vmem:[#allocation12 + $0x338] sm:$0xff]
      %v1619 = vld [vmem:[#allocation12 + $0x340] sm:$0xff]
      %v1620 = vld [vmem:[#allocation12 + $0x348] sm:$0xff]
      %v1621 = vld [vmem:[#allocation12 + $0x350] sm:$0xff]
      %v1622 = vld [vmem:[#allocation12 + $0x358] sm:$0xff]
      %v1623 = vld [vmem:[#allocation12 + $0x360] sm:$0xff]
      %v1624 = vld [vmem:[#allocation12 + $0x368] sm:$0xff]
      %v1625 = vld [vmem:[#allocation12 + $0x370] sm:$0xff]
      %v1626 = vld [vmem:[#allocation12 + $0x378] sm:$0xff]
      %v1627 = vld [vmem:[#allocation12 + $0x380] sm:$0xff]
      %v1628 = vld [vmem:[#allocation12 + $0x388] sm:$0xff]
      %v1629 = vld [vmem:[#allocation12 + $0x390] sm:$0xff]
      %v1630 = vld [vmem:[#allocation12 + $0x398] sm:$0xff]
      %v1631 = vld [vmem:[#allocation12 + $0x3a0] sm:$0xff]
      %v1632 = vld [vmem:[#allocation12 + $0x3a8] sm:$0xff]
      %v1633 = vld [vmem:[#allocation12 + $0x3b0] sm:$0xff]
      %v1634 = vld [vmem:[#allocation12 + $0x3b8] sm:$0xff]
      %v1635 = vld [vmem:[#allocation12 + $0x3c0] sm:$0xff]
      %v1636 = vld [vmem:[#allocation12 + $0x3c8] sm:$0xff]
      %v1637 = vld [vmem:[#allocation12 + $0x3d0] sm:$0xff]
      %v1638 = vld [vmem:[#allocation12 + $0x3d8] sm:$0xff]
      %v1639 = vld [vmem:[#allocation12 + $0x3e0] sm:$0xff]
      %v1640 = vld [vmem:[#allocation12 + $0x3e8] sm:$0xff]
      %v1641 = vld [vmem:[#allocation12 + $0x3f0] sm:$0xff]
      %v1642 = vld [vmem:[#allocation12 + $0x3f8] sm:$0xff]
      %v1771 = vunpack.c.l.b16 %v1515
      %v1772 = vunpack.c.h.b16 %v1515
      %v1773 = vunpack.c.l.b16 %v1516
      %v1774 = vunpack.c.h.b16 %v1516
      %v1775 = vunpack.c.l.b16 %v1517
      %v1776 = vunpack.c.h.b16 %v1517
      %v1777 = vunpack.c.l.b16 %v1518
      %v1778 = vunpack.c.h.b16 %v1518
      %v1779 = vunpack.c.l.b16 %v1519
      %v1780 = vunpack.c.h.b16 %v1519
      %v1781 = vunpack.c.l.b16 %v1520
      %v1782 = vunpack.c.h.b16 %v1520
      %v1783 = vunpack.c.l.b16 %v1521
      %v1784 = vunpack.c.h.b16 %v1521
      %v1785 = vunpack.c.l.b16 %v1522
      %v1786 = vunpack.c.h.b16 %v1522
      %v1787 = vunpack.c.l.b16 %v1523
      %v1788 = vunpack.c.h.b16 %v1523
      %v1789 = vunpack.c.l.b16 %v1524
      %v1790 = vunpack.c.h.b16 %v1524
      %v1791 = vunpack.c.l.b16 %v1525
      %v1792 = vunpack.c.h.b16 %v1525
      %v1793 = vunpack.c.l.b16 %v1526
      %v1794 = vunpack.c.h.b16 %v1526
      %v1795 = vunpack.c.l.b16 %v1527
      %v1796 = vunpack.c.h.b16 %v1527
      %v1797 = vunpack.c.l.b16 %v1528
      %v1798 = vunpack.c.h.b16 %v1528
      %v1799 = vunpack.c.l.b16 %v1529
      %v1800 = vunpack.c.h.b16 %v1529
      %v1801 = vunpack.c.l.b16 %v1530
      %v1802 = vunpack.c.h.b16 %v1530
      %v1803 = vunpack.c.l.b16 %v1531
      %v1804 = vunpack.c.h.b16 %v1531
      %v1805 = vunpack.c.l.b16 %v1532
      %v1806 = vunpack.c.h.b16 %v1532
      %v1807 = vunpack.c.l.b16 %v1533
      %v1808 = vunpack.c.h.b16 %v1533
      %v1809 = vunpack.c.l.b16 %v1534
      %v1810 = vunpack.c.h.b16 %v1534
      %v1811 = vunpack.c.l.b16 %v1535
      %v1812 = vunpack.c.h.b16 %v1535
      %v1813 = vunpack.c.l.b16 %v1536
      %v1814 = vunpack.c.h.b16 %v1536
      %v1815 = vunpack.c.l.b16 %v1537
      %v1816 = vunpack.c.h.b16 %v1537
      %v1817 = vunpack.c.l.b16 %v1538
      %v1818 = vunpack.c.h.b16 %v1538
      %v1819 = vunpack.c.l.b16 %v1539
      %v1820 = vunpack.c.h.b16 %v1539
      %v1821 = vunpack.c.l.b16 %v1540
      %v1822 = vunpack.c.h.b16 %v1540
      %v1823 = vunpack.c.l.b16 %v1541
      %v1824 = vunpack.c.h.b16 %v1541
      %v1825 = vunpack.c.l.b16 %v1542
      %v1826 = vunpack.c.h.b16 %v1542
      %v1827 = vunpack.c.l.b16 %v1543
      %v1828 = vunpack.c.h.b16 %v1543
      %v1829 = vunpack.c.l.b16 %v1544
      %v1830 = vunpack.c.h.b16 %v1544
      %v1831 = vunpack.c.l.b16 %v1545
      %v1832 = vunpack.c.h.b16 %v1545
      %v1833 = vunpack.c.l.b16 %v1546
      %v1834 = vunpack.c.h.b16 %v1546
      %v1835 = vunpack.c.l.b16 %v1547
      %v1836 = vunpack.c.h.b16 %v1547
      %v1837 = vunpack.c.l.b16 %v1548
      %v1838 = vunpack.c.h.b16 %v1548
      %v1839 = vunpack.c.l.b16 %v1549
      %v1840 = vunpack.c.h.b16 %v1549
      %v1841 = vunpack.c.l.b16 %v1550
      %v1842 = vunpack.c.h.b16 %v1550
      %v1843 = vunpack.c.l.b16 %v1551
      %v1844 = vunpack.c.h.b16 %v1551
      %v1845 = vunpack.c.l.b16 %v1552
      %v1846 = vunpack.c.h.b16 %v1552
      %v1847 = vunpack.c.l.b16 %v1553
      %v1848 = vunpack.c.h.b16 %v1553
      %v1849 = vunpack.c.l.b16 %v1554
      %v1850 = vunpack.c.h.b16 %v1554
      %v1851 = vunpack.c.l.b16 %v1555
      %v1852 = vunpack.c.h.b16 %v1555
      %v1853 = vunpack.c.l.b16 %v1556
      %v1854 = vunpack.c.h.b16 %v1556
      %v1855 = vunpack.c.l.b16 %v1557
      %v1856 = vunpack.c.h.b16 %v1557
      %v1857 = vunpack.c.l.b16 %v1558
      %v1858 = vunpack.c.h.b16 %v1558
      %v1859 = vunpack.c.l.b16 %v1559
      %v1860 = vunpack.c.h.b16 %v1559
      %v1861 = vunpack.c.l.b16 %v1560
      %v1862 = vunpack.c.h.b16 %v1560
      %v1863 = vunpack.c.l.b16 %v1561
      %v1864 = vunpack.c.h.b16 %v1561
      %v1865 = vunpack.c.l.b16 %v1562
      %v1866 = vunpack.c.h.b16 %v1562
      %v1867 = vunpack.c.l.b16 %v1563
      %v1868 = vunpack.c.h.b16 %v1563
      %v1869 = vunpack.c.l.b16 %v1564
      %v1870 = vunpack.c.h.b16 %v1564
      %v1871 = vunpack.c.l.b16 %v1565
      %v1872 = vunpack.c.h.b16 %v1565
      %v1873 = vunpack.c.l.b16 %v1566
      %v1874 = vunpack.c.h.b16 %v1566
      %v1875 = vunpack.c.l.b16 %v1567
      %v1876 = vunpack.c.h.b16 %v1567
      %v1877 = vunpack.c.l.b16 %v1568
      %v1878 = vunpack.c.h.b16 %v1568
      %v1879 = vunpack.c.l.b16 %v1569
      %v1880 = vunpack.c.h.b16 %v1569
      %v1881 = vunpack.c.l.b16 %v1570
      %v1882 = vunpack.c.h.b16 %v1570
      %v1883 = vunpack.c.l.b16 %v1571
      %v1884 = vunpack.c.h.b16 %v1571
      %v1885 = vunpack.c.l.b16 %v1572
      %v1886 = vunpack.c.h.b16 %v1572
      %v1887 = vunpack.c.l.b16 %v1573
      %v1888 = vunpack.c.h.b16 %v1573
      %v1889 = vunpack.c.l.b16 %v1574
      %v1890 = vunpack.c.h.b16 %v1574
      %v1891 = vunpack.c.l.b16 %v1575
      %v1892 = vunpack.c.h.b16 %v1575
      %v1893 = vunpack.c.l.b16 %v1576
      %v1894 = vunpack.c.h.b16 %v1576
      %v1895 = vunpack.c.l.b16 %v1577
      %v1896 = vunpack.c.h.b16 %v1577
      %v1897 = vunpack.c.l.b16 %v1578
      %v1898 = vunpack.c.h.b16 %v1578
      %v1899 = vunpack.c.l.b16 %v1579
      %v1900 = vunpack.c.h.b16 %v1579
      %v1901 = vunpack.c.l.b16 %v1580
      %v1902 = vunpack.c.h.b16 %v1580
      %v1903 = vunpack.c.l.b16 %v1581
      %v1904 = vunpack.c.h.b16 %v1581
      %v1905 = vunpack.c.l.b16 %v1582
      %v1906 = vunpack.c.h.b16 %v1582
      %v1907 = vunpack.c.l.b16 %v1583
      %v1908 = vunpack.c.h.b16 %v1583
      %v1909 = vunpack.c.l.b16 %v1584
      %v1910 = vunpack.c.h.b16 %v1584
      %v1911 = vunpack.c.l.b16 %v1585
      %v1912 = vunpack.c.h.b16 %v1585
      %v1913 = vunpack.c.l.b16 %v1586
      %v1914 = vunpack.c.h.b16 %v1586
      %v1915 = vunpack.c.l.b16 %v1587
      %v1916 = vunpack.c.h.b16 %v1587
      %v1917 = vunpack.c.l.b16 %v1588
      %v1918 = vunpack.c.h.b16 %v1588
      %v1919 = vunpack.c.l.b16 %v1589
      %v1920 = vunpack.c.h.b16 %v1589
      %v1921 = vunpack.c.l.b16 %v1590
      %v1922 = vunpack.c.h.b16 %v1590
      %v1923 = vunpack.c.l.b16 %v1591
      %v1924 = vunpack.c.h.b16 %v1591
      %v1925 = vunpack.c.l.b16 %v1592
      %v1926 = vunpack.c.h.b16 %v1592
      %v1927 = vunpack.c.l.b16 %v1593
      %v1928 = vunpack.c.h.b16 %v1593
      %v1929 = vunpack.c.l.b16 %v1594
      %v1930 = vunpack.c.h.b16 %v1594
      %v1931 = vunpack.c.l.b16 %v1595
      %v1932 = vunpack.c.h.b16 %v1595
      %v1933 = vunpack.c.l.b16 %v1596
      %v1934 = vunpack.c.h.b16 %v1596
      %v1935 = vunpack.c.l.b16 %v1597
      %v1936 = vunpack.c.h.b16 %v1597
      %v1937 = vunpack.c.l.b16 %v1598
      %v1938 = vunpack.c.h.b16 %v1598
      %v1939 = vunpack.c.l.b16 %v1599
      %v1940 = vunpack.c.h.b16 %v1599
      %v1941 = vunpack.c.l.b16 %v1600
      %v1942 = vunpack.c.h.b16 %v1600
      %v1943 = vunpack.c.l.b16 %v1601
      %v1944 = vunpack.c.h.b16 %v1601
      %v1945 = vunpack.c.l.b16 %v1602
      %v1946 = vunpack.c.h.b16 %v1602
      %v1947 = vunpack.c.l.b16 %v1603
      %v1948 = vunpack.c.h.b16 %v1603
      %v1949 = vunpack.c.l.b16 %v1604
      %v1950 = vunpack.c.h.b16 %v1604
      %v1951 = vunpack.c.l.b16 %v1605
      %v1952 = vunpack.c.h.b16 %v1605
      %v1953 = vunpack.c.l.b16 %v1606
      %v1954 = vunpack.c.h.b16 %v1606
      %v1955 = vunpack.c.l.b16 %v1607
      %v1956 = vunpack.c.h.b16 %v1607
      %v1957 = vunpack.c.l.b16 %v1608
      %v1958 = vunpack.c.h.b16 %v1608
      %v1959 = vunpack.c.l.b16 %v1609
      %v1960 = vunpack.c.h.b16 %v1609
      %v1961 = vunpack.c.l.b16 %v1610
      %v1962 = vunpack.c.h.b16 %v1610
      %v1963 = vunpack.c.l.b16 %v1611
      %v1964 = vunpack.c.h.b16 %v1611
      %v1965 = vunpack.c.l.b16 %v1612
      %v1966 = vunpack.c.h.b16 %v1612
      %v1967 = vunpack.c.l.b16 %v1613
      %v1968 = vunpack.c.h.b16 %v1613
      %v1969 = vunpack.c.l.b16 %v1614
      %v1970 = vunpack.c.h.b16 %v1614
      %v1971 = vunpack.c.l.b16 %v1615
      %v1972 = vunpack.c.h.b16 %v1615
      %v1973 = vunpack.c.l.b16 %v1616
      %v1974 = vunpack.c.h.b16 %v1616
      %v1975 = vunpack.c.l.b16 %v1617
      %v1976 = vunpack.c.h.b16 %v1617
      %v1977 = vunpack.c.l.b16 %v1618
      %v1978 = vunpack.c.h.b16 %v1618
      %v1979 = vunpack.c.l.b16 %v1619
      %v1980 = vunpack.c.h.b16 %v1619
      %v1981 = vunpack.c.l.b16 %v1620
      %v1982 = vunpack.c.h.b16 %v1620
      %v1983 = vunpack.c.l.b16 %v1621
      %v1984 = vunpack.c.h.b16 %v1621
      %v1985 = vunpack.c.l.b16 %v1622
      %v1986 = vunpack.c.h.b16 %v1622
      %v1987 = vunpack.c.l.b16 %v1623
      %v1988 = vunpack.c.h.b16 %v1623
      %v1989 = vunpack.c.l.b16 %v1624
      %v1990 = vunpack.c.h.b16 %v1624
      %v1991 = vunpack.c.l.b16 %v1625
      %v1992 = vunpack.c.h.b16 %v1625
      %v1993 = vunpack.c.l.b16 %v1626
      %v1994 = vunpack.c.h.b16 %v1626
      %v1995 = vunpack.c.l.b16 %v1627
      %v1996 = vunpack.c.h.b16 %v1627
      %v1997 = vunpack.c.l.b16 %v1628
      %v1998 = vunpack.c.h.b16 %v1628
      %v1999 = vunpack.c.l.b16 %v1629
      %v2000 = vunpack.c.h.b16 %v1629
      %v2001 = vunpack.c.l.b16 %v1630
      %v2002 = vunpack.c.h.b16 %v1630
      %v2003 = vunpack.c.l.b16 %v1631
      %v2004 = vunpack.c.h.b16 %v1631
      %v2005 = vunpack.c.l.b16 %v1632
      %v2006 = vunpack.c.h.b16 %v1632
      %v2007 = vunpack.c.l.b16 %v1633
      %v2008 = vunpack.c.h.b16 %v1633
      %v2009 = vunpack.c.l.b16 %v1634
      %v2010 = vunpack.c.h.b16 %v1634
      %v2011 = vunpack.c.l.b16 %v1635
      %v2012 = vunpack.c.h.b16 %v1635
      %v2013 = vunpack.c.l.b16 %v1636
      %v2014 = vunpack.c.h.b16 %v1636
      %v2015 = vunpack.c.l.b16 %v1637
      %v2016 = vunpack.c.h.b16 %v1637
      %v2017 = vunpack.c.l.b16 %v1638
      %v2018 = vunpack.c.h.b16 %v1638
      %v2019 = vunpack.c.l.b16 %v1639
      %v2020 = vunpack.c.h.b16 %v1639
      %v2021 = vunpack.c.l.b16 %v1640
      %v2022 = vunpack.c.h.b16 %v1640
      %v2023 = vunpack.c.l.b16 %v1641
      %v2024 = vunpack.c.h.b16 %v1641
      %v2025 = vunpack.c.l.b16 %v1642
      %v2026 = vunpack.c.h.b16 %v1642
      %v2027 = vpack.c.b16 %v1779, %v1771
      %v2028 = vpack.c.b16 %v1780, %v1772
      %v2029 = vpack.c.b16 %v1781, %v1773
      %v2030 = vpack.c.b16 %v1782, %v1774
      %v2031 = vpack.c.b16 %v1783, %v1775
      %v2032 = vpack.c.b16 %v1784, %v1776
      %v2033 = vpack.c.b16 %v1785, %v1777
      %v2034 = vpack.c.b16 %v1786, %v1778
      %v2035 = vpack.c.b16 %v1795, %v1787
      %v2036 = vpack.c.b16 %v1796, %v1788
      %v2037 = vpack.c.b16 %v1797, %v1789
      %v2038 = vpack.c.b16 %v1798, %v1790
      %v2039 = vpack.c.b16 %v1799, %v1791
      %v2040 = vpack.c.b16 %v1800, %v1792
      %v2041 = vpack.c.b16 %v1801, %v1793
      %v2042 = vpack.c.b16 %v1802, %v1794
      %v2043 = vpack.c.b16 %v1811, %v1803
      %v2044 = vpack.c.b16 %v1812, %v1804
      %v2045 = vpack.c.b16 %v1813, %v1805
      %v2046 = vpack.c.b16 %v1814, %v1806
      %v2047 = vpack.c.b16 %v1815, %v1807
      %v2048 = vpack.c.b16 %v1816, %v1808
      %v2049 = vpack.c.b16 %v1817, %v1809
      %v2050 = vpack.c.b16 %v1818, %v1810
      %v2051 = vpack.c.b16 %v1827, %v1819
      %v2052 = vpack.c.b16 %v1828, %v1820
      %v2053 = vpack.c.b16 %v1829, %v1821
      %v2054 = vpack.c.b16 %v1830, %v1822
      %v2055 = vpack.c.b16 %v1831, %v1823
      %v2056 = vpack.c.b16 %v1832, %v1824
      %v2057 = vpack.c.b16 %v1833, %v1825
      %v2058 = vpack.c.b16 %v1834, %v1826
      %v2059 = vpack.c.b16 %v1843, %v1835
      %v2060 = vpack.c.b16 %v1844, %v1836
      %v2061 = vpack.c.b16 %v1845, %v1837
      %v2062 = vpack.c.b16 %v1846, %v1838
      %v2063 = vpack.c.b16 %v1847, %v1839
      %v2064 = vpack.c.b16 %v1848, %v1840
      %v2065 = vpack.c.b16 %v1849, %v1841
      %v2066 = vpack.c.b16 %v1850, %v1842
      %v2067 = vpack.c.b16 %v1859, %v1851
      %v2068 = vpack.c.b16 %v1860, %v1852
      %v2069 = vpack.c.b16 %v1861, %v1853
      %v2070 = vpack.c.b16 %v1862, %v1854
      %v2071 = vpack.c.b16 %v1863, %v1855
      %v2072 = vpack.c.b16 %v1864, %v1856
      %v2073 = vpack.c.b16 %v1865, %v1857
      %v2074 = vpack.c.b16 %v1866, %v1858
      %v2075 = vpack.c.b16 %v1875, %v1867
      %v2076 = vpack.c.b16 %v1876, %v1868
      %v2077 = vpack.c.b16 %v1877, %v1869
      %v2078 = vpack.c.b16 %v1878, %v1870
      %v2079 = vpack.c.b16 %v1879, %v1871
      %v2080 = vpack.c.b16 %v1880, %v1872
      %v2081 = vpack.c.b16 %v1881, %v1873
      %v2082 = vpack.c.b16 %v1882, %v1874
      %v2083 = vpack.c.b16 %v1891, %v1883
      %v2084 = vpack.c.b16 %v1892, %v1884
      %v2085 = vpack.c.b16 %v1893, %v1885
      %v2086 = vpack.c.b16 %v1894, %v1886
      %v2087 = vpack.c.b16 %v1895, %v1887
      %v2088 = vpack.c.b16 %v1896, %v1888
      %v2089 = vpack.c.b16 %v1897, %v1889
      %v2090 = vpack.c.b16 %v1898, %v1890
      %v2091 = vpack.c.b16 %v1907, %v1899
      %v2092 = vpack.c.b16 %v1908, %v1900
      %v2093 = vpack.c.b16 %v1909, %v1901
      %v2094 = vpack.c.b16 %v1910, %v1902
      %v2095 = vpack.c.b16 %v1911, %v1903
      %v2096 = vpack.c.b16 %v1912, %v1904
      %v2097 = vpack.c.b16 %v1913, %v1905
      %v2098 = vpack.c.b16 %v1914, %v1906
      %v2099 = vpack.c.b16 %v1923, %v1915
      %v2100 = vpack.c.b16 %v1924, %v1916
      %v2101 = vpack.c.b16 %v1925, %v1917
      %v2102 = vpack.c.b16 %v1926, %v1918
      %v2103 = vpack.c.b16 %v1927, %v1919
      %v2104 = vpack.c.b16 %v1928, %v1920
      %v2105 = vpack.c.b16 %v1929, %v1921
      %v2106 = vpack.c.b16 %v1930, %v1922
      %v2107 = vpack.c.b16 %v1939, %v1931
      %v2108 = vpack.c.b16 %v1940, %v1932
      %v2109 = vpack.c.b16 %v1941, %v1933
      %v2110 = vpack.c.b16 %v1942, %v1934
      %v2111 = vpack.c.b16 %v1943, %v1935
      %v2112 = vpack.c.b16 %v1944, %v1936
      %v2113 = vpack.c.b16 %v1945, %v1937
      %v2114 = vpack.c.b16 %v1946, %v1938
      %v2115 = vpack.c.b16 %v1955, %v1947
      %v2116 = vpack.c.b16 %v1956, %v1948
      %v2117 = vpack.c.b16 %v1957, %v1949
      %v2118 = vpack.c.b16 %v1958, %v1950
      %v2119 = vpack.c.b16 %v1959, %v1951
      %v2120 = vpack.c.b16 %v1960, %v1952
      %v2121 = vpack.c.b16 %v1961, %v1953
      %v2122 = vpack.c.b16 %v1962, %v1954
      %v2123 = vpack.c.b16 %v1971, %v1963
      %v2124 = vpack.c.b16 %v1972, %v1964
      %v2125 = vpack.c.b16 %v1973, %v1965
      %v2126 = vpack.c.b16 %v1974, %v1966
      %v2127 = vpack.c.b16 %v1975, %v1967
      %v2128 = vpack.c.b16 %v1976, %v1968
      %v2129 = vpack.c.b16 %v1977, %v1969
      %v2130 = vpack.c.b16 %v1978, %v1970
      %v2131 = vpack.c.b16 %v1987, %v1979
      %v2132 = vpack.c.b16 %v1988, %v1980
      %v2133 = vpack.c.b16 %v1989, %v1981
      %v2134 = vpack.c.b16 %v1990, %v1982
      %v2135 = vpack.c.b16 %v1991, %v1983
      %v2136 = vpack.c.b16 %v1992, %v1984
      %v2137 = vpack.c.b16 %v1993, %v1985
      %v2138 = vpack.c.b16 %v1994, %v1986
      %v2139 = vpack.c.b16 %v2003, %v1995
      %v2140 = vpack.c.b16 %v2004, %v1996
      %v2141 = vpack.c.b16 %v2005, %v1997
      %v2142 = vpack.c.b16 %v2006, %v1998
      %v2143 = vpack.c.b16 %v2007, %v1999
      %v2144 = vpack.c.b16 %v2008, %v2000
      %v2145 = vpack.c.b16 %v2009, %v2001
      %v2146 = vpack.c.b16 %v2010, %v2002
      %v2147 = vpack.c.b16 %v2019, %v2011
      %v2148 = vpack.c.b16 %v2020, %v2012
      %v2149 = vpack.c.b16 %v2021, %v2013
      %v2150 = vpack.c.b16 %v2022, %v2014
      %v2151 = vpack.c.b16 %v2023, %v2015
      %v2152 = vpack.c.b16 %v2024, %v2016
      %v2153 = vpack.c.b16 %v2025, %v2017
      %v2154 = vpack.c.b16 %v2026, %v2018
      %2283 = vmatpush.bf16.msra.mxu0 %v2083
      %2284 = vmatpush.bf16.msra.mxu0 %v2075
      %2285 = vmatpush.bf16.msra.mxu0 %v2067
      %2286 = vmatpush.bf16.msra.mxu0 %v2059
      %2287 = vmatpush.bf16.msra.mxu0 %v2051
      %2288 = vmatpush.bf16.msra.mxu0 %v2043
      %2289 = vmatpush.bf16.msra.mxu0 %v2035
      %2290 = vmatpush.bf16.msra.mxu0 %v2027
      %2291 = vmatmul.bf16.gmra.mxu0 %v1171
      %v2292 = vpop.f32.mrf.mxu0
      %v2293 = vadd.f32 0.0, %v2292
      %v2294 = vpop.f32.mrf.mxu0
      %2295 = vdwg.mxu0
      %2296 = vmatpush.bf16.msra.mxu0 %v2147
      %2297 = vmatpush.bf16.msra.mxu0 %v2139
      %2298 = vmatpush.bf16.msra.mxu0 %v2131
      %2299 = vmatpush.bf16.msra.mxu0 %v2123
      %2300 = vmatpush.bf16.msra.mxu0 %v2115
      %2301 = vmatpush.bf16.msra.mxu0 %v2107
      %2302 = vmatpush.bf16.msra.mxu0 %v2099
      %2303 = vmatpush.bf16.msra.mxu0 %v2091
      %2304 = vmatmul.bf16.gmra.mxu0 %v1514
      %v2305 = vpop.f32.mrf.mxu0
      %v2306 = vadd.f32 %v2293, %v2305
      %v2307 = vpop.f32.mrf.mxu0
      %2308 = vdwg.mxu0
      %2309 = vmatpush.bf16.msra.mxu0 %v2084
      %2310 = vmatpush.bf16.msra.mxu0 %v2076
      %2311 = vmatpush.bf16.msra.mxu0 %v2068
      %2312 = vmatpush.bf16.msra.mxu0 %v2060
      %2313 = vmatpush.bf16.msra.mxu0 %v2052
      %2314 = vmatpush.bf16.msra.mxu0 %v2044
      %2315 = vmatpush.bf16.msra.mxu0 %v2036
      %2316 = vmatpush.bf16.msra.mxu0 %v2028
      %2317 = vmatmul.bf16.gmra.mxu0 %v1171
      %v2318 = vpop.f32.mrf.mxu0
      %v2319 = vadd.f32 0.0, %v2318
      %v2320 = vpop.f32.mrf.mxu0
      %2321 = vdwg.mxu0
      %2322 = vmatpush.bf16.msra.mxu0 %v2148
      %2323 = vmatpush.bf16.msra.mxu0 %v2140
      %2324 = vmatpush.bf16.msra.mxu0 %v2132
      %2325 = vmatpush.bf16.msra.mxu0 %v2124
      %2326 = vmatpush.bf16.msra.mxu0 %v2116
      %2327 = vmatpush.bf16.msra.mxu0 %v2108
      %2328 = vmatpush.bf16.msra.mxu0 %v2100
      %2329 = vmatpush.bf16.msra.mxu0 %v2092
      %2330 = vmatmul.bf16.gmra.mxu0 %v1514
      %v2331 = vpop.f32.mrf.mxu0
      %v2332 = vadd.f32 %v2319, %v2331
      %v2333 = vpop.f32.mrf.mxu0
      %2334 = vdwg.mxu0
      %2335 = vmatpush.bf16.msra.mxu0 %v2085
      %2336 = vmatpush.bf16.msra.mxu0 %v2077
      %2337 = vmatpush.bf16.msra.mxu0 %v2069
      %2338 = vmatpush.bf16.msra.mxu0 %v2061
      %2339 = vmatpush.bf16.msra.mxu0 %v2053
      %2340 = vmatpush.bf16.msra.mxu0 %v2045
      %2341 = vmatpush.bf16.msra.mxu0 %v2037
      %2342 = vmatpush.bf16.msra.mxu0 %v2029
      %2343 = vmatmul.bf16.gmra.mxu0 %v1171
      %v2344 = vpop.f32.mrf.mxu0
      %v2345 = vadd.f32 0.0, %v2344
      %v2346 = vpop.f32.mrf.mxu0
      %2347 = vdwg.mxu0
      %2348 = vmatpush.bf16.msra.mxu0 %v2149
      %2349 = vmatpush.bf16.msra.mxu0 %v2141
      %2350 = vmatpush.bf16.msra.mxu0 %v2133
      %2351 = vmatpush.bf16.msra.mxu0 %v2125
      %2352 = vmatpush.bf16.msra.mxu0 %v2117
      %2353 = vmatpush.bf16.msra.mxu0 %v2109
      %2354 = vmatpush.bf16.msra.mxu0 %v2101
      %2355 = vmatpush.bf16.msra.mxu0 %v2093
      %2356 = vmatmul.bf16.gmra.mxu0 %v1514
      %v2357 = vpop.f32.mrf.mxu0
      %v2358 = vadd.f32 %v2345, %v2357
      %v2359 = vpop.f32.mrf.mxu0
      %2360 = vdwg.mxu0
      %2361 = vmatpush.bf16.msra.mxu0 %v2086
      %2362 = vmatpush.bf16.msra.mxu0 %v2078
      %2363 = vmatpush.bf16.msra.mxu0 %v2070
      %2364 = vmatpush.bf16.msra.mxu0 %v2062
      %2365 = vmatpush.bf16.msra.mxu0 %v2054
      %2366 = vmatpush.bf16.msra.mxu0 %v2046
      %2367 = vmatpush.bf16.msra.mxu0 %v2038
      %2368 = vmatpush.bf16.msra.mxu0 %v2030
      %2369 = vmatmul.bf16.gmra.mxu0 %v1171
      %v2370 = vpop.f32.mrf.mxu0
      %v2371 = vadd.f32 0.0, %v2370
      %v2372 = vpop.f32.mrf.mxu0
      %2373 = vdwg.mxu0
      %2374 = vmatpush.bf16.msra.mxu0 %v2150
      %2375 = vmatpush.bf16.msra.mxu0 %v2142
      %2376 = vmatpush.bf16.msra.mxu0 %v2134
      %2377 = vmatpush.bf16.msra.mxu0 %v2126
      %2378 = vmatpush.bf16.msra.mxu0 %v2118
      %2379 = vmatpush.bf16.msra.mxu0 %v2110
      %2380 = vmatpush.bf16.msra.mxu0 %v2102
      %2381 = vmatpush.bf16.msra.mxu0 %v2094
      %2382 = vmatmul.bf16.gmra.mxu0 %v1514
      %v2383 = vpop.f32.mrf.mxu0
      %v2384 = vadd.f32 %v2371, %v2383
      %v2385 = vpop.f32.mrf.mxu0
      %2386 = vdwg.mxu0
      %2387 = vmatpush.bf16.msra.mxu0 %v2087
      %2388 = vmatpush.bf16.msra.mxu0 %v2079
      %2389 = vmatpush.bf16.msra.mxu0 %v2071
      %2390 = vmatpush.bf16.msra.mxu0 %v2063
      %2391 = vmatpush.bf16.msra.mxu0 %v2055
      %2392 = vmatpush.bf16.msra.mxu0 %v2047
      %2393 = vmatpush.bf16.msra.mxu0 %v2039
      %2394 = vmatpush.bf16.msra.mxu0 %v2031
      %2395 = vmatmul.bf16.gmra.mxu0 %v1171
      %v2396 = vpop.f32.mrf.mxu0
      %v2397 = vadd.f32 0.0, %v2396
      %v2398 = vpop.f32.mrf.mxu0
      %2399 = vdwg.mxu0
      %2400 = vmatpush.bf16.msra.mxu0 %v2151
      %2401 = vmatpush.bf16.msra.mxu0 %v2143
      %2402 = vmatpush.bf16.msra.mxu0 %v2135
      %2403 = vmatpush.bf16.msra.mxu0 %v2127
      %2404 = vmatpush.bf16.msra.mxu0 %v2119
      %2405 = vmatpush.bf16.msra.mxu0 %v2111
      %2406 = vmatpush.bf16.msra.mxu0 %v2103
      %2407 = vmatpush.bf16.msra.mxu0 %v2095
      %2408 = vmatmul.bf16.gmra.mxu0 %v1514
      %v2409 = vpop.f32.mrf.mxu0
      %v2410 = vadd.f32 %v2397, %v2409
      %v2411 = vpop.f32.mrf.mxu0
      %2412 = vdwg.mxu0
      %2413 = vmatpush.bf16.msra.mxu0 %v2088
      %2414 = vmatpush.bf16.msra.mxu0 %v2080
      %2415 = vmatpush.bf16.msra.mxu0 %v2072
      %2416 = vmatpush.bf16.msra.mxu0 %v2064
      %2417 = vmatpush.bf16.msra.mxu0 %v2056
      %2418 = vmatpush.bf16.msra.mxu0 %v2048
      %2419 = vmatpush.bf16.msra.mxu0 %v2040
      %2420 = vmatpush.bf16.msra.mxu0 %v2032
      %2421 = vmatmul.bf16.gmra.mxu0 %v1171
      %v2422 = vpop.f32.mrf.mxu0
      %v2423 = vadd.f32 0.0, %v2422
      %v2424 = vpop.f32.mrf.mxu0
      %2425 = vdwg.mxu0
      %2426 = vmatpush.bf16.msra.mxu0 %v2152
      %2427 = vmatpush.bf16.msra.mxu0 %v2144
      %2428 = vmatpush.bf16.msra.mxu0 %v2136
      %2429 = vmatpush.bf16.msra.mxu0 %v2128
      %2430 = vmatpush.bf16.msra.mxu0 %v2120
      %2431 = vmatpush.bf16.msra.mxu0 %v2112
      %2432 = vmatpush.bf16.msra.mxu0 %v2104
      %2433 = vmatpush.bf16.msra.mxu0 %v2096
      %2434 = vmatmul.bf16.gmra.mxu0 %v1514
      %v2435 = vpop.f32.mrf.mxu0
      %v2436 = vadd.f32 %v2423, %v2435
      %v2437 = vpop.f32.mrf.mxu0
      %2438 = vdwg.mxu0
      %2439 = vmatpush.bf16.msra.mxu0 %v2089
      %2440 = vmatpush.bf16.msra.mxu0 %v2081
      %2441 = vmatpush.bf16.msra.mxu0 %v2073
      %2442 = vmatpush.bf16.msra.mxu0 %v2065
      %2443 = vmatpush.bf16.msra.mxu0 %v2057
      %2444 = vmatpush.bf16.msra.mxu0 %v2049
      %2445 = vmatpush.bf16.msra.mxu0 %v2041
      %2446 = vmatpush.bf16.msra.mxu0 %v2033
      %2447 = vmatmul.bf16.gmra.mxu0 %v1171
      %v2448 = vpop.f32.mrf.mxu0
      %v2449 = vadd.f32 0.0, %v2448
      %v2450 = vpop.f32.mrf.mxu0
      %2451 = vdwg.mxu0
      %2452 = vmatpush.bf16.msra.mxu0 %v2153
      %2453 = vmatpush.bf16.msra.mxu0 %v2145
      %2454 = vmatpush.bf16.msra.mxu0 %v2137
      %2455 = vmatpush.bf16.msra.mxu0 %v2129
      %2456 = vmatpush.bf16.msra.mxu0 %v2121
      %2457 = vmatpush.bf16.msra.mxu0 %v2113
      %2458 = vmatpush.bf16.msra.mxu0 %v2105
      %2459 = vmatpush.bf16.msra.mxu0 %v2097
      %2460 = vmatmul.bf16.gmra.mxu0 %v1514
      %v2461 = vpop.f32.mrf.mxu0
      %v2462 = vadd.f32 %v2449, %v2461
      %v2463 = vpop.f32.mrf.mxu0
      %2464 = vdwg.mxu0
      %2465 = vmatpush.bf16.msra.mxu0 %v2090
      %2466 = vmatpush.bf16.msra.mxu0 %v2082
      %2467 = vmatpush.bf16.msra.mxu0 %v2074
      %2468 = vmatpush.bf16.msra.mxu0 %v2066
      %2469 = vmatpush.bf16.msra.mxu0 %v2058
      %2470 = vmatpush.bf16.msra.mxu0 %v2050
      %2471 = vmatpush.bf16.msra.mxu0 %v2042
      %2472 = vmatpush.bf16.msra.mxu0 %v2034
      %2473 = vmatmul.bf16.gmra.mxu0 %v1171
      %v2474 = vpop.f32.mrf.mxu0
      %v2475 = vadd.f32 0.0, %v2474
      %v2476 = vpop.f32.mrf.mxu0
      %2477 = vdwg.mxu0
      %2478 = vmatpush.bf16.msra.mxu0 %v2154
      %2479 = vmatpush.bf16.msra.mxu0 %v2146
      %2480 = vmatpush.bf16.msra.mxu0 %v2138
      %2481 = vmatpush.bf16.msra.mxu0 %v2130
      %2482 = vmatpush.bf16.msra.mxu0 %v2122
      %2483 = vmatpush.bf16.msra.mxu0 %v2114
      %2484 = vmatpush.bf16.msra.mxu0 %v2106
      %2485 = vmatpush.bf16.msra.mxu0 %v2098
      %2486 = vmatmul.bf16.gmra.mxu0 %v1514
      %v2487 = vpop.f32.mrf.mxu0
      %v2488 = vadd.f32 %v2475, %v2487
      %v2489 = vpop.f32.mrf.mxu0
      %2490 = vdwg.mxu0
      %v2495 = vrot.slane %v2332, 7
      %v2496 = vrot.slane %v2358, 6
      %v2497 = vrot.slane %v2384, 5
      %v2498 = vsel %vm1130, %v2306, %v2495
      %v2499 = vsel %vm1132, %v2496, %v2497
      %v2500 = vsel %vm1134, %v2498, %v2499
      %v2502 = vadd.f32 %v1513, %v2500
      %v2503 = vxor.u32 %v2502, 2147483648
      %v2504 = vmul.f32 %v2503, 1.442695
      %v2505 = vpow.pop %v2504
      %v2506 = vadd.f32 %v2505, 1.0
      %v2507 = vrcp.pop %v2506
      %v2508 = vmul.f32 %v2506, %v2507
      %v2509 = vsub.f32 1.0, %v2508
      %v2510 = vmul.f32 %v2507, %v2509
      %v2511 = vadd.f32 %v2507, %v2510
      %vm2512 = vweird.f32 %v2506
      %vm2513 = vweird.f32 %v2507
      %vm2514 = vmor %vm2512, %vm2513
      %v2515 = vsel %vm2514, %v2507, %v2511
      %v2516 = vand.u32 2147483647, %v2506
      %vm2517 = vcmp.eq.f32.partialorder %v2516, 8.507059e+37
      %v2518 = vand.u32 %v2506, 2147483648
      %v2519 = vor.u32 1.1754944e-38, %v2518
      %v2520 = vsel %vm2517, %v2519, %v2515
      %v2521 = vmul.f32 1.0, %v2520
      %v2523 = vrot.slane %v2502, 3
      %v2525 = vtanh.pop %v2523
      %v2527 = vrot.slane %v2521, 1
      %v2529 = vmul.f32 %v2527, %v1166
      %v2530 = vmul.f32 %v2521, %v2525
      %v2531 = vadd.f32 %v2529, %v2530
      %v2532 = vtanh.pop %v2531
      %v2533 = vrot.slane %v2521, 2
      %v2535 = vmul.f32 %v2533, %v2532
      %v2536 = vpack.c.bf16 %v2535, %v2535
      %v2537 = vld [vmem:[#allocation11] sm:$0xff]
      %v2538 = vld [vmem:[#allocation11 + $0x8] sm:$0xff]
      %v2539 = vld [vmem:[#allocation11 + $0x10] sm:$0xff]
      %v2540 = vld [vmem:[#allocation11 + $0x18] sm:$0xff]
      %v2541 = vld [vmem:[#allocation11 + $0x20] sm:$0xff]
      %v2542 = vld [vmem:[#allocation11 + $0x28] sm:$0xff]
      %v2543 = vld [vmem:[#allocation11 + $0x30] sm:$0xff]
      %v2544 = vld [vmem:[#allocation11 + $0x38] sm:$0xff]
      %v2545 = vld [vmem:[#allocation11 + $0x40] sm:$0xff]
      %v2546 = vld [vmem:[#allocation11 + $0x48] sm:$0xff]
      %v2547 = vld [vmem:[#allocation11 + $0x50] sm:$0xff]
      %v2548 = vld [vmem:[#allocation11 + $0x58] sm:$0xff]
      %v2549 = vld [vmem:[#allocation11 + $0x60] sm:$0xff]
      %v2550 = vld [vmem:[#allocation11 + $0x68] sm:$0xff]
      %v2551 = vld [vmem:[#allocation11 + $0x70] sm:$0xff]
      %v2552 = vld [vmem:[#allocation11 + $0x78] sm:$0xff]
      %v2553 = vld [vmem:[#allocation11 + $0x80] sm:$0xff]
      %v2554 = vld [vmem:[#allocation11 + $0x88] sm:$0xff]
      %v2555 = vld [vmem:[#allocation11 + $0x90] sm:$0xff]
      %v2556 = vld [vmem:[#allocation11 + $0x98] sm:$0xff]
      %v2557 = vld [vmem:[#allocation11 + $0xa0] sm:$0xff]
      %v2558 = vld [vmem:[#allocation11 + $0xa8] sm:$0xff]
      %v2559 = vld [vmem:[#allocation11 + $0xb0] sm:$0xff]
      %v2560 = vld [vmem:[#allocation11 + $0xb8] sm:$0xff]
      %v2561 = vld [vmem:[#allocation11 + $0xc0] sm:$0xff]
      %v2562 = vld [vmem:[#allocation11 + $0xc8] sm:$0xff]
      %v2563 = vld [vmem:[#allocation11 + $0xd0] sm:$0xff]
      %v2564 = vld [vmem:[#allocation11 + $0xd8] sm:$0xff]
      %v2565 = vld [vmem:[#allocation11 + $0xe0] sm:$0xff]
      %v2566 = vld [vmem:[#allocation11 + $0xe8] sm:$0xff]
      %v2567 = vld [vmem:[#allocation11 + $0xf0] sm:$0xff]
      %v2568 = vld [vmem:[#allocation11 + $0xf8] sm:$0xff]
      %v2601 = vunpack.c.l.b16 %v2537
      %v2602 = vunpack.c.h.b16 %v2537
      %v2603 = vunpack.c.l.b16 %v2538
      %v2604 = vunpack.c.h.b16 %v2538
      %v2605 = vunpack.c.l.b16 %v2539
      %v2606 = vunpack.c.h.b16 %v2539
      %v2607 = vunpack.c.l.b16 %v2540
      %v2608 = vunpack.c.h.b16 %v2540
      %v2609 = vunpack.c.l.b16 %v2541
      %v2610 = vunpack.c.h.b16 %v2541
      %v2611 = vunpack.c.l.b16 %v2542
      %v2612 = vunpack.c.h.b16 %v2542
      %v2613 = vunpack.c.l.b16 %v2543
      %v2614 = vunpack.c.h.b16 %v2543
      %v2615 = vunpack.c.l.b16 %v2544
      %v2616 = vunpack.c.h.b16 %v2544
      %v2617 = vunpack.c.l.b16 %v2545
      %v2618 = vunpack.c.h.b16 %v2545
      %v2619 = vunpack.c.l.b16 %v2546
      %v2620 = vunpack.c.h.b16 %v2546
      %v2621 = vunpack.c.l.b16 %v2547
      %v2622 = vunpack.c.h.b16 %v2547
      %v2623 = vunpack.c.l.b16 %v2548
      %v2624 = vunpack.c.h.b16 %v2548
      %v2625 = vunpack.c.l.b16 %v2549
      %v2626 = vunpack.c.h.b16 %v2549
      %v2627 = vunpack.c.l.b16 %v2550
      %v2628 = vunpack.c.h.b16 %v2550
      %v2629 = vunpack.c.l.b16 %v2551
      %v2630 = vunpack.c.h.b16 %v2551
      %v2631 = vunpack.c.l.b16 %v2552
      %v2632 = vunpack.c.h.b16 %v2552
      %v2633 = vunpack.c.l.b16 %v2553
      %v2634 = vunpack.c.h.b16 %v2553
      %v2635 = vunpack.c.l.b16 %v2554
      %v2636 = vunpack.c.h.b16 %v2554
      %v2637 = vunpack.c.l.b16 %v2555
      %v2638 = vunpack.c.h.b16 %v2555
      %v2639 = vunpack.c.l.b16 %v2556
      %v2640 = vunpack.c.h.b16 %v2556
      %v2641 = vunpack.c.l.b16 %v2557
      %v2642 = vunpack.c.h.b16 %v2557
      %v2643 = vunpack.c.l.b16 %v2558
      %v2644 = vunpack.c.h.b16 %v2558
      %v2645 = vunpack.c.l.b16 %v2559
      %v2646 = vunpack.c.h.b16 %v2559
      %v2647 = vunpack.c.l.b16 %v2560
      %v2648 = vunpack.c.h.b16 %v2560
      %v2649 = vunpack.c.l.b16 %v2561
      %v2650 = vunpack.c.h.b16 %v2561
      %v2651 = vunpack.c.l.b16 %v2562
      %v2652 = vunpack.c.h.b16 %v2562
      %v2653 = vunpack.c.l.b16 %v2563
      %v2654 = vunpack.c.h.b16 %v2563
      %v2655 = vunpack.c.l.b16 %v2564
      %v2656 = vunpack.c.h.b16 %v2564
      %v2657 = vunpack.c.l.b16 %v2565
      %v2658 = vunpack.c.h.b16 %v2565
      %v2659 = vunpack.c.l.b16 %v2566
      %v2660 = vunpack.c.h.b16 %v2566
      %v2661 = vunpack.c.l.b16 %v2567
      %v2662 = vunpack.c.h.b16 %v2567
      %v2663 = vunpack.c.l.b16 %v2568
      %v2664 = vunpack.c.h.b16 %v2568
      %v2665 = vpack.c.b16 %v2605, %v2601
      %v2666 = vpack.c.b16 %v2606, %v2602
      %v2667 = vpack.c.b16 %v2607, %v2603
      %v2668 = vpack.c.b16 %v2608, %v2604
      %v2669 = vpack.c.b16 %v2613, %v2609
      %v2670 = vpack.c.b16 %v2614, %v2610
      %v2671 = vpack.c.b16 %v2615, %v2611
      %v2672 = vpack.c.b16 %v2616, %v2612
      %v2673 = vpack.c.b16 %v2621, %v2617
      %v2674 = vpack.c.b16 %v2622, %v2618
      %v2675 = vpack.c.b16 %v2623, %v2619
      %v2676 = vpack.c.b16 %v2624, %v2620
      %v2677 = vpack.c.b16 %v2629, %v2625
      %v2678 = vpack.c.b16 %v2630, %v2626
      %v2679 = vpack.c.b16 %v2631, %v2627
      %v2680 = vpack.c.b16 %v2632, %v2628
      %v2681 = vpack.c.b16 %v2637, %v2633
      %v2682 = vpack.c.b16 %v2638, %v2634
      %v2683 = vpack.c.b16 %v2639, %v2635
      %v2684 = vpack.c.b16 %v2640, %v2636
      %v2685 = vpack.c.b16 %v2645, %v2641
      %v2686 = vpack.c.b16 %v2646, %v2642
      %v2687 = vpack.c.b16 %v2647, %v2643
      %v2688 = vpack.c.b16 %v2648, %v2644
      %v2689 = vpack.c.b16 %v2653, %v2649
      %v2690 = vpack.c.b16 %v2654, %v2650
      %v2691 = vpack.c.b16 %v2655, %v2651
      %v2692 = vpack.c.b16 %v2656, %v2652
      %v2693 = vpack.c.b16 %v2661, %v2657
      %v2694 = vpack.c.b16 %v2662, %v2658
      %v2695 = vpack.c.b16 %v2663, %v2659
      %v2696 = vpack.c.b16 %v2664, %v2660
      %2729 = vmatpush.bf16.msra.mxu0 %v2693
      %2730 = vmatpush.bf16.msra.mxu0 %v2689
      %2731 = vmatpush.bf16.msra.mxu0 %v2685
      %2732 = vmatpush.bf16.msra.mxu0 %v2681
      %2733 = vmatpush.bf16.msra.mxu0 %v2677
      %2734 = vmatpush.bf16.msra.mxu0 %v2673
      %2735 = vmatpush.bf16.msra.mxu0 %v2669
      %2736 = vmatpush.bf16.msra.mxu0 %v2665
      %2737 = vmatmul.bf16.gmra.mxu0 %v2536
      %v2738 = vpop.f32.mrf.mxu0
      %v2739 = vadd.f32 %v2410, %v2738
      %v2740 = vpop.f32.mrf.mxu0
      %2741 = vdwg.mxu0
      %2742 = vmatpush.bf16.msra.mxu0 %v2694
      %2743 = vmatpush.bf16.msra.mxu0 %v2690
      %2744 = vmatpush.bf16.msra.mxu0 %v2686
      %2745 = vmatpush.bf16.msra.mxu0 %v2682
      %2746 = vmatpush.bf16.msra.mxu0 %v2678
      %2747 = vmatpush.bf16.msra.mxu0 %v2674
      %2748 = vmatpush.bf16.msra.mxu0 %v2670
      %2749 = vmatpush.bf16.msra.mxu0 %v2666
      %2750 = vmatmul.bf16.gmra.mxu0 %v2536
      %v2751 = vpop.f32.mrf.mxu0
      %v2752 = vadd.f32 %v2436, %v2751
      %v2753 = vpop.f32.mrf.mxu0
      %2754 = vdwg.mxu0
      %2755 = vmatpush.bf16.msra.mxu0 %v2695
      %2756 = vmatpush.bf16.msra.mxu0 %v2691
      %2757 = vmatpush.bf16.msra.mxu0 %v2687
      %2758 = vmatpush.bf16.msra.mxu0 %v2683
      %2759 = vmatpush.bf16.msra.mxu0 %v2679
      %2760 = vmatpush.bf16.msra.mxu0 %v2675
      %2761 = vmatpush.bf16.msra.mxu0 %v2671
      %2762 = vmatpush.bf16.msra.mxu0 %v2667
      %2763 = vmatmul.bf16.gmra.mxu0 %v2536
      %v2764 = vpop.f32.mrf.mxu0
      %v2765 = vadd.f32 %v2462, %v2764
      %v2766 = vpop.f32.mrf.mxu0
      %2767 = vdwg.mxu0
      %2768 = vmatpush.bf16.msra.mxu0 %v2696
      %2769 = vmatpush.bf16.msra.mxu0 %v2692
      %2770 = vmatpush.bf16.msra.mxu0 %v2688
      %2771 = vmatpush.bf16.msra.mxu0 %v2684
      %2772 = vmatpush.bf16.msra.mxu0 %v2680
      %2773 = vmatpush.bf16.msra.mxu0 %v2676
      %2774 = vmatpush.bf16.msra.mxu0 %v2672
      %2775 = vmatpush.bf16.msra.mxu0 %v2668
      %2776 = vmatmul.bf16.gmra.mxu0 %v2536
      %v2777 = vpop.f32.mrf.mxu0
      %v2778 = vadd.f32 %v2488, %v2777
      %v2779 = vpop.f32.mrf.mxu0
      %2780 = vdwg.mxu0
      %v2781 = vld [vmem:[%s8] sm:$0xf]
      %v2783 = vperm.slane %v2781, 0
      %v2784 = vperm.slane %v2781, 1
      %v2785 = vperm.slane %v2781, 2
      %v2786 = vperm.slane %v2781, 3
      %v2791 = vadd.f32 %v2739, %v2783
      %v2792 = vadd.f32 %v2752, %v2784
      %v2793 = vadd.f32 %v2765, %v2785
      %v2794 = vadd.f32 %v2778, %v2786
      %v2795 = vxor.u32 %v2791, 2147483648
      %v2796 = vxor.u32 %v2792, 2147483648
      %v2797 = vxor.u32 %v2793, 2147483648
      %v2798 = vmul.f32 %v2795, 1.442695
      %v2799 = vpow.pop %v2798
      %v2800 = vmul.f32 %v2796, 1.442695
      %v2801 = vpow.pop %v2800
      %v2802 = vmul.f32 %v2797, 1.442695
      %v2803 = vpow.pop %v2802
      %v2804 = vadd.f32 %v2799, 1.0
      %v2805 = vadd.f32 %v2801, 1.0
      %v2806 = vadd.f32 %v2803, 1.0
      %v2807 = vrcp.pop %v2804
      %v2808 = vmul.f32 %v2804, %v2807
      %v2809 = vsub.f32 1.0, %v2808
      %v2810 = vmul.f32 %v2807, %v2809
      %v2811 = vadd.f32 %v2807, %v2810
      %vm2812 = vweird.f32 %v2804
      %vm2813 = vweird.f32 %v2807
      %vm2814 = vmor %vm2812, %vm2813
      %v2815 = vsel %vm2814, %v2807, %v2811
      %v2816 = vand.u32 2147483647, %v2804
      %vm2817 = vcmp.eq.f32.partialorder %v2816, 8.507059e+37
      %v2818 = vand.u32 %v2804, 2147483648
      %v2819 = vor.u32 1.1754944e-38, %v2818
      %v2820 = vsel %vm2817, %v2819, %v2815
      %v2821 = vmul.f32 1.0, %v2820
      %v2822 = vrcp.pop %v2805
      %v2823 = vmul.f32 %v2805, %v2822
      %v2824 = vsub.f32 1.0, %v2823
      %v2825 = vmul.f32 %v2822, %v2824
      %v2826 = vadd.f32 %v2822, %v2825
      %vm2827 = vweird.f32 %v2805
      %vm2828 = vweird.f32 %v2822
      %vm2829 = vmor %vm2827, %vm2828
      %v2830 = vsel %vm2829, %v2822, %v2826
      %v2831 = vand.u32 2147483647, %v2805
      %vm2832 = vcmp.eq.f32.partialorder %v2831, 8.507059e+37
      %v2833 = vand.u32 %v2805, 2147483648
      %v2834 = vor.u32 1.1754944e-38, %v2833
      %v2835 = vsel %vm2832, %v2834, %v2830
      %v2836 = vmul.f32 1.0, %v2835
      %v2837 = vrcp.pop %v2806
      %v2838 = vmul.f32 %v2806, %v2837
      %v2839 = vsub.f32 1.0, %v2838
      %v2840 = vmul.f32 %v2837, %v2839
      %v2841 = vadd.f32 %v2837, %v2840
      %vm2842 = vweird.f32 %v2806
      %vm2843 = vweird.f32 %v2837
      %vm2844 = vmor %vm2842, %vm2843
      %v2845 = vsel %vm2844, %v2837, %v2841
      %v2846 = vand.u32 2147483647, %v2806
      %vm2847 = vcmp.eq.f32.partialorder %v2846, 8.507059e+37
      %v2848 = vand.u32 %v2806, 2147483648
      %v2849 = vor.u32 1.1754944e-38, %v2848
      %v2850 = vsel %vm2847, %v2849, %v2845
      %v2851 = vmul.f32 1.0, %v2850
      %v2852 = vtanh.pop %v2794
      %v2853 = vmul.f32 %v2836, %v1490
      %v2854 = vmul.f32 %v2821, %v2852
      %v2855 = vadd.f32 %v2853, %v2854
      %v2856 = vtanh.pop %v2855
      %v2857 = vmul.f32 %v2851, %v2856
      %v2858 = vld [vmem:[%s9] sm:$0x1]
      %v2859 = vmul.f32 %v2857, %v2858
      %v2860 = vsel %vm1130, %v2859, 0.0
      %2861 = vadd.xlane.f32.xlu0 %v2860
      %v2862 = vpop.xlane.xlu0 %2861
      %s2863 = sld [smem:[#allocation2]]
      %v2864 = vstv %s2863
      %v2865 = vadd.f32 %v2862, %v2864
      %s2866 = vtos %v2865
      %s2867 = scalar_lea.smem [#allocation14], %s1504
      %2868 = sst [smem:[%s2867]] %s2866
      %s2869 = sadd.s32 %s135, 2
      %s2870 = sshra.s32 %s2869, 3
      %s2871 = sand.u32 %s2869, 7
      %s2872 = sshra.s32 %s2869, 3
      %s2873 = sand.u32 %s2869, 7
      %s2874 = smul.u32 %s2870, 4
      %s2875 = smul.u32 %s2874, 8
      %s2876 = sadd.s32 %s2875, %s2873
      %s2877 = scalar_lea.vmem [#allocation3], %s2876
      %v2878 = vld [vmem:[%s2877] ss:$8 sm:$0xf]
      %v2879 = vpack.c.bf16 %v2857, %v2857
      %v2880 = vld [vmem:[#allocation12] sm:$0xff]
      %v2881 = vld [vmem:[#allocation12 + $0x8] sm:$0xff]
      %v2882 = vld [vmem:[#allocation12 + $0x10] sm:$0xff]
      %v2883 = vld [vmem:[#allocation12 + $0x18] sm:$0xff]
      %v2884 = vld [vmem:[#allocation12 + $0x20] sm:$0xff]
      %v2885 = vld [vmem:[#allocation12 + $0x28] sm:$0xff]
      %v2886 = vld [vmem:[#allocation12 + $0x30] sm:$0xff]
      %v2887 = vld [vmem:[#allocation12 + $0x38] sm:$0xff]
      %v2888 = vld [vmem:[#allocation12 + $0x40] sm:$0xff]
      %v2889 = vld [vmem:[#allocation12 + $0x48] sm:$0xff]
      %v2890 = vld [vmem:[#allocation12 + $0x50] sm:$0xff]
      %v2891 = vld [vmem:[#allocation12 + $0x58] sm:$0xff]
      %v2892 = vld [vmem:[#allocation12 + $0x60] sm:$0xff]
      %v2893 = vld [vmem:[#allocation12 + $0x68] sm:$0xff]
      %v2894 = vld [vmem:[#allocation12 + $0x70] sm:$0xff]
      %v2895 = vld [vmem:[#allocation12 + $0x78] sm:$0xff]
      %v2896 = vld [vmem:[#allocation12 + $0x80] sm:$0xff]
      %v2897 = vld [vmem:[#allocation12 + $0x88] sm:$0xff]
      %v2898 = vld [vmem:[#allocation12 + $0x90] sm:$0xff]
      %v2899 = vld [vmem:[#allocation12 + $0x98] sm:$0xff]
      %v2900 = vld [vmem:[#allocation12 + $0xa0] sm:$0xff]
      %v2901 = vld [vmem:[#allocation12 + $0xa8] sm:$0xff]
      %v2902 = vld [vmem:[#allocation12 + $0xb0] sm:$0xff]
      %v2903 = vld [vmem:[#allocation12 + $0xb8] sm:$0xff]
      %v2904 = vld [vmem:[#allocation12 + $0xc0] sm:$0xff]
      %v2905 = vld [vmem:[#allocation12 + $0xc8] sm:$0xff]
      %v2906 = vld [vmem:[#allocation12 + $0xd0] sm:$0xff]
      %v2907 = vld [vmem:[#allocation12 + $0xd8] sm:$0xff]
      %v2908 = vld [vmem:[#allocation12 + $0xe0] sm:$0xff]
      %v2909 = vld [vmem:[#allocation12 + $0xe8] sm:$0xff]
      %v2910 = vld [vmem:[#allocation12 + $0xf0] sm:$0xff]
      %v2911 = vld [vmem:[#allocation12 + $0xf8] sm:$0xff]
      %v2912 = vld [vmem:[#allocation12 + $0x100] sm:$0xff]
      %v2913 = vld [vmem:[#allocation12 + $0x108] sm:$0xff]
      %v2914 = vld [vmem:[#allocation12 + $0x110] sm:$0xff]
      %v2915 = vld [vmem:[#allocation12 + $0x118] sm:$0xff]
      %v2916 = vld [vmem:[#allocation12 + $0x120] sm:$0xff]
      %v2917 = vld [vmem:[#allocation12 + $0x128] sm:$0xff]
      %v2918 = vld [vmem:[#allocation12 + $0x130] sm:$0xff]
      %v2919 = vld [vmem:[#allocation12 + $0x138] sm:$0xff]
      %v2920 = vld [vmem:[#allocation12 + $0x140] sm:$0xff]
      %v2921 = vld [vmem:[#allocation12 + $0x148] sm:$0xff]
      %v2922 = vld [vmem:[#allocation12 + $0x150] sm:$0xff]
      %v2923 = vld [vmem:[#allocation12 + $0x158] sm:$0xff]
      %v2924 = vld [vmem:[#allocation12 + $0x160] sm:$0xff]
      %v2925 = vld [vmem:[#allocation12 + $0x168] sm:$0xff]
      %v2926 = vld [vmem:[#allocation12 + $0x170] sm:$0xff]
      %v2927 = vld [vmem:[#allocation12 + $0x178] sm:$0xff]
      %v2928 = vld [vmem:[#allocation12 + $0x180] sm:$0xff]
      %v2929 = vld [vmem:[#allocation12 + $0x188] sm:$0xff]
      %v2930 = vld [vmem:[#allocation12 + $0x190] sm:$0xff]
      %v2931 = vld [vmem:[#allocation12 + $0x198] sm:$0xff]
      %v2932 = vld [vmem:[#allocation12 + $0x1a0] sm:$0xff]
      %v2933 = vld [vmem:[#allocation12 + $0x1a8] sm:$0xff]
      %v2934 = vld [vmem:[#allocation12 + $0x1b0] sm:$0xff]
      %v2935 = vld [vmem:[#allocation12 + $0x1b8] sm:$0xff]
      %v2936 = vld [vmem:[#allocation12 + $0x1c0] sm:$0xff]
      %v2937 = vld [vmem:[#allocation12 + $0x1c8] sm:$0xff]
      %v2938 = vld [vmem:[#allocation12 + $0x1d0] sm:$0xff]
      %v2939 = vld [vmem:[#allocation12 + $0x1d8] sm:$0xff]
      %v2940 = vld [vmem:[#allocation12 + $0x1e0] sm:$0xff]
      %v2941 = vld [vmem:[#allocation12 + $0x1e8] sm:$0xff]
      %v2942 = vld [vmem:[#allocation12 + $0x1f0] sm:$0xff]
      %v2943 = vld [vmem:[#allocation12 + $0x1f8] sm:$0xff]
      %v2944 = vld [vmem:[#allocation12 + $0x200] sm:$0xff]
      %v2945 = vld [vmem:[#allocation12 + $0x208] sm:$0xff]
      %v2946 = vld [vmem:[#allocation12 + $0x210] sm:$0xff]
      %v2947 = vld [vmem:[#allocation12 + $0x218] sm:$0xff]
      %v2948 = vld [vmem:[#allocation12 + $0x220] sm:$0xff]
      %v2949 = vld [vmem:[#allocation12 + $0x228] sm:$0xff]
      %v2950 = vld [vmem:[#allocation12 + $0x230] sm:$0xff]
      %v2951 = vld [vmem:[#allocation12 + $0x238] sm:$0xff]
      %v2952 = vld [vmem:[#allocation12 + $0x240] sm:$0xff]
      %v2953 = vld [vmem:[#allocation12 + $0x248] sm:$0xff]
      %v2954 = vld [vmem:[#allocation12 + $0x250] sm:$0xff]
      %v2955 = vld [vmem:[#allocation12 + $0x258] sm:$0xff]
      %v2956 = vld [vmem:[#allocation12 + $0x260] sm:$0xff]
      %v2957 = vld [vmem:[#allocation12 + $0x268] sm:$0xff]
      %v2958 = vld [vmem:[#allocation12 + $0x270] sm:$0xff]
      %v2959 = vld [vmem:[#allocation12 + $0x278] sm:$0xff]
      %v2960 = vld [vmem:[#allocation12 + $0x280] sm:$0xff]
      %v2961 = vld [vmem:[#allocation12 + $0x288] sm:$0xff]
      %v2962 = vld [vmem:[#allocation12 + $0x290] sm:$0xff]
      %v2963 = vld [vmem:[#allocation12 + $0x298] sm:$0xff]
      %v2964 = vld [vmem:[#allocation12 + $0x2a0] sm:$0xff]
      %v2965 = vld [vmem:[#allocation12 + $0x2a8] sm:$0xff]
      %v2966 = vld [vmem:[#allocation12 + $0x2b0] sm:$0xff]
      %v2967 = vld [vmem:[#allocation12 + $0x2b8] sm:$0xff]
      %v2968 = vld [vmem:[#allocation12 + $0x2c0] sm:$0xff]
      %v2969 = vld [vmem:[#allocation12 + $0x2c8] sm:$0xff]
      %v2970 = vld [vmem:[#allocation12 + $0x2d0] sm:$0xff]
      %v2971 = vld [vmem:[#allocation12 + $0x2d8] sm:$0xff]
      %v2972 = vld [vmem:[#allocation12 + $0x2e0] sm:$0xff]
      %v2973 = vld [vmem:[#allocation12 + $0x2e8] sm:$0xff]
      %v2974 = vld [vmem:[#allocation12 + $0x2f0] sm:$0xff]
      %v2975 = vld [vmem:[#allocation12 + $0x2f8] sm:$0xff]
      %v2976 = vld [vmem:[#allocation12 + $0x300] sm:$0xff]
      %v2977 = vld [vmem:[#allocation12 + $0x308] sm:$0xff]
      %v2978 = vld [vmem:[#allocation12 + $0x310] sm:$0xff]
      %v2979 = vld [vmem:[#allocation12 + $0x318] sm:$0xff]
      %v2980 = vld [vmem:[#allocation12 + $0x320] sm:$0xff]
      %v2981 = vld [vmem:[#allocation12 + $0x328] sm:$0xff]
      %v2982 = vld [vmem:[#allocation12 + $0x330] sm:$0xff]
      %v2983 = vld [vmem:[#allocation12 + $0x338] sm:$0xff]
      %v2984 = vld [vmem:[#allocation12 + $0x340] sm:$0xff]
      %v2985 = vld [vmem:[#allocation12 + $0x348] sm:$0xff]
      %v2986 = vld [vmem:[#allocation12 + $0x350] sm:$0xff]
      %v2987 = vld [vmem:[#allocation12 + $0x358] sm:$0xff]
      %v2988 = vld [vmem:[#allocation12 + $0x360] sm:$0xff]
      %v2989 = vld [vmem:[#allocation12 + $0x368] sm:$0xff]
      %v2990 = vld [vmem:[#allocation12 + $0x370] sm:$0xff]
      %v2991 = vld [vmem:[#allocation12 + $0x378] sm:$0xff]
      %v2992 = vld [vmem:[#allocation12 + $0x380] sm:$0xff]
      %v2993 = vld [vmem:[#allocation12 + $0x388] sm:$0xff]
      %v2994 = vld [vmem:[#allocation12 + $0x390] sm:$0xff]
      %v2995 = vld [vmem:[#allocation12 + $0x398] sm:$0xff]
      %v2996 = vld [vmem:[#allocation12 + $0x3a0] sm:$0xff]
      %v2997 = vld [vmem:[#allocation12 + $0x3a8] sm:$0xff]
      %v2998 = vld [vmem:[#allocation12 + $0x3b0] sm:$0xff]
      %v2999 = vld [vmem:[#allocation12 + $0x3b8] sm:$0xff]
      %v3000 = vld [vmem:[#allocation12 + $0x3c0] sm:$0xff]
      %v3001 = vld [vmem:[#allocation12 + $0x3c8] sm:$0xff]
      %v3002 = vld [vmem:[#allocation12 + $0x3d0] sm:$0xff]
      %v3003 = vld [vmem:[#allocation12 + $0x3d8] sm:$0xff]
      %v3004 = vld [vmem:[#allocation12 + $0x3e0] sm:$0xff]
      %v3005 = vld [vmem:[#allocation12 + $0x3e8] sm:$0xff]
      %v3006 = vld [vmem:[#allocation12 + $0x3f0] sm:$0xff]
      %v3007 = vld [vmem:[#allocation12 + $0x3f8] sm:$0xff]
      %v3136 = vunpack.c.l.b16 %v2880
      %v3137 = vunpack.c.h.b16 %v2880
      %v3138 = vunpack.c.l.b16 %v2881
      %v3139 = vunpack.c.h.b16 %v2881
      %v3140 = vunpack.c.l.b16 %v2882
      %v3141 = vunpack.c.h.b16 %v2882
      %v3142 = vunpack.c.l.b16 %v2883
      %v3143 = vunpack.c.h.b16 %v2883
      %v3144 = vunpack.c.l.b16 %v2884
      %v3145 = vunpack.c.h.b16 %v2884
      %v3146 = vunpack.c.l.b16 %v2885
      %v3147 = vunpack.c.h.b16 %v2885
      %v3148 = vunpack.c.l.b16 %v2886
      %v3149 = vunpack.c.h.b16 %v2886
      %v3150 = vunpack.c.l.b16 %v2887
      %v3151 = vunpack.c.h.b16 %v2887
      %v3152 = vunpack.c.l.b16 %v2888
      %v3153 = vunpack.c.h.b16 %v2888
      %v3154 = vunpack.c.l.b16 %v2889
      %v3155 = vunpack.c.h.b16 %v2889
      %v3156 = vunpack.c.l.b16 %v2890
      %v3157 = vunpack.c.h.b16 %v2890
      %v3158 = vunpack.c.l.b16 %v2891
      %v3159 = vunpack.c.h.b16 %v2891
      %v3160 = vunpack.c.l.b16 %v2892
      %v3161 = vunpack.c.h.b16 %v2892
      %v3162 = vunpack.c.l.b16 %v2893
      %v3163 = vunpack.c.h.b16 %v2893
      %v3164 = vunpack.c.l.b16 %v2894
      %v3165 = vunpack.c.h.b16 %v2894
      %v3166 = vunpack.c.l.b16 %v2895
      %v3167 = vunpack.c.h.b16 %v2895
      %v3168 = vunpack.c.l.b16 %v2896
      %v3169 = vunpack.c.h.b16 %v2896
      %v3170 = vunpack.c.l.b16 %v2897
      %v3171 = vunpack.c.h.b16 %v2897
      %v3172 = vunpack.c.l.b16 %v2898
      %v3173 = vunpack.c.h.b16 %v2898
      %v3174 = vunpack.c.l.b16 %v2899
      %v3175 = vunpack.c.h.b16 %v2899
      %v3176 = vunpack.c.l.b16 %v2900
      %v3177 = vunpack.c.h.b16 %v2900
      %v3178 = vunpack.c.l.b16 %v2901
      %v3179 = vunpack.c.h.b16 %v2901
      %v3180 = vunpack.c.l.b16 %v2902
      %v3181 = vunpack.c.h.b16 %v2902
      %v3182 = vunpack.c.l.b16 %v2903
      %v3183 = vunpack.c.h.b16 %v2903
      %v3184 = vunpack.c.l.b16 %v2904
      %v3185 = vunpack.c.h.b16 %v2904
      %v3186 = vunpack.c.l.b16 %v2905
      %v3187 = vunpack.c.h.b16 %v2905
      %v3188 = vunpack.c.l.b16 %v2906
      %v3189 = vunpack.c.h.b16 %v2906
      %v3190 = vunpack.c.l.b16 %v2907
      %v3191 = vunpack.c.h.b16 %v2907
      %v3192 = vunpack.c.l.b16 %v2908
      %v3193 = vunpack.c.h.b16 %v2908
      %v3194 = vunpack.c.l.b16 %v2909
      %v3195 = vunpack.c.h.b16 %v2909
      %v3196 = vunpack.c.l.b16 %v2910
      %v3197 = vunpack.c.h.b16 %v2910
      %v3198 = vunpack.c.l.b16 %v2911
      %v3199 = vunpack.c.h.b16 %v2911
      %v3200 = vunpack.c.l.b16 %v2912
      %v3201 = vunpack.c.h.b16 %v2912
      %v3202 = vunpack.c.l.b16 %v2913
      %v3203 = vunpack.c.h.b16 %v2913
      %v3204 = vunpack.c.l.b16 %v2914
      %v3205 = vunpack.c.h.b16 %v2914
      %v3206 = vunpack.c.l.b16 %v2915
      %v3207 = vunpack.c.h.b16 %v2915
      %v3208 = vunpack.c.l.b16 %v2916
      %v3209 = vunpack.c.h.b16 %v2916
      %v3210 = vunpack.c.l.b16 %v2917
      %v3211 = vunpack.c.h.b16 %v2917
      %v3212 = vunpack.c.l.b16 %v2918
      %v3213 = vunpack.c.h.b16 %v2918
      %v3214 = vunpack.c.l.b16 %v2919
      %v3215 = vunpack.c.h.b16 %v2919
      %v3216 = vunpack.c.l.b16 %v2920
      %v3217 = vunpack.c.h.b16 %v2920
      %v3218 = vunpack.c.l.b16 %v2921
      %v3219 = vunpack.c.h.b16 %v2921
      %v3220 = vunpack.c.l.b16 %v2922
      %v3221 = vunpack.c.h.b16 %v2922
      %v3222 = vunpack.c.l.b16 %v2923
      %v3223 = vunpack.c.h.b16 %v2923
      %v3224 = vunpack.c.l.b16 %v2924
      %v3225 = vunpack.c.h.b16 %v2924
      %v3226 = vunpack.c.l.b16 %v2925
      %v3227 = vunpack.c.h.b16 %v2925
      %v3228 = vunpack.c.l.b16 %v2926
      %v3229 = vunpack.c.h.b16 %v2926
      %v3230 = vunpack.c.l.b16 %v2927
      %v3231 = vunpack.c.h.b16 %v2927
      %v3232 = vunpack.c.l.b16 %v2928
      %v3233 = vunpack.c.h.b16 %v2928
      %v3234 = vunpack.c.l.b16 %v2929
      %v3235 = vunpack.c.h.b16 %v2929
      %v3236 = vunpack.c.l.b16 %v2930
      %v3237 = vunpack.c.h.b16 %v2930
      %v3238 = vunpack.c.l.b16 %v2931
      %v3239 = vunpack.c.h.b16 %v2931
      %v3240 = vunpack.c.l.b16 %v2932
      %v3241 = vunpack.c.h.b16 %v2932
      %v3242 = vunpack.c.l.b16 %v2933
      %v3243 = vunpack.c.h.b16 %v2933
      %v3244 = vunpack.c.l.b16 %v2934
      %v3245 = vunpack.c.h.b16 %v2934
      %v3246 = vunpack.c.l.b16 %v2935
      %v3247 = vunpack.c.h.b16 %v2935
      %v3248 = vunpack.c.l.b16 %v2936
      %v3249 = vunpack.c.h.b16 %v2936
      %v3250 = vunpack.c.l.b16 %v2937
      %v3251 = vunpack.c.h.b16 %v2937
      %v3252 = vunpack.c.l.b16 %v2938
      %v3253 = vunpack.c.h.b16 %v2938
      %v3254 = vunpack.c.l.b16 %v2939
      %v3255 = vunpack.c.h.b16 %v2939
      %v3256 = vunpack.c.l.b16 %v2940
      %v3257 = vunpack.c.h.b16 %v2940
      %v3258 = vunpack.c.l.b16 %v2941
      %v3259 = vunpack.c.h.b16 %v2941
      %v3260 = vunpack.c.l.b16 %v2942
      %v3261 = vunpack.c.h.b16 %v2942
      %v3262 = vunpack.c.l.b16 %v2943
      %v3263 = vunpack.c.h.b16 %v2943
      %v3264 = vunpack.c.l.b16 %v2944
      %v3265 = vunpack.c.h.b16 %v2944
      %v3266 = vunpack.c.l.b16 %v2945
      %v3267 = vunpack.c.h.b16 %v2945
      %v3268 = vunpack.c.l.b16 %v2946
      %v3269 = vunpack.c.h.b16 %v2946
      %v3270 = vunpack.c.l.b16 %v2947
      %v3271 = vunpack.c.h.b16 %v2947
      %v3272 = vunpack.c.l.b16 %v2948
      %v3273 = vunpack.c.h.b16 %v2948
      %v3274 = vunpack.c.l.b16 %v2949
      %v3275 = vunpack.c.h.b16 %v2949
      %v3276 = vunpack.c.l.b16 %v2950
      %v3277 = vunpack.c.h.b16 %v2950
      %v3278 = vunpack.c.l.b16 %v2951
      %v3279 = vunpack.c.h.b16 %v2951
      %v3280 = vunpack.c.l.b16 %v2952
      %v3281 = vunpack.c.h.b16 %v2952
      %v3282 = vunpack.c.l.b16 %v2953
      %v3283 = vunpack.c.h.b16 %v2953
      %v3284 = vunpack.c.l.b16 %v2954
      %v3285 = vunpack.c.h.b16 %v2954
      %v3286 = vunpack.c.l.b16 %v2955
      %v3287 = vunpack.c.h.b16 %v2955
      %v3288 = vunpack.c.l.b16 %v2956
      %v3289 = vunpack.c.h.b16 %v2956
      %v3290 = vunpack.c.l.b16 %v2957
      %v3291 = vunpack.c.h.b16 %v2957
      %v3292 = vunpack.c.l.b16 %v2958
      %v3293 = vunpack.c.h.b16 %v2958
      %v3294 = vunpack.c.l.b16 %v2959
      %v3295 = vunpack.c.h.b16 %v2959
      %v3296 = vunpack.c.l.b16 %v2960
      %v3297 = vunpack.c.h.b16 %v2960
      %v3298 = vunpack.c.l.b16 %v2961
      %v3299 = vunpack.c.h.b16 %v2961
      %v3300 = vunpack.c.l.b16 %v2962
      %v3301 = vunpack.c.h.b16 %v2962
      %v3302 = vunpack.c.l.b16 %v2963
      %v3303 = vunpack.c.h.b16 %v2963
      %v3304 = vunpack.c.l.b16 %v2964
      %v3305 = vunpack.c.h.b16 %v2964
      %v3306 = vunpack.c.l.b16 %v2965
      %v3307 = vunpack.c.h.b16 %v2965
      %v3308 = vunpack.c.l.b16 %v2966
      %v3309 = vunpack.c.h.b16 %v2966
      %v3310 = vunpack.c.l.b16 %v2967
      %v3311 = vunpack.c.h.b16 %v2967
      %v3312 = vunpack.c.l.b16 %v2968
      %v3313 = vunpack.c.h.b16 %v2968
      %v3314 = vunpack.c.l.b16 %v2969
      %v3315 = vunpack.c.h.b16 %v2969
      %v3316 = vunpack.c.l.b16 %v2970
      %v3317 = vunpack.c.h.b16 %v2970
      %v3318 = vunpack.c.l.b16 %v2971
      %v3319 = vunpack.c.h.b16 %v2971
      %v3320 = vunpack.c.l.b16 %v2972
      %v3321 = vunpack.c.h.b16 %v2972
      %v3322 = vunpack.c.l.b16 %v2973
      %v3323 = vunpack.c.h.b16 %v2973
      %v3324 = vunpack.c.l.b16 %v2974
      %v3325 = vunpack.c.h.b16 %v2974
      %v3326 = vunpack.c.l.b16 %v2975
      %v3327 = vunpack.c.h.b16 %v2975
      %v3328 = vunpack.c.l.b16 %v2976
      %v3329 = vunpack.c.h.b16 %v2976
      %v3330 = vunpack.c.l.b16 %v2977
      %v3331 = vunpack.c.h.b16 %v2977
      %v3332 = vunpack.c.l.b16 %v2978
      %v3333 = vunpack.c.h.b16 %v2978
      %v3334 = vunpack.c.l.b16 %v2979
      %v3335 = vunpack.c.h.b16 %v2979
      %v3336 = vunpack.c.l.b16 %v2980
      %v3337 = vunpack.c.h.b16 %v2980
      %v3338 = vunpack.c.l.b16 %v2981
      %v3339 = vunpack.c.h.b16 %v2981
      %v3340 = vunpack.c.l.b16 %v2982
      %v3341 = vunpack.c.h.b16 %v2982
      %v3342 = vunpack.c.l.b16 %v2983
      %v3343 = vunpack.c.h.b16 %v2983
      %v3344 = vunpack.c.l.b16 %v2984
      %v3345 = vunpack.c.h.b16 %v2984
      %v3346 = vunpack.c.l.b16 %v2985
      %v3347 = vunpack.c.h.b16 %v2985
      %v3348 = vunpack.c.l.b16 %v2986
      %v3349 = vunpack.c.h.b16 %v2986
      %v3350 = vunpack.c.l.b16 %v2987
      %v3351 = vunpack.c.h.b16 %v2987
      %v3352 = vunpack.c.l.b16 %v2988
      %v3353 = vunpack.c.h.b16 %v2988
      %v3354 = vunpack.c.l.b16 %v2989
      %v3355 = vunpack.c.h.b16 %v2989
      %v3356 = vunpack.c.l.b16 %v2990
      %v3357 = vunpack.c.h.b16 %v2990
      %v3358 = vunpack.c.l.b16 %v2991
      %v3359 = vunpack.c.h.b16 %v2991
      %v3360 = vunpack.c.l.b16 %v2992
      %v3361 = vunpack.c.h.b16 %v2992
      %v3362 = vunpack.c.l.b16 %v2993
      %v3363 = vunpack.c.h.b16 %v2993
      %v3364 = vunpack.c.l.b16 %v2994
      %v3365 = vunpack.c.h.b16 %v2994
      %v3366 = vunpack.c.l.b16 %v2995
      %v3367 = vunpack.c.h.b16 %v2995
      %v3368 = vunpack.c.l.b16 %v2996
      %v3369 = vunpack.c.h.b16 %v2996
      %v3370 = vunpack.c.l.b16 %v2997
      %v3371 = vunpack.c.h.b16 %v2997
      %v3372 = vunpack.c.l.b16 %v2998
      %v3373 = vunpack.c.h.b16 %v2998
      %v3374 = vunpack.c.l.b16 %v2999
      %v3375 = vunpack.c.h.b16 %v2999
      %v3376 = vunpack.c.l.b16 %v3000
      %v3377 = vunpack.c.h.b16 %v3000
      %v3378 = vunpack.c.l.b16 %v3001
      %v3379 = vunpack.c.h.b16 %v3001
      %v3380 = vunpack.c.l.b16 %v3002
      %v3381 = vunpack.c.h.b16 %v3002
      %v3382 = vunpack.c.l.b16 %v3003
      %v3383 = vunpack.c.h.b16 %v3003
      %v3384 = vunpack.c.l.b16 %v3004
      %v3385 = vunpack.c.h.b16 %v3004
      %v3386 = vunpack.c.l.b16 %v3005
      %v3387 = vunpack.c.h.b16 %v3005
      %v3388 = vunpack.c.l.b16 %v3006
      %v3389 = vunpack.c.h.b16 %v3006
      %v3390 = vunpack.c.l.b16 %v3007
      %v3391 = vunpack.c.h.b16 %v3007
      %v3392 = vpack.c.b16 %v3144, %v3136
      %v3393 = vpack.c.b16 %v3145, %v3137
      %v3394 = vpack.c.b16 %v3146, %v3138
      %v3395 = vpack.c.b16 %v3147, %v3139
      %v3396 = vpack.c.b16 %v3148, %v3140
      %v3397 = vpack.c.b16 %v3149, %v3141
      %v3398 = vpack.c.b16 %v3150, %v3142
      %v3399 = vpack.c.b16 %v3151, %v3143
      %v3400 = vpack.c.b16 %v3160, %v3152
      %v3401 = vpack.c.b16 %v3161, %v3153
      %v3402 = vpack.c.b16 %v3162, %v3154
      %v3403 = vpack.c.b16 %v3163, %v3155
      %v3404 = vpack.c.b16 %v3164, %v3156
      %v3405 = vpack.c.b16 %v3165, %v3157
      %v3406 = vpack.c.b16 %v3166, %v3158
      %v3407 = vpack.c.b16 %v3167, %v3159
      %v3408 = vpack.c.b16 %v3176, %v3168
      %v3409 = vpack.c.b16 %v3177, %v3169
      %v3410 = vpack.c.b16 %v3178, %v3170
      %v3411 = vpack.c.b16 %v3179, %v3171
      %v3412 = vpack.c.b16 %v3180, %v3172
      %v3413 = vpack.c.b16 %v3181, %v3173
      %v3414 = vpack.c.b16 %v3182, %v3174
      %v3415 = vpack.c.b16 %v3183, %v3175
      %v3416 = vpack.c.b16 %v3192, %v3184
      %v3417 = vpack.c.b16 %v3193, %v3185
      %v3418 = vpack.c.b16 %v3194, %v3186
      %v3419 = vpack.c.b16 %v3195, %v3187
      %v3420 = vpack.c.b16 %v3196, %v3188
      %v3421 = vpack.c.b16 %v3197, %v3189
      %v3422 = vpack.c.b16 %v3198, %v3190
      %v3423 = vpack.c.b16 %v3199, %v3191
      %v3424 = vpack.c.b16 %v3208, %v3200
      %v3425 = vpack.c.b16 %v3209, %v3201
      %v3426 = vpack.c.b16 %v3210, %v3202
      %v3427 = vpack.c.b16 %v3211, %v3203
      %v3428 = vpack.c.b16 %v3212, %v3204
      %v3429 = vpack.c.b16 %v3213, %v3205
      %v3430 = vpack.c.b16 %v3214, %v3206
      %v3431 = vpack.c.b16 %v3215, %v3207
      %v3432 = vpack.c.b16 %v3224, %v3216
      %v3433 = vpack.c.b16 %v3225, %v3217
      %v3434 = vpack.c.b16 %v3226, %v3218
      %v3435 = vpack.c.b16 %v3227, %v3219
      %v3436 = vpack.c.b16 %v3228, %v3220
      %v3437 = vpack.c.b16 %v3229, %v3221
      %v3438 = vpack.c.b16 %v3230, %v3222
      %v3439 = vpack.c.b16 %v3231, %v3223
      %v3440 = vpack.c.b16 %v3240, %v3232
      %v3441 = vpack.c.b16 %v3241, %v3233
      %v3442 = vpack.c.b16 %v3242, %v3234
      %v3443 = vpack.c.b16 %v3243, %v3235
      %v3444 = vpack.c.b16 %v3244, %v3236
      %v3445 = vpack.c.b16 %v3245, %v3237
      %v3446 = vpack.c.b16 %v3246, %v3238
      %v3447 = vpack.c.b16 %v3247, %v3239
      %v3448 = vpack.c.b16 %v3256, %v3248
      %v3449 = vpack.c.b16 %v3257, %v3249
      %v3450 = vpack.c.b16 %v3258, %v3250
      %v3451 = vpack.c.b16 %v3259, %v3251
      %v3452 = vpack.c.b16 %v3260, %v3252
      %v3453 = vpack.c.b16 %v3261, %v3253
      %v3454 = vpack.c.b16 %v3262, %v3254
      %v3455 = vpack.c.b16 %v3263, %v3255
      %v3456 = vpack.c.b16 %v3272, %v3264
      %v3457 = vpack.c.b16 %v3273, %v3265
      %v3458 = vpack.c.b16 %v3274, %v3266
      %v3459 = vpack.c.b16 %v3275, %v3267
      %v3460 = vpack.c.b16 %v3276, %v3268
      %v3461 = vpack.c.b16 %v3277, %v3269
      %v3462 = vpack.c.b16 %v3278, %v3270
      %v3463 = vpack.c.b16 %v3279, %v3271
      %v3464 = vpack.c.b16 %v3288, %v3280
      %v3465 = vpack.c.b16 %v3289, %v3281
      %v3466 = vpack.c.b16 %v3290, %v3282
      %v3467 = vpack.c.b16 %v3291, %v3283
      %v3468 = vpack.c.b16 %v3292, %v3284
      %v3469 = vpack.c.b16 %v3293, %v3285
      %v3470 = vpack.c.b16 %v3294, %v3286
      %v3471 = vpack.c.b16 %v3295, %v3287
      %v3472 = vpack.c.b16 %v3304, %v3296
      %v3473 = vpack.c.b16 %v3305, %v3297
      %v3474 = vpack.c.b16 %v3306, %v3298
      %v3475 = vpack.c.b16 %v3307, %v3299
      %v3476 = vpack.c.b16 %v3308, %v3300
      %v3477 = vpack.c.b16 %v3309, %v3301
      %v3478 = vpack.c.b16 %v3310, %v3302
      %v3479 = vpack.c.b16 %v3311, %v3303
      %v3480 = vpack.c.b16 %v3320, %v3312
      %v3481 = vpack.c.b16 %v3321, %v3313
      %v3482 = vpack.c.b16 %v3322, %v3314
      %v3483 = vpack.c.b16 %v3323, %v3315
      %v3484 = vpack.c.b16 %v3324, %v3316
      %v3485 = vpack.c.b16 %v3325, %v3317
      %v3486 = vpack.c.b16 %v3326, %v3318
      %v3487 = vpack.c.b16 %v3327, %v3319
      %v3488 = vpack.c.b16 %v3336, %v3328
      %v3489 = vpack.c.b16 %v3337, %v3329
      %v3490 = vpack.c.b16 %v3338, %v3330
      %v3491 = vpack.c.b16 %v3339, %v3331
      %v3492 = vpack.c.b16 %v3340, %v3332
      %v3493 = vpack.c.b16 %v3341, %v3333
      %v3494 = vpack.c.b16 %v3342, %v3334
      %v3495 = vpack.c.b16 %v3343, %v3335
      %v3496 = vpack.c.b16 %v3352, %v3344
      %v3497 = vpack.c.b16 %v3353, %v3345
      %v3498 = vpack.c.b16 %v3354, %v3346
      %v3499 = vpack.c.b16 %v3355, %v3347
      %v3500 = vpack.c.b16 %v3356, %v3348
      %v3501 = vpack.c.b16 %v3357, %v3349
      %v3502 = vpack.c.b16 %v3358, %v3350
      %v3503 = vpack.c.b16 %v3359, %v3351
      %v3504 = vpack.c.b16 %v3368, %v3360
      %v3505 = vpack.c.b16 %v3369, %v3361
      %v3506 = vpack.c.b16 %v3370, %v3362
      %v3507 = vpack.c.b16 %v3371, %v3363
      %v3508 = vpack.c.b16 %v3372, %v3364
      %v3509 = vpack.c.b16 %v3373, %v3365
      %v3510 = vpack.c.b16 %v3374, %v3366
      %v3511 = vpack.c.b16 %v3375, %v3367
      %v3512 = vpack.c.b16 %v3384, %v3376
      %v3513 = vpack.c.b16 %v3385, %v3377
      %v3514 = vpack.c.b16 %v3386, %v3378
      %v3515 = vpack.c.b16 %v3387, %v3379
      %v3516 = vpack.c.b16 %v3388, %v3380
      %v3517 = vpack.c.b16 %v3389, %v3381
      %v3518 = vpack.c.b16 %v3390, %v3382
      %v3519 = vpack.c.b16 %v3391, %v3383
      %3648 = vmatpush.bf16.msra.mxu0 %v3448
      %3649 = vmatpush.bf16.msra.mxu0 %v3440
      %3650 = vmatpush.bf16.msra.mxu0 %v3432
      %3651 = vmatpush.bf16.msra.mxu0 %v3424
      %3652 = vmatpush.bf16.msra.mxu0 %v3416
      %3653 = vmatpush.bf16.msra.mxu0 %v3408
      %3654 = vmatpush.bf16.msra.mxu0 %v3400
      %3655 = vmatpush.bf16.msra.mxu0 %v3392
      %3656 = vmatmul.bf16.gmra.mxu0 %v2536
      %v3657 = vpop.f32.mrf.mxu0
      %v3658 = vadd.f32 0.0, %v3657
      %v3659 = vpop.f32.mrf.mxu0
      %3660 = vdwg.mxu0
      %3661 = vmatpush.bf16.msra.mxu0 %v3512
      %3662 = vmatpush.bf16.msra.mxu0 %v3504
      %3663 = vmatpush.bf16.msra.mxu0 %v3496
      %3664 = vmatpush.bf16.msra.mxu0 %v3488
      %3665 = vmatpush.bf16.msra.mxu0 %v3480
      %3666 = vmatpush.bf16.msra.mxu0 %v3472
      %3667 = vmatpush.bf16.msra.mxu0 %v3464
      %3668 = vmatpush.bf16.msra.mxu0 %v3456
      %3669 = vmatmul.bf16.gmra.mxu0 %v2879
      %v3670 = vpop.f32.mrf.mxu0
      %v3671 = vadd.f32 %v3658, %v3670
      %v3672 = vpop.f32.mrf.mxu0
      %3673 = vdwg.mxu0
      %3674 = vmatpush.bf16.msra.mxu0 %v3449
      %3675 = vmatpush.bf16.msra.mxu0 %v3441
      %3676 = vmatpush.bf16.msra.mxu0 %v3433
      %3677 = vmatpush.bf16.msra.mxu0 %v3425
      %3678 = vmatpush.bf16.msra.mxu0 %v3417
      %3679 = vmatpush.bf16.msra.mxu0 %v3409
      %3680 = vmatpush.bf16.msra.mxu0 %v3401
      %3681 = vmatpush.bf16.msra.mxu0 %v3393
      %3682 = vmatmul.bf16.gmra.mxu0 %v2536
      %v3683 = vpop.f32.mrf.mxu0
      %v3684 = vadd.f32 0.0, %v3683
      %v3685 = vpop.f32.mrf.mxu0
      %3686 = vdwg.mxu0
      %3687 = vmatpush.bf16.msra.mxu0 %v3513
      %3688 = vmatpush.bf16.msra.mxu0 %v3505
      %3689 = vmatpush.bf16.msra.mxu0 %v3497
      %3690 = vmatpush.bf16.msra.mxu0 %v3489
      %3691 = vmatpush.bf16.msra.mxu0 %v3481
      %3692 = vmatpush.bf16.msra.mxu0 %v3473
      %3693 = vmatpush.bf16.msra.mxu0 %v3465
      %3694 = vmatpush.bf16.msra.mxu0 %v3457
      %3695 = vmatmul.bf16.gmra.mxu0 %v2879
      %v3696 = vpop.f32.mrf.mxu0
      %v3697 = vadd.f32 %v3684, %v3696
      %v3698 = vpop.f32.mrf.mxu0
      %3699 = vdwg.mxu0
      %3700 = vmatpush.bf16.msra.mxu0 %v3450
      %3701 = vmatpush.bf16.msra.mxu0 %v3442
      %3702 = vmatpush.bf16.msra.mxu0 %v3434
      %3703 = vmatpush.bf16.msra.mxu0 %v3426
      %3704 = vmatpush.bf16.msra.mxu0 %v3418
      %3705 = vmatpush.bf16.msra.mxu0 %v3410
      %3706 = vmatpush.bf16.msra.mxu0 %v3402
      %3707 = vmatpush.bf16.msra.mxu0 %v3394
      %3708 = vmatmul.bf16.gmra.mxu0 %v2536
      %v3709 = vpop.f32.mrf.mxu0
      %v3710 = vadd.f32 0.0, %v3709
      %v3711 = vpop.f32.mrf.mxu0
      %3712 = vdwg.mxu0
      %3713 = vmatpush.bf16.msra.mxu0 %v3514
      %3714 = vmatpush.bf16.msra.mxu0 %v3506
      %3715 = vmatpush.bf16.msra.mxu0 %v3498
      %3716 = vmatpush.bf16.msra.mxu0 %v3490
      %3717 = vmatpush.bf16.msra.mxu0 %v3482
      %3718 = vmatpush.bf16.msra.mxu0 %v3474
      %3719 = vmatpush.bf16.msra.mxu0 %v3466
      %3720 = vmatpush.bf16.msra.mxu0 %v3458
      %3721 = vmatmul.bf16.gmra.mxu0 %v2879
      %v3722 = vpop.f32.mrf.mxu0
      %v3723 = vadd.f32 %v3710, %v3722
      %v3724 = vpop.f32.mrf.mxu0
      %3725 = vdwg.mxu0
      %3726 = vmatpush.bf16.msra.mxu0 %v3451
      %3727 = vmatpush.bf16.msra.mxu0 %v3443
      %3728 = vmatpush.bf16.msra.mxu0 %v3435
      %3729 = vmatpush.bf16.msra.mxu0 %v3427
      %3730 = vmatpush.bf16.msra.mxu0 %v3419
      %3731 = vmatpush.bf16.msra.mxu0 %v3411
      %3732 = vmatpush.bf16.msra.mxu0 %v3403
      %3733 = vmatpush.bf16.msra.mxu0 %v3395
      %3734 = vmatmul.bf16.gmra.mxu0 %v2536
      %v3735 = vpop.f32.mrf.mxu0
      %v3736 = vadd.f32 0.0, %v3735
      %v3737 = vpop.f32.mrf.mxu0
      %3738 = vdwg.mxu0
      %3739 = vmatpush.bf16.msra.mxu0 %v3515
      %3740 = vmatpush.bf16.msra.mxu0 %v3507
      %3741 = vmatpush.bf16.msra.mxu0 %v3499
      %3742 = vmatpush.bf16.msra.mxu0 %v3491
      %3743 = vmatpush.bf16.msra.mxu0 %v3483
      %3744 = vmatpush.bf16.msra.mxu0 %v3475
      %3745 = vmatpush.bf16.msra.mxu0 %v3467
      %3746 = vmatpush.bf16.msra.mxu0 %v3459
      %3747 = vmatmul.bf16.gmra.mxu0 %v2879
      %v3748 = vpop.f32.mrf.mxu0
      %v3749 = vadd.f32 %v3736, %v3748
      %v3750 = vpop.f32.mrf.mxu0
      %3751 = vdwg.mxu0
      %3752 = vmatpush.bf16.msra.mxu0 %v3452
      %3753 = vmatpush.bf16.msra.mxu0 %v3444
      %3754 = vmatpush.bf16.msra.mxu0 %v3436
      %3755 = vmatpush.bf16.msra.mxu0 %v3428
      %3756 = vmatpush.bf16.msra.mxu0 %v3420
      %3757 = vmatpush.bf16.msra.mxu0 %v3412
      %3758 = vmatpush.bf16.msra.mxu0 %v3404
      %3759 = vmatpush.bf16.msra.mxu0 %v3396
      %3760 = vmatmul.bf16.gmra.mxu0 %v2536
      %v3761 = vpop.f32.mrf.mxu0
      %v3762 = vadd.f32 0.0, %v3761
      %v3763 = vpop.f32.mrf.mxu0
      %3764 = vdwg.mxu0
      %3765 = vmatpush.bf16.msra.mxu0 %v3516
      %3766 = vmatpush.bf16.msra.mxu0 %v3508
      %3767 = vmatpush.bf16.msra.mxu0 %v3500
      %3768 = vmatpush.bf16.msra.mxu0 %v3492
      %3769 = vmatpush.bf16.msra.mxu0 %v3484
      %3770 = vmatpush.bf16.msra.mxu0 %v3476
      %3771 = vmatpush.bf16.msra.mxu0 %v3468
      %3772 = vmatpush.bf16.msra.mxu0 %v3460
      %3773 = vmatmul.bf16.gmra.mxu0 %v2879
      %v3774 = vpop.f32.mrf.mxu0
      %v3775 = vadd.f32 %v3762, %v3774
      %v3776 = vpop.f32.mrf.mxu0
      %3777 = vdwg.mxu0
      %3778 = vmatpush.bf16.msra.mxu0 %v3453
      %3779 = vmatpush.bf16.msra.mxu0 %v3445
      %3780 = vmatpush.bf16.msra.mxu0 %v3437
      %3781 = vmatpush.bf16.msra.mxu0 %v3429
      %3782 = vmatpush.bf16.msra.mxu0 %v3421
      %3783 = vmatpush.bf16.msra.mxu0 %v3413
      %3784 = vmatpush.bf16.msra.mxu0 %v3405
      %3785 = vmatpush.bf16.msra.mxu0 %v3397
      %3786 = vmatmul.bf16.gmra.mxu0 %v2536
      %v3787 = vpop.f32.mrf.mxu0
      %v3788 = vadd.f32 0.0, %v3787
      %v3789 = vpop.f32.mrf.mxu0
      %3790 = vdwg.mxu0
      %3791 = vmatpush.bf16.msra.mxu0 %v3517
      %3792 = vmatpush.bf16.msra.mxu0 %v3509
      %3793 = vmatpush.bf16.msra.mxu0 %v3501
      %3794 = vmatpush.bf16.msra.mxu0 %v3493
      %3795 = vmatpush.bf16.msra.mxu0 %v3485
      %3796 = vmatpush.bf16.msra.mxu0 %v3477
      %3797 = vmatpush.bf16.msra.mxu0 %v3469
      %3798 = vmatpush.bf16.msra.mxu0 %v3461
      %3799 = vmatmul.bf16.gmra.mxu0 %v2879
      %v3800 = vpop.f32.mrf.mxu0
      %v3801 = vadd.f32 %v3788, %v3800
      %v3802 = vpop.f32.mrf.mxu0
      %3803 = vdwg.mxu0
      %3804 = vmatpush.bf16.msra.mxu0 %v3454
      %3805 = vmatpush.bf16.msra.mxu0 %v3446
      %3806 = vmatpush.bf16.msra.mxu0 %v3438
      %3807 = vmatpush.bf16.msra.mxu0 %v3430
      %3808 = vmatpush.bf16.msra.mxu0 %v3422
      %3809 = vmatpush.bf16.msra.mxu0 %v3414
      %3810 = vmatpush.bf16.msra.mxu0 %v3406
      %3811 = vmatpush.bf16.msra.mxu0 %v3398
      %3812 = vmatmul.bf16.gmra.mxu0 %v2536
      %v3813 = vpop.f32.mrf.mxu0
      %v3814 = vadd.f32 0.0, %v3813
      %v3815 = vpop.f32.mrf.mxu0
      %3816 = vdwg.mxu0
      %3817 = vmatpush.bf16.msra.mxu0 %v3518
      %3818 = vmatpush.bf16.msra.mxu0 %v3510
      %3819 = vmatpush.bf16.msra.mxu0 %v3502
      %3820 = vmatpush.bf16.msra.mxu0 %v3494
      %3821 = vmatpush.bf16.msra.mxu0 %v3486
      %3822 = vmatpush.bf16.msra.mxu0 %v3478
      %3823 = vmatpush.bf16.msra.mxu0 %v3470
      %3824 = vmatpush.bf16.msra.mxu0 %v3462
      %3825 = vmatmul.bf16.gmra.mxu0 %v2879
      %v3826 = vpop.f32.mrf.mxu0
      %v3827 = vadd.f32 %v3814, %v3826
      %v3828 = vpop.f32.mrf.mxu0
      %3829 = vdwg.mxu0
      %3830 = vmatpush.bf16.msra.mxu0 %v3455
      %3831 = vmatpush.bf16.msra.mxu0 %v3447
      %3832 = vmatpush.bf16.msra.mxu0 %v3439
      %3833 = vmatpush.bf16.msra.mxu0 %v3431
      %3834 = vmatpush.bf16.msra.mxu0 %v3423
      %3835 = vmatpush.bf16.msra.mxu0 %v3415
      %3836 = vmatpush.bf16.msra.mxu0 %v3407
      %3837 = vmatpush.bf16.msra.mxu0 %v3399
      %3838 = vmatmul.bf16.gmra.mxu0 %v2536
      %v3839 = vpop.f32.mrf.mxu0
      %v3840 = vadd.f32 0.0, %v3839
      %v3841 = vpop.f32.mrf.mxu0
      %3842 = vdwg.mxu0
      %3843 = vmatpush.bf16.msra.mxu0 %v3519
      %3844 = vmatpush.bf16.msra.mxu0 %v3511
      %3845 = vmatpush.bf16.msra.mxu0 %v3503
      %3846 = vmatpush.bf16.msra.mxu0 %v3495
      %3847 = vmatpush.bf16.msra.mxu0 %v3487
      %3848 = vmatpush.bf16.msra.mxu0 %v3479
      %3849 = vmatpush.bf16.msra.mxu0 %v3471
      %3850 = vmatpush.bf16.msra.mxu0 %v3463
      %3851 = vmatmul.bf16.gmra.mxu0 %v2879
      %v3852 = vpop.f32.mrf.mxu0
      %v3853 = vadd.f32 %v3840, %v3852
      %v3854 = vpop.f32.mrf.mxu0
      %3855 = vdwg.mxu0
      %v3860 = vrot.slane %v3697, 7
      %v3861 = vrot.slane %v3723, 6
      %v3862 = vrot.slane %v3749, 5
      %v3863 = vsel %vm1130, %v3671, %v3860
      %v3864 = vsel %vm1132, %v3861, %v3862
      %v3865 = vsel %vm1134, %v3863, %v3864
      %v3867 = vadd.f32 %v2878, %v3865
      %v3868 = vxor.u32 %v3867, 2147483648
      %v3869 = vmul.f32 %v3868, 1.442695
      %v3870 = vpow.pop %v3869
      %v3871 = vadd.f32 %v3870, 1.0
      %v3872 = vrcp.pop %v3871
      %v3873 = vmul.f32 %v3871, %v3872
      %v3874 = vsub.f32 1.0, %v3873
      %v3875 = vmul.f32 %v3872, %v3874
      %v3876 = vadd.f32 %v3872, %v3875
      %vm3877 = vweird.f32 %v3871
      %vm3878 = vweird.f32 %v3872
      %vm3879 = vmor %vm3877, %vm3878
      %v3880 = vsel %vm3879, %v3872, %v3876
      %v3881 = vand.u32 2147483647, %v3871
      %vm3882 = vcmp.eq.f32.partialorder %v3881, 8.507059e+37
      %v3883 = vand.u32 %v3871, 2147483648
      %v3884 = vor.u32 1.1754944e-38, %v3883
      %v3885 = vsel %vm3882, %v3884, %v3880
      %v3886 = vmul.f32 1.0, %v3885
      %v3888 = vrot.slane %v3867, 3
      %v3890 = vtanh.pop %v3888
      %v3892 = vrot.slane %v3886, 1
      %v3894 = vmul.f32 %v3892, %v2531
      %v3895 = vmul.f32 %v3886, %v3890
      %v3896 = vadd.f32 %v3894, %v3895
      %v3897 = vtanh.pop %v3896
      %v3898 = vrot.slane %v3886, 2
      %v3900 = vmul.f32 %v3898, %v3897
      %v3901 = vpack.c.bf16 %v3900, %v3900
      %v3902 = vld [vmem:[#allocation11] sm:$0xff]
      %v3903 = vld [vmem:[#allocation11 + $0x8] sm:$0xff]
      %v3904 = vld [vmem:[#allocation11 + $0x10] sm:$0xff]
      %v3905 = vld [vmem:[#allocation11 + $0x18] sm:$0xff]
      %v3906 = vld [vmem:[#allocation11 + $0x20] sm:$0xff]
      %v3907 = vld [vmem:[#allocation11 + $0x28] sm:$0xff]
      %v3908 = vld [vmem:[#allocation11 + $0x30] sm:$0xff]
      %v3909 = vld [vmem:[#allocation11 + $0x38] sm:$0xff]
      %v3910 = vld [vmem:[#allocation11 + $0x40] sm:$0xff]
      %v3911 = vld [vmem:[#allocation11 + $0x48] sm:$0xff]
      %v3912 = vld [vmem:[#allocation11 + $0x50] sm:$0xff]
      %v3913 = vld [vmem:[#allocation11 + $0x58] sm:$0xff]
      %v3914 = vld [vmem:[#allocation11 + $0x60] sm:$0xff]
      %v3915 = vld [vmem:[#allocation11 + $0x68] sm:$0xff]
      %v3916 = vld [vmem:[#allocation11 + $0x70] sm:$0xff]
      %v3917 = vld [vmem:[#allocation11 + $0x78] sm:$0xff]
      %v3918 = vld [vmem:[#allocation11 + $0x80] sm:$0xff]
      %v3919 = vld [vmem:[#allocation11 + $0x88] sm:$0xff]
      %v3920 = vld [vmem:[#allocation11 + $0x90] sm:$0xff]
      %v3921 = vld [vmem:[#allocation11 + $0x98] sm:$0xff]
      %v3922 = vld [vmem:[#allocation11 + $0xa0] sm:$0xff]
      %v3923 = vld [vmem:[#allocation11 + $0xa8] sm:$0xff]
      %v3924 = vld [vmem:[#allocation11 + $0xb0] sm:$0xff]
      %v3925 = vld [vmem:[#allocation11 + $0xb8] sm:$0xff]
      %v3926 = vld [vmem:[#allocation11 + $0xc0] sm:$0xff]
      %v3927 = vld [vmem:[#allocation11 + $0xc8] sm:$0xff]
      %v3928 = vld [vmem:[#allocation11 + $0xd0] sm:$0xff]
      %v3929 = vld [vmem:[#allocation11 + $0xd8] sm:$0xff]
      %v3930 = vld [vmem:[#allocation11 + $0xe0] sm:$0xff]
      %v3931 = vld [vmem:[#allocation11 + $0xe8] sm:$0xff]
      %v3932 = vld [vmem:[#allocation11 + $0xf0] sm:$0xff]
      %v3933 = vld [vmem:[#allocation11 + $0xf8] sm:$0xff]
      %v3966 = vunpack.c.l.b16 %v3902
      %v3967 = vunpack.c.h.b16 %v3902
      %v3968 = vunpack.c.l.b16 %v3903
      %v3969 = vunpack.c.h.b16 %v3903
      %v3970 = vunpack.c.l.b16 %v3904
      %v3971 = vunpack.c.h.b16 %v3904
      %v3972 = vunpack.c.l.b16 %v3905
      %v3973 = vunpack.c.h.b16 %v3905
      %v3974 = vunpack.c.l.b16 %v3906
      %v3975 = vunpack.c.h.b16 %v3906
      %v3976 = vunpack.c.l.b16 %v3907
      %v3977 = vunpack.c.h.b16 %v3907
      %v3978 = vunpack.c.l.b16 %v3908
      %v3979 = vunpack.c.h.b16 %v3908
      %v3980 = vunpack.c.l.b16 %v3909
      %v3981 = vunpack.c.h.b16 %v3909
      %v3982 = vunpack.c.l.b16 %v3910
      %v3983 = vunpack.c.h.b16 %v3910
      %v3984 = vunpack.c.l.b16 %v3911
      %v3985 = vunpack.c.h.b16 %v3911
      %v3986 = vunpack.c.l.b16 %v3912
      %v3987 = vunpack.c.h.b16 %v3912
      %v3988 = vunpack.c.l.b16 %v3913
      %v3989 = vunpack.c.h.b16 %v3913
      %v3990 = vunpack.c.l.b16 %v3914
      %v3991 = vunpack.c.h.b16 %v3914
      %v3992 = vunpack.c.l.b16 %v3915
      %v3993 = vunpack.c.h.b16 %v3915
      %v3994 = vunpack.c.l.b16 %v3916
      %v3995 = vunpack.c.h.b16 %v3916
      %v3996 = vunpack.c.l.b16 %v3917
      %v3997 = vunpack.c.h.b16 %v3917
      %v3998 = vunpack.c.l.b16 %v3918
      %v3999 = vunpack.c.h.b16 %v3918
      %v4000 = vunpack.c.l.b16 %v3919
      %v4001 = vunpack.c.h.b16 %v3919
      %v4002 = vunpack.c.l.b16 %v3920
      %v4003 = vunpack.c.h.b16 %v3920
      %v4004 = vunpack.c.l.b16 %v3921
      %v4005 = vunpack.c.h.b16 %v3921
      %v4006 = vunpack.c.l.b16 %v3922
      %v4007 = vunpack.c.h.b16 %v3922
      %v4008 = vunpack.c.l.b16 %v3923
      %v4009 = vunpack.c.h.b16 %v3923
      %v4010 = vunpack.c.l.b16 %v3924
      %v4011 = vunpack.c.h.b16 %v3924
      %v4012 = vunpack.c.l.b16 %v3925
      %v4013 = vunpack.c.h.b16 %v3925
      %v4014 = vunpack.c.l.b16 %v3926
      %v4015 = vunpack.c.h.b16 %v3926
      %v4016 = vunpack.c.l.b16 %v3927
      %v4017 = vunpack.c.h.b16 %v3927
      %v4018 = vunpack.c.l.b16 %v3928
      %v4019 = vunpack.c.h.b16 %v3928
      %v4020 = vunpack.c.l.b16 %v3929
      %v4021 = vunpack.c.h.b16 %v3929
      %v4022 = vunpack.c.l.b16 %v3930
      %v4023 = vunpack.c.h.b16 %v3930
      %v4024 = vunpack.c.l.b16 %v3931
      %v4025 = vunpack.c.h.b16 %v3931
      %v4026 = vunpack.c.l.b16 %v3932
      %v4027 = vunpack.c.h.b16 %v3932
      %v4028 = vunpack.c.l.b16 %v3933
      %v4029 = vunpack.c.h.b16 %v3933
      %v4030 = vpack.c.b16 %v3970, %v3966
      %v4031 = vpack.c.b16 %v3971, %v3967
      %v4032 = vpack.c.b16 %v3972, %v3968
      %v4033 = vpack.c.b16 %v3973, %v3969
      %v4034 = vpack.c.b16 %v3978, %v3974
      %v4035 = vpack.c.b16 %v3979, %v3975
      %v4036 = vpack.c.b16 %v3980, %v3976
      %v4037 = vpack.c.b16 %v3981, %v3977
      %v4038 = vpack.c.b16 %v3986, %v3982
      %v4039 = vpack.c.b16 %v3987, %v3983
      %v4040 = vpack.c.b16 %v3988, %v3984
      %v4041 = vpack.c.b16 %v3989, %v3985
      %v4042 = vpack.c.b16 %v3994, %v3990
      %v4043 = vpack.c.b16 %v3995, %v3991
      %v4044 = vpack.c.b16 %v3996, %v3992
      %v4045 = vpack.c.b16 %v3997, %v3993
      %v4046 = vpack.c.b16 %v4002, %v3998
      %v4047 = vpack.c.b16 %v4003, %v3999
      %v4048 = vpack.c.b16 %v4004, %v4000
      %v4049 = vpack.c.b16 %v4005, %v4001
      %v4050 = vpack.c.b16 %v4010, %v4006
      %v4051 = vpack.c.b16 %v4011, %v4007
      %v4052 = vpack.c.b16 %v4012, %v4008
      %v4053 = vpack.c.b16 %v4013, %v4009
      %v4054 = vpack.c.b16 %v4018, %v4014
      %v4055 = vpack.c.b16 %v4019, %v4015
      %v4056 = vpack.c.b16 %v4020, %v4016
      %v4057 = vpack.c.b16 %v4021, %v4017
      %v4058 = vpack.c.b16 %v4026, %v4022
      %v4059 = vpack.c.b16 %v4027, %v4023
      %v4060 = vpack.c.b16 %v4028, %v4024
      %v4061 = vpack.c.b16 %v4029, %v4025
      %4094 = vmatpush.bf16.msra.mxu0 %v4058
      %4095 = vmatpush.bf16.msra.mxu0 %v4054
      %4096 = vmatpush.bf16.msra.mxu0 %v4050
      %4097 = vmatpush.bf16.msra.mxu0 %v4046
      %4098 = vmatpush.bf16.msra.mxu0 %v4042
      %4099 = vmatpush.bf16.msra.mxu0 %v4038
      %4100 = vmatpush.bf16.msra.mxu0 %v4034
      %4101 = vmatpush.bf16.msra.mxu0 %v4030
      %4102 = vmatmul.bf16.gmra.mxu0 %v3901
      %v4103 = vpop.f32.mrf.mxu0
      %v4104 = vadd.f32 %v3775, %v4103
      %v4105 = vpop.f32.mrf.mxu0
      %4106 = vdwg.mxu0
      %4107 = vmatpush.bf16.msra.mxu0 %v4059
      %4108 = vmatpush.bf16.msra.mxu0 %v4055
      %4109 = vmatpush.bf16.msra.mxu0 %v4051
      %4110 = vmatpush.bf16.msra.mxu0 %v4047
      %4111 = vmatpush.bf16.msra.mxu0 %v4043
      %4112 = vmatpush.bf16.msra.mxu0 %v4039
      %4113 = vmatpush.bf16.msra.mxu0 %v4035
      %4114 = vmatpush.bf16.msra.mxu0 %v4031
      %4115 = vmatmul.bf16.gmra.mxu0 %v3901
      %v4116 = vpop.f32.mrf.mxu0
      %v4117 = vadd.f32 %v3801, %v4116
      %v4118 = vpop.f32.mrf.mxu0
      %4119 = vdwg.mxu0
      %4120 = vmatpush.bf16.msra.mxu0 %v4060
      %4121 = vmatpush.bf16.msra.mxu0 %v4056
      %4122 = vmatpush.bf16.msra.mxu0 %v4052
      %4123 = vmatpush.bf16.msra.mxu0 %v4048
      %4124 = vmatpush.bf16.msra.mxu0 %v4044
      %4125 = vmatpush.bf16.msra.mxu0 %v4040
      %4126 = vmatpush.bf16.msra.mxu0 %v4036
      %4127 = vmatpush.bf16.msra.mxu0 %v4032
      %4128 = vmatmul.bf16.gmra.mxu0 %v3901
      %v4129 = vpop.f32.mrf.mxu0
      %v4130 = vadd.f32 %v3827, %v4129
      %v4131 = vpop.f32.mrf.mxu0
      %4132 = vdwg.mxu0
      %4133 = vmatpush.bf16.msra.mxu0 %v4061
      %4134 = vmatpush.bf16.msra.mxu0 %v4057
      %4135 = vmatpush.bf16.msra.mxu0 %v4053
      %4136 = vmatpush.bf16.msra.mxu0 %v4049
      %4137 = vmatpush.bf16.msra.mxu0 %v4045
      %4138 = vmatpush.bf16.msra.mxu0 %v4041
      %4139 = vmatpush.bf16.msra.mxu0 %v4037
      %4140 = vmatpush.bf16.msra.mxu0 %v4033
      %4141 = vmatmul.bf16.gmra.mxu0 %v3901
      %v4142 = vpop.f32.mrf.mxu0
      %v4143 = vadd.f32 %v3853, %v4142
      %v4144 = vpop.f32.mrf.mxu0
      %4145 = vdwg.mxu0
      %v4146 = vld [vmem:[%s8] sm:$0xf]
      %v4148 = vperm.slane %v4146, 0
      %v4149 = vperm.slane %v4146, 1
      %v4150 = vperm.slane %v4146, 2
      %v4151 = vperm.slane %v4146, 3
      %v4156 = vadd.f32 %v4104, %v4148
      %v4157 = vadd.f32 %v4117, %v4149
      %v4158 = vadd.f32 %v4130, %v4150
      %v4159 = vadd.f32 %v4143, %v4151
      %v4160 = vxor.u32 %v4156, 2147483648
      %v4161 = vxor.u32 %v4157, 2147483648
      %v4162 = vxor.u32 %v4158, 2147483648
      %v4163 = vmul.f32 %v4160, 1.442695
      %v4164 = vpow.pop %v4163
      %v4165 = vmul.f32 %v4161, 1.442695
      %v4166 = vpow.pop %v4165
      %v4167 = vmul.f32 %v4162, 1.442695
      %v4168 = vpow.pop %v4167
      %v4169 = vadd.f32 %v4164, 1.0
      %v4170 = vadd.f32 %v4166, 1.0
      %v4171 = vadd.f32 %v4168, 1.0
      %v4172 = vrcp.pop %v4169
      %v4173 = vmul.f32 %v4169, %v4172
      %v4174 = vsub.f32 1.0, %v4173
      %v4175 = vmul.f32 %v4172, %v4174
      %v4176 = vadd.f32 %v4172, %v4175
      %vm4177 = vweird.f32 %v4169
      %vm4178 = vweird.f32 %v4172
      %vm4179 = vmor %vm4177, %vm4178
      %v4180 = vsel %vm4179, %v4172, %v4176
      %v4181 = vand.u32 2147483647, %v4169
      %vm4182 = vcmp.eq.f32.partialorder %v4181, 8.507059e+37
      %v4183 = vand.u32 %v4169, 2147483648
      %v4184 = vor.u32 1.1754944e-38, %v4183
      %v4185 = vsel %vm4182, %v4184, %v4180
      %v4186 = vmul.f32 1.0, %v4185
      %v4187 = vrcp.pop %v4170
      %v4188 = vmul.f32 %v4170, %v4187
      %v4189 = vsub.f32 1.0, %v4188
      %v4190 = vmul.f32 %v4187, %v4189
      %v4191 = vadd.f32 %v4187, %v4190
      %vm4192 = vweird.f32 %v4170
      %vm4193 = vweird.f32 %v4187
      %vm4194 = vmor %vm4192, %vm4193
      %v4195 = vsel %vm4194, %v4187, %v4191
      %v4196 = vand.u32 2147483647, %v4170
      %vm4197 = vcmp.eq.f32.partialorder %v4196, 8.507059e+37
      %v4198 = vand.u32 %v4170, 2147483648
      %v4199 = vor.u32 1.1754944e-38, %v4198
      %v4200 = vsel %vm4197, %v4199, %v4195
      %v4201 = vmul.f32 1.0, %v4200
      %v4202 = vrcp.pop %v4171
      %v4203 = vmul.f32 %v4171, %v4202
      %v4204 = vsub.f32 1.0, %v4203
      %v4205 = vmul.f32 %v4202, %v4204
      %v4206 = vadd.f32 %v4202, %v4205
      %vm4207 = vweird.f32 %v4171
      %vm4208 = vweird.f32 %v4202
      %vm4209 = vmor %vm4207, %vm4208
      %v4210 = vsel %vm4209, %v4202, %v4206
      %v4211 = vand.u32 2147483647, %v4171
      %vm4212 = vcmp.eq.f32.partialorder %v4211, 8.507059e+37
      %v4213 = vand.u32 %v4171, 2147483648
      %v4214 = vor.u32 1.1754944e-38, %v4213
      %v4215 = vsel %vm4212, %v4214, %v4210
      %v4216 = vmul.f32 1.0, %v4215
      %v4217 = vtanh.pop %v4159
      %v4218 = vmul.f32 %v4201, %v2855
      %v4219 = vmul.f32 %v4186, %v4217
      %v4220 = vadd.f32 %v4218, %v4219
      %v4221 = vtanh.pop %v4220
      %v4222 = vmul.f32 %v4216, %v4221
      %v4223 = vld [vmem:[%s9] sm:$0x1]
      %v4224 = vmul.f32 %v4222, %v4223
      %v4225 = vsel %vm1130, %v4224, 0.0
      %4226 = vadd.xlane.f32.xlu0 %v4225
      %v4227 = vpop.xlane.xlu0 %4226
      %s4228 = sld [smem:[#allocation2]]
      %v4229 = vstv %s4228
      %v4230 = vadd.f32 %v4227, %v4229
      %s4231 = vtos %v4230
      %s4232 = scalar_lea.smem [#allocation14], %s2869
      %4233 = sst [smem:[%s4232]] %s4231
      %s4234 = sadd.s32 %s135, 3
      %s4235 = sshra.s32 %s4234, 3
      %s4236 = sand.u32 %s4234, 7
      %s4237 = sshra.s32 %s4234, 3
      %s4238 = sand.u32 %s4234, 7
      %s4239 = smul.u32 %s4235, 4
      %s4240 = smul.u32 %s4239, 8
      %s4241 = sadd.s32 %s4240, %s4238
      %s4242 = scalar_lea.vmem [#allocation3], %s4241
      %v4243 = vld [vmem:[%s4242] ss:$8 sm:$0xf]
      %v4244 = vpack.c.bf16 %v4222, %v4222
      %v4245 = vld [vmem:[#allocation12] sm:$0xff]
      %v4246 = vld [vmem:[#allocation12 + $0x8] sm:$0xff]
      %v4247 = vld [vmem:[#allocation12 + $0x10] sm:$0xff]
      %v4248 = vld [vmem:[#allocation12 + $0x18] sm:$0xff]
      %v4249 = vld [vmem:[#allocation12 + $0x20] sm:$0xff]
      %v4250 = vld [vmem:[#allocation12 + $0x28] sm:$0xff]
      %v4251 = vld [vmem:[#allocation12 + $0x30] sm:$0xff]
      %v4252 = vld [vmem:[#allocation12 + $0x38] sm:$0xff]
      %v4253 = vld [vmem:[#allocation12 + $0x40] sm:$0xff]
      %v4254 = vld [vmem:[#allocation12 + $0x48] sm:$0xff]
      %v4255 = vld [vmem:[#allocation12 + $0x50] sm:$0xff]
      %v4256 = vld [vmem:[#allocation12 + $0x58] sm:$0xff]
      %v4257 = vld [vmem:[#allocation12 + $0x60] sm:$0xff]
      %v4258 = vld [vmem:[#allocation12 + $0x68] sm:$0xff]
      %v4259 = vld [vmem:[#allocation12 + $0x70] sm:$0xff]
      %v4260 = vld [vmem:[#allocation12 + $0x78] sm:$0xff]
      %v4261 = vld [vmem:[#allocation12 + $0x80] sm:$0xff]
      %v4262 = vld [vmem:[#allocation12 + $0x88] sm:$0xff]
      %v4263 = vld [vmem:[#allocation12 + $0x90] sm:$0xff]
      %v4264 = vld [vmem:[#allocation12 + $0x98] sm:$0xff]
      %v4265 = vld [vmem:[#allocation12 + $0xa0] sm:$0xff]
      %v4266 = vld [vmem:[#allocation12 + $0xa8] sm:$0xff]
      %v4267 = vld [vmem:[#allocation12 + $0xb0] sm:$0xff]
      %v4268 = vld [vmem:[#allocation12 + $0xb8] sm:$0xff]
      %v4269 = vld [vmem:[#allocation12 + $0xc0] sm:$0xff]
      %v4270 = vld [vmem:[#allocation12 + $0xc8] sm:$0xff]
      %v4271 = vld [vmem:[#allocation12 + $0xd0] sm:$0xff]
      %v4272 = vld [vmem:[#allocation12 + $0xd8] sm:$0xff]
      %v4273 = vld [vmem:[#allocation12 + $0xe0] sm:$0xff]
      %v4274 = vld [vmem:[#allocation12 + $0xe8] sm:$0xff]
      %v4275 = vld [vmem:[#allocation12 + $0xf0] sm:$0xff]
      %v4276 = vld [vmem:[#allocation12 + $0xf8] sm:$0xff]
      %v4277 = vld [vmem:[#allocation12 + $0x100] sm:$0xff]
      %v4278 = vld [vmem:[#allocation12 + $0x108] sm:$0xff]
      %v4279 = vld [vmem:[#allocation12 + $0x110] sm:$0xff]
      %v4280 = vld [vmem:[#allocation12 + $0x118] sm:$0xff]
      %v4281 = vld [vmem:[#allocation12 + $0x120] sm:$0xff]
      %v4282 = vld [vmem:[#allocation12 + $0x128] sm:$0xff]
      %v4283 = vld [vmem:[#allocation12 + $0x130] sm:$0xff]
      %v4284 = vld [vmem:[#allocation12 + $0x138] sm:$0xff]
      %v4285 = vld [vmem:[#allocation12 + $0x140] sm:$0xff]
      %v4286 = vld [vmem:[#allocation12 + $0x148] sm:$0xff]
      %v4287 = vld [vmem:[#allocation12 + $0x150] sm:$0xff]
      %v4288 = vld [vmem:[#allocation12 + $0x158] sm:$0xff]
      %v4289 = vld [vmem:[#allocation12 + $0x160] sm:$0xff]
      %v4290 = vld [vmem:[#allocation12 + $0x168] sm:$0xff]
      %v4291 = vld [vmem:[#allocation12 + $0x170] sm:$0xff]
      %v4292 = vld [vmem:[#allocation12 + $0x178] sm:$0xff]
      %v4293 = vld [vmem:[#allocation12 + $0x180] sm:$0xff]
      %v4294 = vld [vmem:[#allocation12 + $0x188] sm:$0xff]
      %v4295 = vld [vmem:[#allocation12 + $0x190] sm:$0xff]
      %v4296 = vld [vmem:[#allocation12 + $0x198] sm:$0xff]
      %v4297 = vld [vmem:[#allocation12 + $0x1a0] sm:$0xff]
      %v4298 = vld [vmem:[#allocation12 + $0x1a8] sm:$0xff]
      %v4299 = vld [vmem:[#allocation12 + $0x1b0] sm:$0xff]
      %v4300 = vld [vmem:[#allocation12 + $0x1b8] sm:$0xff]
      %v4301 = vld [vmem:[#allocation12 + $0x1c0] sm:$0xff]
      %v4302 = vld [vmem:[#allocation12 + $0x1c8] sm:$0xff]
      %v4303 = vld [vmem:[#allocation12 + $0x1d0] sm:$0xff]
      %v4304 = vld [vmem:[#allocation12 + $0x1d8] sm:$0xff]
      %v4305 = vld [vmem:[#allocation12 + $0x1e0] sm:$0xff]
      %v4306 = vld [vmem:[#allocation12 + $0x1e8] sm:$0xff]
      %v4307 = vld [vmem:[#allocation12 + $0x1f0] sm:$0xff]
      %v4308 = vld [vmem:[#allocation12 + $0x1f8] sm:$0xff]
      %v4309 = vld [vmem:[#allocation12 + $0x200] sm:$0xff]
      %v4310 = vld [vmem:[#allocation12 + $0x208] sm:$0xff]
      %v4311 = vld [vmem:[#allocation12 + $0x210] sm:$0xff]
      %v4312 = vld [vmem:[#allocation12 + $0x218] sm:$0xff]
      %v4313 = vld [vmem:[#allocation12 + $0x220] sm:$0xff]
      %v4314 = vld [vmem:[#allocation12 + $0x228] sm:$0xff]
      %v4315 = vld [vmem:[#allocation12 + $0x230] sm:$0xff]
      %v4316 = vld [vmem:[#allocation12 + $0x238] sm:$0xff]
      %v4317 = vld [vmem:[#allocation12 + $0x240] sm:$0xff]
      %v4318 = vld [vmem:[#allocation12 + $0x248] sm:$0xff]
      %v4319 = vld [vmem:[#allocation12 + $0x250] sm:$0xff]
      %v4320 = vld [vmem:[#allocation12 + $0x258] sm:$0xff]
      %v4321 = vld [vmem:[#allocation12 + $0x260] sm:$0xff]
      %v4322 = vld [vmem:[#allocation12 + $0x268] sm:$0xff]
      %v4323 = vld [vmem:[#allocation12 + $0x270] sm:$0xff]
      %v4324 = vld [vmem:[#allocation12 + $0x278] sm:$0xff]
      %v4325 = vld [vmem:[#allocation12 + $0x280] sm:$0xff]
      %v4326 = vld [vmem:[#allocation12 + $0x288] sm:$0xff]
      %v4327 = vld [vmem:[#allocation12 + $0x290] sm:$0xff]
      %v4328 = vld [vmem:[#allocation12 + $0x298] sm:$0xff]
      %v4329 = vld [vmem:[#allocation12 + $0x2a0] sm:$0xff]
      %v4330 = vld [vmem:[#allocation12 + $0x2a8] sm:$0xff]
      %v4331 = vld [vmem:[#allocation12 + $0x2b0] sm:$0xff]
      %v4332 = vld [vmem:[#allocation12 + $0x2b8] sm:$0xff]
      %v4333 = vld [vmem:[#allocation12 + $0x2c0] sm:$0xff]
      %v4334 = vld [vmem:[#allocation12 + $0x2c8] sm:$0xff]
      %v4335 = vld [vmem:[#allocation12 + $0x2d0] sm:$0xff]
      %v4336 = vld [vmem:[#allocation12 + $0x2d8] sm:$0xff]
      %v4337 = vld [vmem:[#allocation12 + $0x2e0] sm:$0xff]
      %v4338 = vld [vmem:[#allocation12 + $0x2e8] sm:$0xff]
      %v4339 = vld [vmem:[#allocation12 + $0x2f0] sm:$0xff]
      %v4340 = vld [vmem:[#allocation12 + $0x2f8] sm:$0xff]
      %v4341 = vld [vmem:[#allocation12 + $0x300] sm:$0xff]
      %v4342 = vld [vmem:[#allocation12 + $0x308] sm:$0xff]
      %v4343 = vld [vmem:[#allocation12 + $0x310] sm:$0xff]
      %v4344 = vld [vmem:[#allocation12 + $0x318] sm:$0xff]
      %v4345 = vld [vmem:[#allocation12 + $0x320] sm:$0xff]
      %v4346 = vld [vmem:[#allocation12 + $0x328] sm:$0xff]
      %v4347 = vld [vmem:[#allocation12 + $0x330] sm:$0xff]
      %v4348 = vld [vmem:[#allocation12 + $0x338] sm:$0xff]
      %v4349 = vld [vmem:[#allocation12 + $0x340] sm:$0xff]
      %v4350 = vld [vmem:[#allocation12 + $0x348] sm:$0xff]
      %v4351 = vld [vmem:[#allocation12 + $0x350] sm:$0xff]
      %v4352 = vld [vmem:[#allocation12 + $0x358] sm:$0xff]
      %v4353 = vld [vmem:[#allocation12 + $0x360] sm:$0xff]
      %v4354 = vld [vmem:[#allocation12 + $0x368] sm:$0xff]
      %v4355 = vld [vmem:[#allocation12 + $0x370] sm:$0xff]
      %v4356 = vld [vmem:[#allocation12 + $0x378] sm:$0xff]
      %v4357 = vld [vmem:[#allocation12 + $0x380] sm:$0xff]
      %v4358 = vld [vmem:[#allocation12 + $0x388] sm:$0xff]
      %v4359 = vld [vmem:[#allocation12 + $0x390] sm:$0xff]
      %v4360 = vld [vmem:[#allocation12 + $0x398] sm:$0xff]
      %v4361 = vld [vmem:[#allocation12 + $0x3a0] sm:$0xff]
      %v4362 = vld [vmem:[#allocation12 + $0x3a8] sm:$0xff]
      %v4363 = vld [vmem:[#allocation12 + $0x3b0] sm:$0xff]
      %v4364 = vld [vmem:[#allocation12 + $0x3b8] sm:$0xff]
      %v4365 = vld [vmem:[#allocation12 + $0x3c0] sm:$0xff]
      %v4366 = vld [vmem:[#allocation12 + $0x3c8] sm:$0xff]
      %v4367 = vld [vmem:[#allocation12 + $0x3d0] sm:$0xff]
      %v4368 = vld [vmem:[#allocation12 + $0x3d8] sm:$0xff]
      %v4369 = vld [vmem:[#allocation12 + $0x3e0] sm:$0xff]
      %v4370 = vld [vmem:[#allocation12 + $0x3e8] sm:$0xff]
      %v4371 = vld [vmem:[#allocation12 + $0x3f0] sm:$0xff]
      %v4372 = vld [vmem:[#allocation12 + $0x3f8] sm:$0xff]
      %v4501 = vunpack.c.l.b16 %v4245
      %v4502 = vunpack.c.h.b16 %v4245
      %v4503 = vunpack.c.l.b16 %v4246
      %v4504 = vunpack.c.h.b16 %v4246
      %v4505 = vunpack.c.l.b16 %v4247
      %v4506 = vunpack.c.h.b16 %v4247
      %v4507 = vunpack.c.l.b16 %v4248
      %v4508 = vunpack.c.h.b16 %v4248
      %v4509 = vunpack.c.l.b16 %v4249
      %v4510 = vunpack.c.h.b16 %v4249
      %v4511 = vunpack.c.l.b16 %v4250
      %v4512 = vunpack.c.h.b16 %v4250
      %v4513 = vunpack.c.l.b16 %v4251
      %v4514 = vunpack.c.h.b16 %v4251
      %v4515 = vunpack.c.l.b16 %v4252
      %v4516 = vunpack.c.h.b16 %v4252
      %v4517 = vunpack.c.l.b16 %v4253
      %v4518 = vunpack.c.h.b16 %v4253
      %v4519 = vunpack.c.l.b16 %v4254
      %v4520 = vunpack.c.h.b16 %v4254
      %v4521 = vunpack.c.l.b16 %v4255
      %v4522 = vunpack.c.h.b16 %v4255
      %v4523 = vunpack.c.l.b16 %v4256
      %v4524 = vunpack.c.h.b16 %v4256
      %v4525 = vunpack.c.l.b16 %v4257
      %v4526 = vunpack.c.h.b16 %v4257
      %v4527 = vunpack.c.l.b16 %v4258
      %v4528 = vunpack.c.h.b16 %v4258
      %v4529 = vunpack.c.l.b16 %v4259
      %v4530 = vunpack.c.h.b16 %v4259
      %v4531 = vunpack.c.l.b16 %v4260
      %v4532 = vunpack.c.h.b16 %v4260
      %v4533 = vunpack.c.l.b16 %v4261
      %v4534 = vunpack.c.h.b16 %v4261
      %v4535 = vunpack.c.l.b16 %v4262
      %v4536 = vunpack.c.h.b16 %v4262
      %v4537 = vunpack.c.l.b16 %v4263
      %v4538 = vunpack.c.h.b16 %v4263
      %v4539 = vunpack.c.l.b16 %v4264
      %v4540 = vunpack.c.h.b16 %v4264
      %v4541 = vunpack.c.l.b16 %v4265
      %v4542 = vunpack.c.h.b16 %v4265
      %v4543 = vunpack.c.l.b16 %v4266
      %v4544 = vunpack.c.h.b16 %v4266
      %v4545 = vunpack.c.l.b16 %v4267
      %v4546 = vunpack.c.h.b16 %v4267
      %v4547 = vunpack.c.l.b16 %v4268
      %v4548 = vunpack.c.h.b16 %v4268
      %v4549 = vunpack.c.l.b16 %v4269
      %v4550 = vunpack.c.h.b16 %v4269
      %v4551 = vunpack.c.l.b16 %v4270
      %v4552 = vunpack.c.h.b16 %v4270
      %v4553 = vunpack.c.l.b16 %v4271
      %v4554 = vunpack.c.h.b16 %v4271
      %v4555 = vunpack.c.l.b16 %v4272
      %v4556 = vunpack.c.h.b16 %v4272
      %v4557 = vunpack.c.l.b16 %v4273
      %v4558 = vunpack.c.h.b16 %v4273
      %v4559 = vunpack.c.l.b16 %v4274
      %v4560 = vunpack.c.h.b16 %v4274
      %v4561 = vunpack.c.l.b16 %v4275
      %v4562 = vunpack.c.h.b16 %v4275
      %v4563 = vunpack.c.l.b16 %v4276
      %v4564 = vunpack.c.h.b16 %v4276
      %v4565 = vunpack.c.l.b16 %v4277
      %v4566 = vunpack.c.h.b16 %v4277
      %v4567 = vunpack.c.l.b16 %v4278
      %v4568 = vunpack.c.h.b16 %v4278
      %v4569 = vunpack.c.l.b16 %v4279
      %v4570 = vunpack.c.h.b16 %v4279
      %v4571 = vunpack.c.l.b16 %v4280
      %v4572 = vunpack.c.h.b16 %v4280
      %v4573 = vunpack.c.l.b16 %v4281
      %v4574 = vunpack.c.h.b16 %v4281
      %v4575 = vunpack.c.l.b16 %v4282
      %v4576 = vunpack.c.h.b16 %v4282
      %v4577 = vunpack.c.l.b16 %v4283
      %v4578 = vunpack.c.h.b16 %v4283
      %v4579 = vunpack.c.l.b16 %v4284
      %v4580 = vunpack.c.h.b16 %v4284
      %v4581 = vunpack.c.l.b16 %v4285
      %v4582 = vunpack.c.h.b16 %v4285
      %v4583 = vunpack.c.l.b16 %v4286
      %v4584 = vunpack.c.h.b16 %v4286
      %v4585 = vunpack.c.l.b16 %v4287
      %v4586 = vunpack.c.h.b16 %v4287
      %v4587 = vunpack.c.l.b16 %v4288
      %v4588 = vunpack.c.h.b16 %v4288
      %v4589 = vunpack.c.l.b16 %v4289
      %v4590 = vunpack.c.h.b16 %v4289
      %v4591 = vunpack.c.l.b16 %v4290
      %v4592 = vunpack.c.h.b16 %v4290
      %v4593 = vunpack.c.l.b16 %v4291
      %v4594 = vunpack.c.h.b16 %v4291
      %v4595 = vunpack.c.l.b16 %v4292
      %v4596 = vunpack.c.h.b16 %v4292
      %v4597 = vunpack.c.l.b16 %v4293
      %v4598 = vunpack.c.h.b16 %v4293
      %v4599 = vunpack.c.l.b16 %v4294
      %v4600 = vunpack.c.h.b16 %v4294
      %v4601 = vunpack.c.l.b16 %v4295
      %v4602 = vunpack.c.h.b16 %v4295
      %v4603 = vunpack.c.l.b16 %v4296
      %v4604 = vunpack.c.h.b16 %v4296
      %v4605 = vunpack.c.l.b16 %v4297
      %v4606 = vunpack.c.h.b16 %v4297
      %v4607 = vunpack.c.l.b16 %v4298
      %v4608 = vunpack.c.h.b16 %v4298
      %v4609 = vunpack.c.l.b16 %v4299
      %v4610 = vunpack.c.h.b16 %v4299
      %v4611 = vunpack.c.l.b16 %v4300
      %v4612 = vunpack.c.h.b16 %v4300
      %v4613 = vunpack.c.l.b16 %v4301
      %v4614 = vunpack.c.h.b16 %v4301
      %v4615 = vunpack.c.l.b16 %v4302
      %v4616 = vunpack.c.h.b16 %v4302
      %v4617 = vunpack.c.l.b16 %v4303
      %v4618 = vunpack.c.h.b16 %v4303
      %v4619 = vunpack.c.l.b16 %v4304
      %v4620 = vunpack.c.h.b16 %v4304
      %v4621 = vunpack.c.l.b16 %v4305
      %v4622 = vunpack.c.h.b16 %v4305
      %v4623 = vunpack.c.l.b16 %v4306
      %v4624 = vunpack.c.h.b16 %v4306
      %v4625 = vunpack.c.l.b16 %v4307
      %v4626 = vunpack.c.h.b16 %v4307
      %v4627 = vunpack.c.l.b16 %v4308
      %v4628 = vunpack.c.h.b16 %v4308
      %v4629 = vunpack.c.l.b16 %v4309
      %v4630 = vunpack.c.h.b16 %v4309
      %v4631 = vunpack.c.l.b16 %v4310
      %v4632 = vunpack.c.h.b16 %v4310
      %v4633 = vunpack.c.l.b16 %v4311
      %v4634 = vunpack.c.h.b16 %v4311
      %v4635 = vunpack.c.l.b16 %v4312
      %v4636 = vunpack.c.h.b16 %v4312
      %v4637 = vunpack.c.l.b16 %v4313
      %v4638 = vunpack.c.h.b16 %v4313
      %v4639 = vunpack.c.l.b16 %v4314
      %v4640 = vunpack.c.h.b16 %v4314
      %v4641 = vunpack.c.l.b16 %v4315
      %v4642 = vunpack.c.h.b16 %v4315
      %v4643 = vunpack.c.l.b16 %v4316
      %v4644 = vunpack.c.h.b16 %v4316
      %v4645 = vunpack.c.l.b16 %v4317
      %v4646 = vunpack.c.h.b16 %v4317
      %v4647 = vunpack.c.l.b16 %v4318
      %v4648 = vunpack.c.h.b16 %v4318
      %v4649 = vunpack.c.l.b16 %v4319
      %v4650 = vunpack.c.h.b16 %v4319
      %v4651 = vunpack.c.l.b16 %v4320
      %v4652 = vunpack.c.h.b16 %v4320
      %v4653 = vunpack.c.l.b16 %v4321
      %v4654 = vunpack.c.h.b16 %v4321
      %v4655 = vunpack.c.l.b16 %v4322
      %v4656 = vunpack.c.h.b16 %v4322
      %v4657 = vunpack.c.l.b16 %v4323
      %v4658 = vunpack.c.h.b16 %v4323
      %v4659 = vunpack.c.l.b16 %v4324
      %v4660 = vunpack.c.h.b16 %v4324
      %v4661 = vunpack.c.l.b16 %v4325
      %v4662 = vunpack.c.h.b16 %v4325
      %v4663 = vunpack.c.l.b16 %v4326
      %v4664 = vunpack.c.h.b16 %v4326
      %v4665 = vunpack.c.l.b16 %v4327
      %v4666 = vunpack.c.h.b16 %v4327
      %v4667 = vunpack.c.l.b16 %v4328
      %v4668 = vunpack.c.h.b16 %v4328
      %v4669 = vunpack.c.l.b16 %v4329
      %v4670 = vunpack.c.h.b16 %v4329
      %v4671 = vunpack.c.l.b16 %v4330
      %v4672 = vunpack.c.h.b16 %v4330
      %v4673 = vunpack.c.l.b16 %v4331
      %v4674 = vunpack.c.h.b16 %v4331
      %v4675 = vunpack.c.l.b16 %v4332
      %v4676 = vunpack.c.h.b16 %v4332
      %v4677 = vunpack.c.l.b16 %v4333
      %v4678 = vunpack.c.h.b16 %v4333
      %v4679 = vunpack.c.l.b16 %v4334
      %v4680 = vunpack.c.h.b16 %v4334
      %v4681 = vunpack.c.l.b16 %v4335
      %v4682 = vunpack.c.h.b16 %v4335
      %v4683 = vunpack.c.l.b16 %v4336
      %v4684 = vunpack.c.h.b16 %v4336
      %v4685 = vunpack.c.l.b16 %v4337
      %v4686 = vunpack.c.h.b16 %v4337
      %v4687 = vunpack.c.l.b16 %v4338
      %v4688 = vunpack.c.h.b16 %v4338
      %v4689 = vunpack.c.l.b16 %v4339
      %v4690 = vunpack.c.h.b16 %v4339
      %v4691 = vunpack.c.l.b16 %v4340
      %v4692 = vunpack.c.h.b16 %v4340
      %v4693 = vunpack.c.l.b16 %v4341
      %v4694 = vunpack.c.h.b16 %v4341
      %v4695 = vunpack.c.l.b16 %v4342
      %v4696 = vunpack.c.h.b16 %v4342
      %v4697 = vunpack.c.l.b16 %v4343
      %v4698 = vunpack.c.h.b16 %v4343
      %v4699 = vunpack.c.l.b16 %v4344
      %v4700 = vunpack.c.h.b16 %v4344
      %v4701 = vunpack.c.l.b16 %v4345
      %v4702 = vunpack.c.h.b16 %v4345
      %v4703 = vunpack.c.l.b16 %v4346
      %v4704 = vunpack.c.h.b16 %v4346
      %v4705 = vunpack.c.l.b16 %v4347
      %v4706 = vunpack.c.h.b16 %v4347
      %v4707 = vunpack.c.l.b16 %v4348
      %v4708 = vunpack.c.h.b16 %v4348
      %v4709 = vunpack.c.l.b16 %v4349
      %v4710 = vunpack.c.h.b16 %v4349
      %v4711 = vunpack.c.l.b16 %v4350
      %v4712 = vunpack.c.h.b16 %v4350
      %v4713 = vunpack.c.l.b16 %v4351
      %v4714 = vunpack.c.h.b16 %v4351
      %v4715 = vunpack.c.l.b16 %v4352
      %v4716 = vunpack.c.h.b16 %v4352
      %v4717 = vunpack.c.l.b16 %v4353
      %v4718 = vunpack.c.h.b16 %v4353
      %v4719 = vunpack.c.l.b16 %v4354
      %v4720 = vunpack.c.h.b16 %v4354
      %v4721 = vunpack.c.l.b16 %v4355
      %v4722 = vunpack.c.h.b16 %v4355
      %v4723 = vunpack.c.l.b16 %v4356
      %v4724 = vunpack.c.h.b16 %v4356
      %v4725 = vunpack.c.l.b16 %v4357
      %v4726 = vunpack.c.h.b16 %v4357
      %v4727 = vunpack.c.l.b16 %v4358
      %v4728 = vunpack.c.h.b16 %v4358
      %v4729 = vunpack.c.l.b16 %v4359
      %v4730 = vunpack.c.h.b16 %v4359
      %v4731 = vunpack.c.l.b16 %v4360
      %v4732 = vunpack.c.h.b16 %v4360
      %v4733 = vunpack.c.l.b16 %v4361
      %v4734 = vunpack.c.h.b16 %v4361
      %v4735 = vunpack.c.l.b16 %v4362
      %v4736 = vunpack.c.h.b16 %v4362
      %v4737 = vunpack.c.l.b16 %v4363
      %v4738 = vunpack.c.h.b16 %v4363
      %v4739 = vunpack.c.l.b16 %v4364
      %v4740 = vunpack.c.h.b16 %v4364
      %v4741 = vunpack.c.l.b16 %v4365
      %v4742 = vunpack.c.h.b16 %v4365
      %v4743 = vunpack.c.l.b16 %v4366
      %v4744 = vunpack.c.h.b16 %v4366
      %v4745 = vunpack.c.l.b16 %v4367
      %v4746 = vunpack.c.h.b16 %v4367
      %v4747 = vunpack.c.l.b16 %v4368
      %v4748 = vunpack.c.h.b16 %v4368
      %v4749 = vunpack.c.l.b16 %v4369
      %v4750 = vunpack.c.h.b16 %v4369
      %v4751 = vunpack.c.l.b16 %v4370
      %v4752 = vunpack.c.h.b16 %v4370
      %v4753 = vunpack.c.l.b16 %v4371
      %v4754 = vunpack.c.h.b16 %v4371
      %v4755 = vunpack.c.l.b16 %v4372
      %v4756 = vunpack.c.h.b16 %v4372
      %v4757 = vpack.c.b16 %v4509, %v4501
      %v4758 = vpack.c.b16 %v4510, %v4502
      %v4759 = vpack.c.b16 %v4511, %v4503
      %v4760 = vpack.c.b16 %v4512, %v4504
      %v4761 = vpack.c.b16 %v4513, %v4505
      %v4762 = vpack.c.b16 %v4514, %v4506
      %v4763 = vpack.c.b16 %v4515, %v4507
      %v4764 = vpack.c.b16 %v4516, %v4508
      %v4765 = vpack.c.b16 %v4525, %v4517
      %v4766 = vpack.c.b16 %v4526, %v4518
      %v4767 = vpack.c.b16 %v4527, %v4519
      %v4768 = vpack.c.b16 %v4528, %v4520
      %v4769 = vpack.c.b16 %v4529, %v4521
      %v4770 = vpack.c.b16 %v4530, %v4522
      %v4771 = vpack.c.b16 %v4531, %v4523
      %v4772 = vpack.c.b16 %v4532, %v4524
      %v4773 = vpack.c.b16 %v4541, %v4533
      %v4774 = vpack.c.b16 %v4542, %v4534
      %v4775 = vpack.c.b16 %v4543, %v4535
      %v4776 = vpack.c.b16 %v4544, %v4536
      %v4777 = vpack.c.b16 %v4545, %v4537
      %v4778 = vpack.c.b16 %v4546, %v4538
      %v4779 = vpack.c.b16 %v4547, %v4539
      %v4780 = vpack.c.b16 %v4548, %v4540
      %v4781 = vpack.c.b16 %v4557, %v4549
      %v4782 = vpack.c.b16 %v4558, %v4550
      %v4783 = vpack.c.b16 %v4559, %v4551
      %v4784 = vpack.c.b16 %v4560, %v4552
      %v4785 = vpack.c.b16 %v4561, %v4553
      %v4786 = vpack.c.b16 %v4562, %v4554
      %v4787 = vpack.c.b16 %v4563, %v4555
      %v4788 = vpack.c.b16 %v4564, %v4556
      %v4789 = vpack.c.b16 %v4573, %v4565
      %v4790 = vpack.c.b16 %v4574, %v4566
      %v4791 = vpack.c.b16 %v4575, %v4567
      %v4792 = vpack.c.b16 %v4576, %v4568
      %v4793 = vpack.c.b16 %v4577, %v4569
      %v4794 = vpack.c.b16 %v4578, %v4570
      %v4795 = vpack.c.b16 %v4579, %v4571
      %v4796 = vpack.c.b16 %v4580, %v4572
      %v4797 = vpack.c.b16 %v4589, %v4581
      %v4798 = vpack.c.b16 %v4590, %v4582
      %v4799 = vpack.c.b16 %v4591, %v4583
      %v4800 = vpack.c.b16 %v4592, %v4584
      %v4801 = vpack.c.b16 %v4593, %v4585
      %v4802 = vpack.c.b16 %v4594, %v4586
      %v4803 = vpack.c.b16 %v4595, %v4587
      %v4804 = vpack.c.b16 %v4596, %v4588
      %v4805 = vpack.c.b16 %v4605, %v4597
      %v4806 = vpack.c.b16 %v4606, %v4598
      %v4807 = vpack.c.b16 %v4607, %v4599
      %v4808 = vpack.c.b16 %v4608, %v4600
      %v4809 = vpack.c.b16 %v4609, %v4601
      %v4810 = vpack.c.b16 %v4610, %v4602
      %v4811 = vpack.c.b16 %v4611, %v4603
      %v4812 = vpack.c.b16 %v4612, %v4604
      %v4813 = vpack.c.b16 %v4621, %v4613
      %v4814 = vpack.c.b16 %v4622, %v4614
      %v4815 = vpack.c.b16 %v4623, %v4615
      %v4816 = vpack.c.b16 %v4624, %v4616
      %v4817 = vpack.c.b16 %v4625, %v4617
      %v4818 = vpack.c.b16 %v4626, %v4618
      %v4819 = vpack.c.b16 %v4627, %v4619
      %v4820 = vpack.c.b16 %v4628, %v4620
      %v4821 = vpack.c.b16 %v4637, %v4629
      %v4822 = vpack.c.b16 %v4638, %v4630
      %v4823 = vpack.c.b16 %v4639, %v4631
      %v4824 = vpack.c.b16 %v4640, %v4632
      %v4825 = vpack.c.b16 %v4641, %v4633
      %v4826 = vpack.c.b16 %v4642, %v4634
      %v4827 = vpack.c.b16 %v4643, %v4635
      %v4828 = vpack.c.b16 %v4644, %v4636
      %v4829 = vpack.c.b16 %v4653, %v4645
      %v4830 = vpack.c.b16 %v4654, %v4646
      %v4831 = vpack.c.b16 %v4655, %v4647
      %v4832 = vpack.c.b16 %v4656, %v4648
      %v4833 = vpack.c.b16 %v4657, %v4649
      %v4834 = vpack.c.b16 %v4658, %v4650
      %v4835 = vpack.c.b16 %v4659, %v4651
      %v4836 = vpack.c.b16 %v4660, %v4652
      %v4837 = vpack.c.b16 %v4669, %v4661
      %v4838 = vpack.c.b16 %v4670, %v4662
      %v4839 = vpack.c.b16 %v4671, %v4663
      %v4840 = vpack.c.b16 %v4672, %v4664
      %v4841 = vpack.c.b16 %v4673, %v4665
      %v4842 = vpack.c.b16 %v4674, %v4666
      %v4843 = vpack.c.b16 %v4675, %v4667
      %v4844 = vpack.c.b16 %v4676, %v4668
      %v4845 = vpack.c.b16 %v4685, %v4677
      %v4846 = vpack.c.b16 %v4686, %v4678
      %v4847 = vpack.c.b16 %v4687, %v4679
      %v4848 = vpack.c.b16 %v4688, %v4680
      %v4849 = vpack.c.b16 %v4689, %v4681
      %v4850 = vpack.c.b16 %v4690, %v4682
      %v4851 = vpack.c.b16 %v4691, %v4683
      %v4852 = vpack.c.b16 %v4692, %v4684
      %v4853 = vpack.c.b16 %v4701, %v4693
      %v4854 = vpack.c.b16 %v4702, %v4694
      %v4855 = vpack.c.b16 %v4703, %v4695
      %v4856 = vpack.c.b16 %v4704, %v4696
      %v4857 = vpack.c.b16 %v4705, %v4697
      %v4858 = vpack.c.b16 %v4706, %v4698
      %v4859 = vpack.c.b16 %v4707, %v4699
      %v4860 = vpack.c.b16 %v4708, %v4700
      %v4861 = vpack.c.b16 %v4717, %v4709
      %v4862 = vpack.c.b16 %v4718, %v4710
      %v4863 = vpack.c.b16 %v4719, %v4711
      %v4864 = vpack.c.b16 %v4720, %v4712
      %v4865 = vpack.c.b16 %v4721, %v4713
      %v4866 = vpack.c.b16 %v4722, %v4714
      %v4867 = vpack.c.b16 %v4723, %v4715
      %v4868 = vpack.c.b16 %v4724, %v4716
      %v4869 = vpack.c.b16 %v4733, %v4725
      %v4870 = vpack.c.b16 %v4734, %v4726
      %v4871 = vpack.c.b16 %v4735, %v4727
      %v4872 = vpack.c.b16 %v4736, %v4728
      %v4873 = vpack.c.b16 %v4737, %v4729
      %v4874 = vpack.c.b16 %v4738, %v4730
      %v4875 = vpack.c.b16 %v4739, %v4731
      %v4876 = vpack.c.b16 %v4740, %v4732
      %v4877 = vpack.c.b16 %v4749, %v4741
      %v4878 = vpack.c.b16 %v4750, %v4742
      %v4879 = vpack.c.b16 %v4751, %v4743
      %v4880 = vpack.c.b16 %v4752, %v4744
      %v4881 = vpack.c.b16 %v4753, %v4745
      %v4882 = vpack.c.b16 %v4754, %v4746
      %v4883 = vpack.c.b16 %v4755, %v4747
      %v4884 = vpack.c.b16 %v4756, %v4748
      %5013 = vmatpush.bf16.msra.mxu0 %v4813
      %5014 = vmatpush.bf16.msra.mxu0 %v4805
      %5015 = vmatpush.bf16.msra.mxu0 %v4797
      %5016 = vmatpush.bf16.msra.mxu0 %v4789
      %5017 = vmatpush.bf16.msra.mxu0 %v4781
      %5018 = vmatpush.bf16.msra.mxu0 %v4773
      %5019 = vmatpush.bf16.msra.mxu0 %v4765
      %5020 = vmatpush.bf16.msra.mxu0 %v4757
      %5021 = vmatmul.bf16.gmra.mxu0 %v3901
      %v5022 = vpop.f32.mrf.mxu0
      %v5023 = vadd.f32 0.0, %v5022
      %v5024 = vpop.f32.mrf.mxu0
      %5025 = vdwg.mxu0
      %5026 = vmatpush.bf16.msra.mxu0 %v4877
      %5027 = vmatpush.bf16.msra.mxu0 %v4869
      %5028 = vmatpush.bf16.msra.mxu0 %v4861
      %5029 = vmatpush.bf16.msra.mxu0 %v4853
      %5030 = vmatpush.bf16.msra.mxu0 %v4845
      %5031 = vmatpush.bf16.msra.mxu0 %v4837
      %5032 = vmatpush.bf16.msra.mxu0 %v4829
      %5033 = vmatpush.bf16.msra.mxu0 %v4821
      %5034 = vmatmul.bf16.gmra.mxu0 %v4244
      %v5035 = vpop.f32.mrf.mxu0
      %v5036 = vadd.f32 %v5023, %v5035
      %v5037 = vpop.f32.mrf.mxu0
      %5038 = vdwg.mxu0
      %5039 = vmatpush.bf16.msra.mxu0 %v4814
      %5040 = vmatpush.bf16.msra.mxu0 %v4806
      %5041 = vmatpush.bf16.msra.mxu0 %v4798
      %5042 = vmatpush.bf16.msra.mxu0 %v4790
      %5043 = vmatpush.bf16.msra.mxu0 %v4782
      %5044 = vmatpush.bf16.msra.mxu0 %v4774
      %5045 = vmatpush.bf16.msra.mxu0 %v4766
      %5046 = vmatpush.bf16.msra.mxu0 %v4758
      %5047 = vmatmul.bf16.gmra.mxu0 %v3901
      %v5048 = vpop.f32.mrf.mxu0
      %v5049 = vadd.f32 0.0, %v5048
      %v5050 = vpop.f32.mrf.mxu0
      %5051 = vdwg.mxu0
      %5052 = vmatpush.bf16.msra.mxu0 %v4878
      %5053 = vmatpush.bf16.msra.mxu0 %v4870
      %5054 = vmatpush.bf16.msra.mxu0 %v4862
      %5055 = vmatpush.bf16.msra.mxu0 %v4854
      %5056 = vmatpush.bf16.msra.mxu0 %v4846
      %5057 = vmatpush.bf16.msra.mxu0 %v4838
      %5058 = vmatpush.bf16.msra.mxu0 %v4830
      %5059 = vmatpush.bf16.msra.mxu0 %v4822
      %5060 = vmatmul.bf16.gmra.mxu0 %v4244
      %v5061 = vpop.f32.mrf.mxu0
      %v5062 = vadd.f32 %v5049, %v5061
      %v5063 = vpop.f32.mrf.mxu0
      %5064 = vdwg.mxu0
      %5065 = vmatpush.bf16.msra.mxu0 %v4815
      %5066 = vmatpush.bf16.msra.mxu0 %v4807
      %5067 = vmatpush.bf16.msra.mxu0 %v4799
      %5068 = vmatpush.bf16.msra.mxu0 %v4791
      %5069 = vmatpush.bf16.msra.mxu0 %v4783
      %5070 = vmatpush.bf16.msra.mxu0 %v4775
      %5071 = vmatpush.bf16.msra.mxu0 %v4767
      %5072 = vmatpush.bf16.msra.mxu0 %v4759
      %5073 = vmatmul.bf16.gmra.mxu0 %v3901
      %v5074 = vpop.f32.mrf.mxu0
      %v5075 = vadd.f32 0.0, %v5074
      %v5076 = vpop.f32.mrf.mxu0
      %5077 = vdwg.mxu0
      %5078 = vmatpush.bf16.msra.mxu0 %v4879
      %5079 = vmatpush.bf16.msra.mxu0 %v4871
      %5080 = vmatpush.bf16.msra.mxu0 %v4863
      %5081 = vmatpush.bf16.msra.mxu0 %v4855
      %5082 = vmatpush.bf16.msra.mxu0 %v4847
      %5083 = vmatpush.bf16.msra.mxu0 %v4839
      %5084 = vmatpush.bf16.msra.mxu0 %v4831
      %5085 = vmatpush.bf16.msra.mxu0 %v4823
      %5086 = vmatmul.bf16.gmra.mxu0 %v4244
      %v5087 = vpop.f32.mrf.mxu0
      %v5088 = vadd.f32 %v5075, %v5087
      %v5089 = vpop.f32.mrf.mxu0
      %5090 = vdwg.mxu0
      %5091 = vmatpush.bf16.msra.mxu0 %v4816
      %5092 = vmatpush.bf16.msra.mxu0 %v4808
      %5093 = vmatpush.bf16.msra.mxu0 %v4800
      %5094 = vmatpush.bf16.msra.mxu0 %v4792
      %5095 = vmatpush.bf16.msra.mxu0 %v4784
      %5096 = vmatpush.bf16.msra.mxu0 %v4776
      %5097 = vmatpush.bf16.msra.mxu0 %v4768
      %5098 = vmatpush.bf16.msra.mxu0 %v4760
      %5099 = vmatmul.bf16.gmra.mxu0 %v3901
      %v5100 = vpop.f32.mrf.mxu0
      %v5101 = vadd.f32 0.0, %v5100
      %v5102 = vpop.f32.mrf.mxu0
      %5103 = vdwg.mxu0
      %5104 = vmatpush.bf16.msra.mxu0 %v4880
      %5105 = vmatpush.bf16.msra.mxu0 %v4872
      %5106 = vmatpush.bf16.msra.mxu0 %v4864
      %5107 = vmatpush.bf16.msra.mxu0 %v4856
      %5108 = vmatpush.bf16.msra.mxu0 %v4848
      %5109 = vmatpush.bf16.msra.mxu0 %v4840
      %5110 = vmatpush.bf16.msra.mxu0 %v4832
      %5111 = vmatpush.bf16.msra.mxu0 %v4824
      %5112 = vmatmul.bf16.gmra.mxu0 %v4244
      %v5113 = vpop.f32.mrf.mxu0
      %v5114 = vadd.f32 %v5101, %v5113
      %v5115 = vpop.f32.mrf.mxu0
      %5116 = vdwg.mxu0
      %5117 = vmatpush.bf16.msra.mxu0 %v4817
      %5118 = vmatpush.bf16.msra.mxu0 %v4809
      %5119 = vmatpush.bf16.msra.mxu0 %v4801
      %5120 = vmatpush.bf16.msra.mxu0 %v4793
      %5121 = vmatpush.bf16.msra.mxu0 %v4785
      %5122 = vmatpush.bf16.msra.mxu0 %v4777
      %5123 = vmatpush.bf16.msra.mxu0 %v4769
      %5124 = vmatpush.bf16.msra.mxu0 %v4761
      %5125 = vmatmul.bf16.gmra.mxu0 %v3901
      %v5126 = vpop.f32.mrf.mxu0
      %v5127 = vadd.f32 0.0, %v5126
      %v5128 = vpop.f32.mrf.mxu0
      %5129 = vdwg.mxu0
      %5130 = vmatpush.bf16.msra.mxu0 %v4881
      %5131 = vmatpush.bf16.msra.mxu0 %v4873
      %5132 = vmatpush.bf16.msra.mxu0 %v4865
      %5133 = vmatpush.bf16.msra.mxu0 %v4857
      %5134 = vmatpush.bf16.msra.mxu0 %v4849
      %5135 = vmatpush.bf16.msra.mxu0 %v4841
      %5136 = vmatpush.bf16.msra.mxu0 %v4833
      %5137 = vmatpush.bf16.msra.mxu0 %v4825
      %5138 = vmatmul.bf16.gmra.mxu0 %v4244
      %v5139 = vpop.f32.mrf.mxu0
      %v5140 = vadd.f32 %v5127, %v5139
      %v5141 = vpop.f32.mrf.mxu0
      %5142 = vdwg.mxu0
      %5143 = vmatpush.bf16.msra.mxu0 %v4818
      %5144 = vmatpush.bf16.msra.mxu0 %v4810
      %5145 = vmatpush.bf16.msra.mxu0 %v4802
      %5146 = vmatpush.bf16.msra.mxu0 %v4794
      %5147 = vmatpush.bf16.msra.mxu0 %v4786
      %5148 = vmatpush.bf16.msra.mxu0 %v4778
      %5149 = vmatpush.bf16.msra.mxu0 %v4770
      %5150 = vmatpush.bf16.msra.mxu0 %v4762
      %5151 = vmatmul.bf16.gmra.mxu0 %v3901
      %v5152 = vpop.f32.mrf.mxu0
      %v5153 = vadd.f32 0.0, %v5152
      %v5154 = vpop.f32.mrf.mxu0
      %5155 = vdwg.mxu0
      %5156 = vmatpush.bf16.msra.mxu0 %v4882
      %5157 = vmatpush.bf16.msra.mxu0 %v4874
      %5158 = vmatpush.bf16.msra.mxu0 %v4866
      %5159 = vmatpush.bf16.msra.mxu0 %v4858
      %5160 = vmatpush.bf16.msra.mxu0 %v4850
      %5161 = vmatpush.bf16.msra.mxu0 %v4842
      %5162 = vmatpush.bf16.msra.mxu0 %v4834
      %5163 = vmatpush.bf16.msra.mxu0 %v4826
      %5164 = vmatmul.bf16.gmra.mxu0 %v4244
      %v5165 = vpop.f32.mrf.mxu0
      %v5166 = vadd.f32 %v5153, %v5165
      %v5167 = vpop.f32.mrf.mxu0
      %5168 = vdwg.mxu0
      %5169 = vmatpush.bf16.msra.mxu0 %v4819
      %5170 = vmatpush.bf16.msra.mxu0 %v4811
      %5171 = vmatpush.bf16.msra.mxu0 %v4803
      %5172 = vmatpush.bf16.msra.mxu0 %v4795
      %5173 = vmatpush.bf16.msra.mxu0 %v4787
      %5174 = vmatpush.bf16.msra.mxu0 %v4779
      %5175 = vmatpush.bf16.msra.mxu0 %v4771
      %5176 = vmatpush.bf16.msra.mxu0 %v4763
      %5177 = vmatmul.bf16.gmra.mxu0 %v3901
      %v5178 = vpop.f32.mrf.mxu0
      %v5179 = vadd.f32 0.0, %v5178
      %v5180 = vpop.f32.mrf.mxu0
      %5181 = vdwg.mxu0
      %5182 = vmatpush.bf16.msra.mxu0 %v4883
      %5183 = vmatpush.bf16.msra.mxu0 %v4875
      %5184 = vmatpush.bf16.msra.mxu0 %v4867
      %5185 = vmatpush.bf16.msra.mxu0 %v4859
      %5186 = vmatpush.bf16.msra.mxu0 %v4851
      %5187 = vmatpush.bf16.msra.mxu0 %v4843
      %5188 = vmatpush.bf16.msra.mxu0 %v4835
      %5189 = vmatpush.bf16.msra.mxu0 %v4827
      %5190 = vmatmul.bf16.gmra.mxu0 %v4244
      %v5191 = vpop.f32.mrf.mxu0
      %v5192 = vadd.f32 %v5179, %v5191
      %v5193 = vpop.f32.mrf.mxu0
      %5194 = vdwg.mxu0
      %5195 = vmatpush.bf16.msra.mxu0 %v4820
      %5196 = vmatpush.bf16.msra.mxu0 %v4812
      %5197 = vmatpush.bf16.msra.mxu0 %v4804
      %5198 = vmatpush.bf16.msra.mxu0 %v4796
      %5199 = vmatpush.bf16.msra.mxu0 %v4788
      %5200 = vmatpush.bf16.msra.mxu0 %v4780
      %5201 = vmatpush.bf16.msra.mxu0 %v4772
      %5202 = vmatpush.bf16.msra.mxu0 %v4764
      %5203 = vmatmul.bf16.gmra.mxu0 %v3901
      %v5204 = vpop.f32.mrf.mxu0
      %v5205 = vadd.f32 0.0, %v5204
      %v5206 = vpop.f32.mrf.mxu0
      %5207 = vdwg.mxu0
      %5208 = vmatpush.bf16.msra.mxu0 %v4884
      %5209 = vmatpush.bf16.msra.mxu0 %v4876
      %5210 = vmatpush.bf16.msra.mxu0 %v4868
      %5211 = vmatpush.bf16.msra.mxu0 %v4860
      %5212 = vmatpush.bf16.msra.mxu0 %v4852
      %5213 = vmatpush.bf16.msra.mxu0 %v4844
      %5214 = vmatpush.bf16.msra.mxu0 %v4836
      %5215 = vmatpush.bf16.msra.mxu0 %v4828
      %5216 = vmatmul.bf16.gmra.mxu0 %v4244
      %v5217 = vpop.f32.mrf.mxu0
      %v5218 = vadd.f32 %v5205, %v5217
      %v5219 = vpop.f32.mrf.mxu0
      %5220 = vdwg.mxu0
      %v5225 = vrot.slane %v5062, 7
      %v5226 = vrot.slane %v5088, 6
      %v5227 = vrot.slane %v5114, 5
      %v5228 = vsel %vm1130, %v5036, %v5225
      %v5229 = vsel %vm1132, %v5226, %v5227
      %v5230 = vsel %vm1134, %v5228, %v5229
      %v5232 = vadd.f32 %v4243, %v5230
      %v5233 = vxor.u32 %v5232, 2147483648
      %v5234 = vmul.f32 %v5233, 1.442695
      %v5235 = vpow.pop %v5234
      %v5236 = vadd.f32 %v5235, 1.0
      %v5237 = vrcp.pop %v5236
      %v5238 = vmul.f32 %v5236, %v5237
      %v5239 = vsub.f32 1.0, %v5238
      %v5240 = vmul.f32 %v5237, %v5239
      %v5241 = vadd.f32 %v5237, %v5240
      %vm5242 = vweird.f32 %v5236
      %vm5243 = vweird.f32 %v5237
      %vm5244 = vmor %vm5242, %vm5243
      %v5245 = vsel %vm5244, %v5237, %v5241
      %v5246 = vand.u32 2147483647, %v5236
      %vm5247 = vcmp.eq.f32.partialorder %v5246, 8.507059e+37
      %v5248 = vand.u32 %v5236, 2147483648
      %v5249 = vor.u32 1.1754944e-38, %v5248
      %v5250 = vsel %vm5247, %v5249, %v5245
      %v5251 = vmul.f32 1.0, %v5250
      %v5253 = vrot.slane %v5232, 3
      %v5255 = vtanh.pop %v5253
      %v5257 = vrot.slane %v5251, 1
      %v5259 = vmul.f32 %v5257, %v3896
      %v5260 = vmul.f32 %v5251, %v5255
      %v5261 = vadd.f32 %v5259, %v5260
      %v5262 = vtanh.pop %v5261
      %v5263 = vrot.slane %v5251, 2
      %v5265 = vmul.f32 %v5263, %v5262
      %v5266 = vpack.c.bf16 %v5265, %v5265
      %v5267 = vld [vmem:[#allocation11] sm:$0xff]
      %v5268 = vld [vmem:[#allocation11 + $0x8] sm:$0xff]
      %v5269 = vld [vmem:[#allocation11 + $0x10] sm:$0xff]
      %v5270 = vld [vmem:[#allocation11 + $0x18] sm:$0xff]
      %v5271 = vld [vmem:[#allocation11 + $0x20] sm:$0xff]
      %v5272 = vld [vmem:[#allocation11 + $0x28] sm:$0xff]
      %v5273 = vld [vmem:[#allocation11 + $0x30] sm:$0xff]
      %v5274 = vld [vmem:[#allocation11 + $0x38] sm:$0xff]
      %v5275 = vld [vmem:[#allocation11 + $0x40] sm:$0xff]
      %v5276 = vld [vmem:[#allocation11 + $0x48] sm:$0xff]
      %v5277 = vld [vmem:[#allocation11 + $0x50] sm:$0xff]
      %v5278 = vld [vmem:[#allocation11 + $0x58] sm:$0xff]
      %v5279 = vld [vmem:[#allocation11 + $0x60] sm:$0xff]
      %v5280 = vld [vmem:[#allocation11 + $0x68] sm:$0xff]
      %v5281 = vld [vmem:[#allocation11 + $0x70] sm:$0xff]
      %v5282 = vld [vmem:[#allocation11 + $0x78] sm:$0xff]
      %v5283 = vld [vmem:[#allocation11 + $0x80] sm:$0xff]
      %v5284 = vld [vmem:[#allocation11 + $0x88] sm:$0xff]
      %v5285 = vld [vmem:[#allocation11 + $0x90] sm:$0xff]
      %v5286 = vld [vmem:[#allocation11 + $0x98] sm:$0xff]
      %v5287 = vld [vmem:[#allocation11 + $0xa0] sm:$0xff]
      %v5288 = vld [vmem:[#allocation11 + $0xa8] sm:$0xff]
      %v5289 = vld [vmem:[#allocation11 + $0xb0] sm:$0xff]
      %v5290 = vld [vmem:[#allocation11 + $0xb8] sm:$0xff]
      %v5291 = vld [vmem:[#allocation11 + $0xc0] sm:$0xff]
      %v5292 = vld [vmem:[#allocation11 + $0xc8] sm:$0xff]
      %v5293 = vld [vmem:[#allocation11 + $0xd0] sm:$0xff]
      %v5294 = vld [vmem:[#allocation11 + $0xd8] sm:$0xff]
      %v5295 = vld [vmem:[#allocation11 + $0xe0] sm:$0xff]
      %v5296 = vld [vmem:[#allocation11 + $0xe8] sm:$0xff]
      %v5297 = vld [vmem:[#allocation11 + $0xf0] sm:$0xff]
      %v5298 = vld [vmem:[#allocation11 + $0xf8] sm:$0xff]
      %v5331 = vunpack.c.l.b16 %v5267
      %v5332 = vunpack.c.h.b16 %v5267
      %v5333 = vunpack.c.l.b16 %v5268
      %v5334 = vunpack.c.h.b16 %v5268
      %v5335 = vunpack.c.l.b16 %v5269
      %v5336 = vunpack.c.h.b16 %v5269
      %v5337 = vunpack.c.l.b16 %v5270
      %v5338 = vunpack.c.h.b16 %v5270
      %v5339 = vunpack.c.l.b16 %v5271
      %v5340 = vunpack.c.h.b16 %v5271
      %v5341 = vunpack.c.l.b16 %v5272
      %v5342 = vunpack.c.h.b16 %v5272
      %v5343 = vunpack.c.l.b16 %v5273
      %v5344 = vunpack.c.h.b16 %v5273
      %v5345 = vunpack.c.l.b16 %v5274
      %v5346 = vunpack.c.h.b16 %v5274
      %v5347 = vunpack.c.l.b16 %v5275
      %v5348 = vunpack.c.h.b16 %v5275
      %v5349 = vunpack.c.l.b16 %v5276
      %v5350 = vunpack.c.h.b16 %v5276
      %v5351 = vunpack.c.l.b16 %v5277
      %v5352 = vunpack.c.h.b16 %v5277
      %v5353 = vunpack.c.l.b16 %v5278
      %v5354 = vunpack.c.h.b16 %v5278
      %v5355 = vunpack.c.l.b16 %v5279
      %v5356 = vunpack.c.h.b16 %v5279
      %v5357 = vunpack.c.l.b16 %v5280
      %v5358 = vunpack.c.h.b16 %v5280
      %v5359 = vunpack.c.l.b16 %v5281
      %v5360 = vunpack.c.h.b16 %v5281
      %v5361 = vunpack.c.l.b16 %v5282
      %v5362 = vunpack.c.h.b16 %v5282
      %v5363 = vunpack.c.l.b16 %v5283
      %v5364 = vunpack.c.h.b16 %v5283
      %v5365 = vunpack.c.l.b16 %v5284
      %v5366 = vunpack.c.h.b16 %v5284
      %v5367 = vunpack.c.l.b16 %v5285
      %v5368 = vunpack.c.h.b16 %v5285
      %v5369 = vunpack.c.l.b16 %v5286
      %v5370 = vunpack.c.h.b16 %v5286
      %v5371 = vunpack.c.l.b16 %v5287
      %v5372 = vunpack.c.h.b16 %v5287
      %v5373 = vunpack.c.l.b16 %v5288
      %v5374 = vunpack.c.h.b16 %v5288
      %v5375 = vunpack.c.l.b16 %v5289
      %v5376 = vunpack.c.h.b16 %v5289
      %v5377 = vunpack.c.l.b16 %v5290
      %v5378 = vunpack.c.h.b16 %v5290
      %v5379 = vunpack.c.l.b16 %v5291
      %v5380 = vunpack.c.h.b16 %v5291
      %v5381 = vunpack.c.l.b16 %v5292
      %v5382 = vunpack.c.h.b16 %v5292
      %v5383 = vunpack.c.l.b16 %v5293
      %v5384 = vunpack.c.h.b16 %v5293
      %v5385 = vunpack.c.l.b16 %v5294
      %v5386 = vunpack.c.h.b16 %v5294
      %v5387 = vunpack.c.l.b16 %v5295
      %v5388 = vunpack.c.h.b16 %v5295
      %v5389 = vunpack.c.l.b16 %v5296
      %v5390 = vunpack.c.h.b16 %v5296
      %v5391 = vunpack.c.l.b16 %v5297
      %v5392 = vunpack.c.h.b16 %v5297
      %v5393 = vunpack.c.l.b16 %v5298
      %v5394 = vunpack.c.h.b16 %v5298
      %v5395 = vpack.c.b16 %v5335, %v5331
      %v5396 = vpack.c.b16 %v5336, %v5332
      %v5397 = vpack.c.b16 %v5337, %v5333
      %v5398 = vpack.c.b16 %v5338, %v5334
      %v5399 = vpack.c.b16 %v5343, %v5339
      %v5400 = vpack.c.b16 %v5344, %v5340
      %v5401 = vpack.c.b16 %v5345, %v5341
      %v5402 = vpack.c.b16 %v5346, %v5342
      %v5403 = vpack.c.b16 %v5351, %v5347
      %v5404 = vpack.c.b16 %v5352, %v5348
      %v5405 = vpack.c.b16 %v5353, %v5349
      %v5406 = vpack.c.b16 %v5354, %v5350
      %v5407 = vpack.c.b16 %v5359, %v5355
      %v5408 = vpack.c.b16 %v5360, %v5356
      %v5409 = vpack.c.b16 %v5361, %v5357
      %v5410 = vpack.c.b16 %v5362, %v5358
      %v5411 = vpack.c.b16 %v5367, %v5363
      %v5412 = vpack.c.b16 %v5368, %v5364
      %v5413 = vpack.c.b16 %v5369, %v5365
      %v5414 = vpack.c.b16 %v5370, %v5366
      %v5415 = vpack.c.b16 %v5375, %v5371
      %v5416 = vpack.c.b16 %v5376, %v5372
      %v5417 = vpack.c.b16 %v5377, %v5373
      %v5418 = vpack.c.b16 %v5378, %v5374
      %v5419 = vpack.c.b16 %v5383, %v5379
      %v5420 = vpack.c.b16 %v5384, %v5380
      %v5421 = vpack.c.b16 %v5385, %v5381
      %v5422 = vpack.c.b16 %v5386, %v5382
      %v5423 = vpack.c.b16 %v5391, %v5387
      %v5424 = vpack.c.b16 %v5392, %v5388
      %v5425 = vpack.c.b16 %v5393, %v5389
      %v5426 = vpack.c.b16 %v5394, %v5390
      %5459 = vmatpush.bf16.msra.mxu0 %v5423
      %5460 = vmatpush.bf16.msra.mxu0 %v5419
      %5461 = vmatpush.bf16.msra.mxu0 %v5415
      %5462 = vmatpush.bf16.msra.mxu0 %v5411
      %5463 = vmatpush.bf16.msra.mxu0 %v5407
      %5464 = vmatpush.bf16.msra.mxu0 %v5403
      %5465 = vmatpush.bf16.msra.mxu0 %v5399
      %5466 = vmatpush.bf16.msra.mxu0 %v5395
      %5467 = vmatmul.bf16.gmra.mxu0 %v5266
      %v5468 = vpop.f32.mrf.mxu0
      %v5469 = vadd.f32 %v5140, %v5468
      %v5470 = vpop.f32.mrf.mxu0
      %5471 = vdwg.mxu0
      %5472 = vmatpush.bf16.msra.mxu0 %v5424
      %5473 = vmatpush.bf16.msra.mxu0 %v5420
      %5474 = vmatpush.bf16.msra.mxu0 %v5416
      %5475 = vmatpush.bf16.msra.mxu0 %v5412
      %5476 = vmatpush.bf16.msra.mxu0 %v5408
      %5477 = vmatpush.bf16.msra.mxu0 %v5404
      %5478 = vmatpush.bf16.msra.mxu0 %v5400
      %5479 = vmatpush.bf16.msra.mxu0 %v5396
      %5480 = vmatmul.bf16.gmra.mxu0 %v5266
      %v5481 = vpop.f32.mrf.mxu0
      %v5482 = vadd.f32 %v5166, %v5481
      %v5483 = vpop.f32.mrf.mxu0
      %5484 = vdwg.mxu0
      %5485 = vmatpush.bf16.msra.mxu0 %v5425
      %5486 = vmatpush.bf16.msra.mxu0 %v5421
      %5487 = vmatpush.bf16.msra.mxu0 %v5417
      %5488 = vmatpush.bf16.msra.mxu0 %v5413
      %5489 = vmatpush.bf16.msra.mxu0 %v5409
      %5490 = vmatpush.bf16.msra.mxu0 %v5405
      %5491 = vmatpush.bf16.msra.mxu0 %v5401
      %5492 = vmatpush.bf16.msra.mxu0 %v5397
      %5493 = vmatmul.bf16.gmra.mxu0 %v5266
      %v5494 = vpop.f32.mrf.mxu0
      %v5495 = vadd.f32 %v5192, %v5494
      %v5496 = vpop.f32.mrf.mxu0
      %5497 = vdwg.mxu0
      %5498 = vmatpush.bf16.msra.mxu0 %v5426
      %5499 = vmatpush.bf16.msra.mxu0 %v5422
      %5500 = vmatpush.bf16.msra.mxu0 %v5418
      %5501 = vmatpush.bf16.msra.mxu0 %v5414
      %5502 = vmatpush.bf16.msra.mxu0 %v5410
      %5503 = vmatpush.bf16.msra.mxu0 %v5406
      %5504 = vmatpush.bf16.msra.mxu0 %v5402
      %5505 = vmatpush.bf16.msra.mxu0 %v5398
      %5506 = vmatmul.bf16.gmra.mxu0 %v5266
      %v5507 = vpop.f32.mrf.mxu0
      %v5508 = vadd.f32 %v5218, %v5507
      %v5509 = vpop.f32.mrf.mxu0
      %5510 = vdwg.mxu0
      %v5511 = vld [vmem:[%s8] sm:$0xf]
      %v5513 = vperm.slane %v5511, 0
      %v5514 = vperm.slane %v5511, 1
      %v5515 = vperm.slane %v5511, 2
      %v5516 = vperm.slane %v5511, 3
      %v5521 = vadd.f32 %v5469, %v5513
      %v5522 = vadd.f32 %v5482, %v5514
      %v5523 = vadd.f32 %v5495, %v5515
      %v5524 = vadd.f32 %v5508, %v5516
      %v5525 = vxor.u32 %v5521, 2147483648
      %v5526 = vxor.u32 %v5522, 2147483648
      %v5527 = vxor.u32 %v5523, 2147483648
      %v5528 = vmul.f32 %v5525, 1.442695
      %v5529 = vpow.pop %v5528
      %v5530 = vmul.f32 %v5526, 1.442695
      %v5531 = vpow.pop %v5530
      %v5532 = vmul.f32 %v5527, 1.442695
      %v5533 = vpow.pop %v5532
      %v5534 = vadd.f32 %v5529, 1.0
      %v5535 = vadd.f32 %v5531, 1.0
      %v5536 = vadd.f32 %v5533, 1.0
      %v5537 = vrcp.pop %v5534
      %v5538 = vmul.f32 %v5534, %v5537
      %v5539 = vsub.f32 1.0, %v5538
      %v5540 = vmul.f32 %v5537, %v5539
      %v5541 = vadd.f32 %v5537, %v5540
      %vm5542 = vweird.f32 %v5534
      %vm5543 = vweird.f32 %v5537
      %vm5544 = vmor %vm5542, %vm5543
      %v5545 = vsel %vm5544, %v5537, %v5541
      %v5546 = vand.u32 2147483647, %v5534
      %vm5547 = vcmp.eq.f32.partialorder %v5546, 8.507059e+37
      %v5548 = vand.u32 %v5534, 2147483648
      %v5549 = vor.u32 1.1754944e-38, %v5548
      %v5550 = vsel %vm5547, %v5549, %v5545
      %v5551 = vmul.f32 1.0, %v5550
      %v5552 = vrcp.pop %v5535
      %v5553 = vmul.f32 %v5535, %v5552
      %v5554 = vsub.f32 1.0, %v5553
      %v5555 = vmul.f32 %v5552, %v5554
      %v5556 = vadd.f32 %v5552, %v5555
      %vm5557 = vweird.f32 %v5535
      %vm5558 = vweird.f32 %v5552
      %vm5559 = vmor %vm5557, %vm5558
      %v5560 = vsel %vm5559, %v5552, %v5556
      %v5561 = vand.u32 2147483647, %v5535
      %vm5562 = vcmp.eq.f32.partialorder %v5561, 8.507059e+37
      %v5563 = vand.u32 %v5535, 2147483648
      %v5564 = vor.u32 1.1754944e-38, %v5563
      %v5565 = vsel %vm5562, %v5564, %v5560
      %v5566 = vmul.f32 1.0, %v5565
      %v5567 = vrcp.pop %v5536
      %v5568 = vmul.f32 %v5536, %v5567
      %v5569 = vsub.f32 1.0, %v5568
      %v5570 = vmul.f32 %v5567, %v5569
      %v5571 = vadd.f32 %v5567, %v5570
      %vm5572 = vweird.f32 %v5536
      %vm5573 = vweird.f32 %v5567
      %vm5574 = vmor %vm5572, %vm5573
      %v5575 = vsel %vm5574, %v5567, %v5571
      %v5576 = vand.u32 2147483647, %v5536
      %vm5577 = vcmp.eq.f32.partialorder %v5576, 8.507059e+37
      %v5578 = vand.u32 %v5536, 2147483648
      %v5579 = vor.u32 1.1754944e-38, %v5578
      %v5580 = vsel %vm5577, %v5579, %v5575
      %v5581 = vmul.f32 1.0, %v5580
      %v5582 = vtanh.pop %v5524
      %v5583 = vmul.f32 %v5566, %v4220
      %v5584 = vmul.f32 %v5551, %v5582
      %v5585 = vadd.f32 %v5583, %v5584
      %v5586 = vtanh.pop %v5585
      %v5587 = vmul.f32 %v5581, %v5586
      %v5588 = vld [vmem:[%s9] sm:$0x1]
      %v5589 = vmul.f32 %v5587, %v5588
      %v5590 = vsel %vm1130, %v5589, 0.0
      %5591 = vadd.xlane.f32.xlu0 %v5590
      %v5592 = vpop.xlane.xlu0 %5591
      %s5593 = sld [smem:[#allocation2]]
      %v5594 = vstv %s5593
      %v5595 = vadd.f32 %v5592, %v5594
      %s5596 = vtos %v5595
      %s5597 = scalar_lea.smem [#allocation14], %s4234
      %5598 = sst [smem:[%s5597]] %s5596
    $region70: #{tpu_custom_call.1} parent=1 // loop_footer
      %s130 = sadd.s32 1, %s126
    $region71: #{tpu_custom_call.1} parent=1 // loop_footer_branch
      %125 = sbr.rel target = $region67
    $region72: #{tpu_custom_call.1} parent=1 // loop_exit
      _
    %s5599 = sld [smem:[#allocation14 + $0x7]]
    %v5600 = vstv %s5599
    loop: start=8, step=1, limit=10
    $region73: #{tpu_custom_call.1} parent=1 // loop_pre_header
      _
    $region74: #{tpu_custom_call.1} parent=1 // loop_header
      %s5602 = sphi 8, %s5606
      %p5603 = scmp.ge.s32.totalorder %s5602, 10
      %v5607 = vphi %v131, %v6684
      %v5608 = vphi %v132, %v6682
      %v5609 = vphi %v133, %v7006
      %v5610 = vphi %v134, %v7004
      %v5611 = vphi %v5600, %v7015
    $region75: #{tpu_custom_call.1} parent=1 // loop_header_branch
      %5605 = sbr.rel (%p5603) target = $region79
    $region76: #{tpu_custom_call.1} parent=1 // loop_body
      %v5612 = vld [vmem:[%s4] sm:$0xf]
      %v5614 = vperm.slane %v5612, 0
      %v5615 = vperm.slane %v5612, 1
      %v5616 = vperm.slane %v5612, 2
      %v5617 = vperm.slane %v5612, 3
      %v5622 = vmul.f32 %v5611, %v5614
      %v5623 = vmul.f32 %v5611, %v5615
      %v5624 = vmul.f32 %v5611, %v5616
      %v5625 = vmul.f32 %v5611, %v5617
      %v5626 = vld [vmem:[#allocation9] sm:$0xf]
      %v5628 = vperm.slane %v5626, 0
      %v5629 = vperm.slane %v5626, 1
      %v5630 = vperm.slane %v5626, 2
      %v5631 = vperm.slane %v5626, 3
      %v5636 = vadd.f32 %v5622, %v5628
      %v5637 = vadd.f32 %v5623, %v5629
      %v5638 = vadd.f32 %v5624, %v5630
      %v5639 = vadd.f32 %v5625, %v5631
      %v5640 = vpack.c.bf16 %v5607, %v5607
      %v5641 = vpack.c.bf16 %v5609, %v5609
      %v5642 = vld [vmem:[#allocation12] sm:$0xff]
      %v5643 = vld [vmem:[#allocation12 + $0x8] sm:$0xff]
      %v5644 = vld [vmem:[#allocation12 + $0x10] sm:$0xff]
      %v5645 = vld [vmem:[#allocation12 + $0x18] sm:$0xff]
      %v5646 = vld [vmem:[#allocation12 + $0x20] sm:$0xff]
      %v5647 = vld [vmem:[#allocation12 + $0x28] sm:$0xff]
      %v5648 = vld [vmem:[#allocation12 + $0x30] sm:$0xff]
      %v5649 = vld [vmem:[#allocation12 + $0x38] sm:$0xff]
      %v5650 = vld [vmem:[#allocation12 + $0x40] sm:$0xff]
      %v5651 = vld [vmem:[#allocation12 + $0x48] sm:$0xff]
      %v5652 = vld [vmem:[#allocation12 + $0x50] sm:$0xff]
      %v5653 = vld [vmem:[#allocation12 + $0x58] sm:$0xff]
      %v5654 = vld [vmem:[#allocation12 + $0x60] sm:$0xff]
      %v5655 = vld [vmem:[#allocation12 + $0x68] sm:$0xff]
      %v5656 = vld [vmem:[#allocation12 + $0x70] sm:$0xff]
      %v5657 = vld [vmem:[#allocation12 + $0x78] sm:$0xff]
      %v5658 = vld [vmem:[#allocation12 + $0x80] sm:$0xff]
      %v5659 = vld [vmem:[#allocation12 + $0x88] sm:$0xff]
      %v5660 = vld [vmem:[#allocation12 + $0x90] sm:$0xff]
      %v5661 = vld [vmem:[#allocation12 + $0x98] sm:$0xff]
      %v5662 = vld [vmem:[#allocation12 + $0xa0] sm:$0xff]
      %v5663 = vld [vmem:[#allocation12 + $0xa8] sm:$0xff]
      %v5664 = vld [vmem:[#allocation12 + $0xb0] sm:$0xff]
      %v5665 = vld [vmem:[#allocation12 + $0xb8] sm:$0xff]
      %v5666 = vld [vmem:[#allocation12 + $0xc0] sm:$0xff]
      %v5667 = vld [vmem:[#allocation12 + $0xc8] sm:$0xff]
      %v5668 = vld [vmem:[#allocation12 + $0xd0] sm:$0xff]
      %v5669 = vld [vmem:[#allocation12 + $0xd8] sm:$0xff]
      %v5670 = vld [vmem:[#allocation12 + $0xe0] sm:$0xff]
      %v5671 = vld [vmem:[#allocation12 + $0xe8] sm:$0xff]
      %v5672 = vld [vmem:[#allocation12 + $0xf0] sm:$0xff]
      %v5673 = vld [vmem:[#allocation12 + $0xf8] sm:$0xff]
      %v5674 = vld [vmem:[#allocation12 + $0x100] sm:$0xff]
      %v5675 = vld [vmem:[#allocation12 + $0x108] sm:$0xff]
      %v5676 = vld [vmem:[#allocation12 + $0x110] sm:$0xff]
      %v5677 = vld [vmem:[#allocation12 + $0x118] sm:$0xff]
      %v5678 = vld [vmem:[#allocation12 + $0x120] sm:$0xff]
      %v5679 = vld [vmem:[#allocation12 + $0x128] sm:$0xff]
      %v5680 = vld [vmem:[#allocation12 + $0x130] sm:$0xff]
      %v5681 = vld [vmem:[#allocation12 + $0x138] sm:$0xff]
      %v5682 = vld [vmem:[#allocation12 + $0x140] sm:$0xff]
      %v5683 = vld [vmem:[#allocation12 + $0x148] sm:$0xff]
      %v5684 = vld [vmem:[#allocation12 + $0x150] sm:$0xff]
      %v5685 = vld [vmem:[#allocation12 + $0x158] sm:$0xff]
      %v5686 = vld [vmem:[#allocation12 + $0x160] sm:$0xff]
      %v5687 = vld [vmem:[#allocation12 + $0x168] sm:$0xff]
      %v5688 = vld [vmem:[#allocation12 + $0x170] sm:$0xff]
      %v5689 = vld [vmem:[#allocation12 + $0x178] sm:$0xff]
      %v5690 = vld [vmem:[#allocation12 + $0x180] sm:$0xff]
      %v5691 = vld [vmem:[#allocation12 + $0x188] sm:$0xff]
      %v5692 = vld [vmem:[#allocation12 + $0x190] sm:$0xff]
      %v5693 = vld [vmem:[#allocation12 + $0x198] sm:$0xff]
      %v5694 = vld [vmem:[#allocation12 + $0x1a0] sm:$0xff]
      %v5695 = vld [vmem:[#allocation12 + $0x1a8] sm:$0xff]
      %v5696 = vld [vmem:[#allocation12 + $0x1b0] sm:$0xff]
      %v5697 = vld [vmem:[#allocation12 + $0x1b8] sm:$0xff]
      %v5698 = vld [vmem:[#allocation12 + $0x1c0] sm:$0xff]
      %v5699 = vld [vmem:[#allocation12 + $0x1c8] sm:$0xff]
      %v5700 = vld [vmem:[#allocation12 + $0x1d0] sm:$0xff]
      %v5701 = vld [vmem:[#allocation12 + $0x1d8] sm:$0xff]
      %v5702 = vld [vmem:[#allocation12 + $0x1e0] sm:$0xff]
      %v5703 = vld [vmem:[#allocation12 + $0x1e8] sm:$0xff]
      %v5704 = vld [vmem:[#allocation12 + $0x1f0] sm:$0xff]
      %v5705 = vld [vmem:[#allocation12 + $0x1f8] sm:$0xff]
      %v5706 = vld [vmem:[#allocation12 + $0x200] sm:$0xff]
      %v5707 = vld [vmem:[#allocation12 + $0x208] sm:$0xff]
      %v5708 = vld [vmem:[#allocation12 + $0x210] sm:$0xff]
      %v5709 = vld [vmem:[#allocation12 + $0x218] sm:$0xff]
      %v5710 = vld [vmem:[#allocation12 + $0x220] sm:$0xff]
      %v5711 = vld [vmem:[#allocation12 + $0x228] sm:$0xff]
      %v5712 = vld [vmem:[#allocation12 + $0x230] sm:$0xff]
      %v5713 = vld [vmem:[#allocation12 + $0x238] sm:$0xff]
      %v5714 = vld [vmem:[#allocation12 + $0x240] sm:$0xff]
      %v5715 = vld [vmem:[#allocation12 + $0x248] sm:$0xff]
      %v5716 = vld [vmem:[#allocation12 + $0x250] sm:$0xff]
      %v5717 = vld [vmem:[#allocation12 + $0x258] sm:$0xff]
      %v5718 = vld [vmem:[#allocation12 + $0x260] sm:$0xff]
      %v5719 = vld [vmem:[#allocation12 + $0x268] sm:$0xff]
      %v5720 = vld [vmem:[#allocation12 + $0x270] sm:$0xff]
      %v5721 = vld [vmem:[#allocation12 + $0x278] sm:$0xff]
      %v5722 = vld [vmem:[#allocation12 + $0x280] sm:$0xff]
      %v5723 = vld [vmem:[#allocation12 + $0x288] sm:$0xff]
      %v5724 = vld [vmem:[#allocation12 + $0x290] sm:$0xff]
      %v5725 = vld [vmem:[#allocation12 + $0x298] sm:$0xff]
      %v5726 = vld [vmem:[#allocation12 + $0x2a0] sm:$0xff]
      %v5727 = vld [vmem:[#allocation12 + $0x2a8] sm:$0xff]
      %v5728 = vld [vmem:[#allocation12 + $0x2b0] sm:$0xff]
      %v5729 = vld [vmem:[#allocation12 + $0x2b8] sm:$0xff]
      %v5730 = vld [vmem:[#allocation12 + $0x2c0] sm:$0xff]
      %v5731 = vld [vmem:[#allocation12 + $0x2c8] sm:$0xff]
      %v5732 = vld [vmem:[#allocation12 + $0x2d0] sm:$0xff]
      %v5733 = vld [vmem:[#allocation12 + $0x2d8] sm:$0xff]
      %v5734 = vld [vmem:[#allocation12 + $0x2e0] sm:$0xff]
      %v5735 = vld [vmem:[#allocation12 + $0x2e8] sm:$0xff]
      %v5736 = vld [vmem:[#allocation12 + $0x2f0] sm:$0xff]
      %v5737 = vld [vmem:[#allocation12 + $0x2f8] sm:$0xff]
      %v5738 = vld [vmem:[#allocation12 + $0x300] sm:$0xff]
      %v5739 = vld [vmem:[#allocation12 + $0x308] sm:$0xff]
      %v5740 = vld [vmem:[#allocation12 + $0x310] sm:$0xff]
      %v5741 = vld [vmem:[#allocation12 + $0x318] sm:$0xff]
      %v5742 = vld [vmem:[#allocation12 + $0x320] sm:$0xff]
      %v5743 = vld [vmem:[#allocation12 + $0x328] sm:$0xff]
      %v5744 = vld [vmem:[#allocation12 + $0x330] sm:$0xff]
      %v5745 = vld [vmem:[#allocation12 + $0x338] sm:$0xff]
      %v5746 = vld [vmem:[#allocation12 + $0x340] sm:$0xff]
      %v5747 = vld [vmem:[#allocation12 + $0x348] sm:$0xff]
      %v5748 = vld [vmem:[#allocation12 + $0x350] sm:$0xff]
      %v5749 = vld [vmem:[#allocation12 + $0x358] sm:$0xff]
      %v5750 = vld [vmem:[#allocation12 + $0x360] sm:$0xff]
      %v5751 = vld [vmem:[#allocation12 + $0x368] sm:$0xff]
      %v5752 = vld [vmem:[#allocation12 + $0x370] sm:$0xff]
      %v5753 = vld [vmem:[#allocation12 + $0x378] sm:$0xff]
      %v5754 = vld [vmem:[#allocation12 + $0x380] sm:$0xff]
      %v5755 = vld [vmem:[#allocation12 + $0x388] sm:$0xff]
      %v5756 = vld [vmem:[#allocation12 + $0x390] sm:$0xff]
      %v5757 = vld [vmem:[#allocation12 + $0x398] sm:$0xff]
      %v5758 = vld [vmem:[#allocation12 + $0x3a0] sm:$0xff]
      %v5759 = vld [vmem:[#allocation12 + $0x3a8] sm:$0xff]
      %v5760 = vld [vmem:[#allocation12 + $0x3b0] sm:$0xff]
      %v5761 = vld [vmem:[#allocation12 + $0x3b8] sm:$0xff]
      %v5762 = vld [vmem:[#allocation12 + $0x3c0] sm:$0xff]
      %v5763 = vld [vmem:[#allocation12 + $0x3c8] sm:$0xff]
      %v5764 = vld [vmem:[#allocation12 + $0x3d0] sm:$0xff]
      %v5765 = vld [vmem:[#allocation12 + $0x3d8] sm:$0xff]
      %v5766 = vld [vmem:[#allocation12 + $0x3e0] sm:$0xff]
      %v5767 = vld [vmem:[#allocation12 + $0x3e8] sm:$0xff]
      %v5768 = vld [vmem:[#allocation12 + $0x3f0] sm:$0xff]
      %v5769 = vld [vmem:[#allocation12 + $0x3f8] sm:$0xff]
      %v5898 = vunpack.c.l.b16 %v5642
      %v5899 = vunpack.c.h.b16 %v5642
      %v5900 = vunpack.c.l.b16 %v5643
      %v5901 = vunpack.c.h.b16 %v5643
      %v5902 = vunpack.c.l.b16 %v5644
      %v5903 = vunpack.c.h.b16 %v5644
      %v5904 = vunpack.c.l.b16 %v5645
      %v5905 = vunpack.c.h.b16 %v5645
      %v5906 = vunpack.c.l.b16 %v5646
      %v5907 = vunpack.c.h.b16 %v5646
      %v5908 = vunpack.c.l.b16 %v5647
      %v5909 = vunpack.c.h.b16 %v5647
      %v5910 = vunpack.c.l.b16 %v5648
      %v5911 = vunpack.c.h.b16 %v5648
      %v5912 = vunpack.c.l.b16 %v5649
      %v5913 = vunpack.c.h.b16 %v5649
      %v5914 = vunpack.c.l.b16 %v5650
      %v5915 = vunpack.c.h.b16 %v5650
      %v5916 = vunpack.c.l.b16 %v5651
      %v5917 = vunpack.c.h.b16 %v5651
      %v5918 = vunpack.c.l.b16 %v5652
      %v5919 = vunpack.c.h.b16 %v5652
      %v5920 = vunpack.c.l.b16 %v5653
      %v5921 = vunpack.c.h.b16 %v5653
      %v5922 = vunpack.c.l.b16 %v5654
      %v5923 = vunpack.c.h.b16 %v5654
      %v5924 = vunpack.c.l.b16 %v5655
      %v5925 = vunpack.c.h.b16 %v5655
      %v5926 = vunpack.c.l.b16 %v5656
      %v5927 = vunpack.c.h.b16 %v5656
      %v5928 = vunpack.c.l.b16 %v5657
      %v5929 = vunpack.c.h.b16 %v5657
      %v5930 = vunpack.c.l.b16 %v5658
      %v5931 = vunpack.c.h.b16 %v5658
      %v5932 = vunpack.c.l.b16 %v5659
      %v5933 = vunpack.c.h.b16 %v5659
      %v5934 = vunpack.c.l.b16 %v5660
      %v5935 = vunpack.c.h.b16 %v5660
      %v5936 = vunpack.c.l.b16 %v5661
      %v5937 = vunpack.c.h.b16 %v5661
      %v5938 = vunpack.c.l.b16 %v5662
      %v5939 = vunpack.c.h.b16 %v5662
      %v5940 = vunpack.c.l.b16 %v5663
      %v5941 = vunpack.c.h.b16 %v5663
      %v5942 = vunpack.c.l.b16 %v5664
      %v5943 = vunpack.c.h.b16 %v5664
      %v5944 = vunpack.c.l.b16 %v5665
      %v5945 = vunpack.c.h.b16 %v5665
      %v5946 = vunpack.c.l.b16 %v5666
      %v5947 = vunpack.c.h.b16 %v5666
      %v5948 = vunpack.c.l.b16 %v5667
      %v5949 = vunpack.c.h.b16 %v5667
      %v5950 = vunpack.c.l.b16 %v5668
      %v5951 = vunpack.c.h.b16 %v5668
      %v5952 = vunpack.c.l.b16 %v5669
      %v5953 = vunpack.c.h.b16 %v5669
      %v5954 = vunpack.c.l.b16 %v5670
      %v5955 = vunpack.c.h.b16 %v5670
      %v5956 = vunpack.c.l.b16 %v5671
      %v5957 = vunpack.c.h.b16 %v5671
      %v5958 = vunpack.c.l.b16 %v5672
      %v5959 = vunpack.c.h.b16 %v5672
      %v5960 = vunpack.c.l.b16 %v5673
      %v5961 = vunpack.c.h.b16 %v5673
      %v5962 = vunpack.c.l.b16 %v5674
      %v5963 = vunpack.c.h.b16 %v5674
      %v5964 = vunpack.c.l.b16 %v5675
      %v5965 = vunpack.c.h.b16 %v5675
      %v5966 = vunpack.c.l.b16 %v5676
      %v5967 = vunpack.c.h.b16 %v5676
      %v5968 = vunpack.c.l.b16 %v5677
      %v5969 = vunpack.c.h.b16 %v5677
      %v5970 = vunpack.c.l.b16 %v5678
      %v5971 = vunpack.c.h.b16 %v5678
      %v5972 = vunpack.c.l.b16 %v5679
      %v5973 = vunpack.c.h.b16 %v5679
      %v5974 = vunpack.c.l.b16 %v5680
      %v5975 = vunpack.c.h.b16 %v5680
      %v5976 = vunpack.c.l.b16 %v5681
      %v5977 = vunpack.c.h.b16 %v5681
      %v5978 = vunpack.c.l.b16 %v5682
      %v5979 = vunpack.c.h.b16 %v5682
      %v5980 = vunpack.c.l.b16 %v5683
      %v5981 = vunpack.c.h.b16 %v5683
      %v5982 = vunpack.c.l.b16 %v5684
      %v5983 = vunpack.c.h.b16 %v5684
      %v5984 = vunpack.c.l.b16 %v5685
      %v5985 = vunpack.c.h.b16 %v5685
      %v5986 = vunpack.c.l.b16 %v5686
      %v5987 = vunpack.c.h.b16 %v5686
      %v5988 = vunpack.c.l.b16 %v5687
      %v5989 = vunpack.c.h.b16 %v5687
      %v5990 = vunpack.c.l.b16 %v5688
      %v5991 = vunpack.c.h.b16 %v5688
      %v5992 = vunpack.c.l.b16 %v5689
      %v5993 = vunpack.c.h.b16 %v5689
      %v5994 = vunpack.c.l.b16 %v5690
      %v5995 = vunpack.c.h.b16 %v5690
      %v5996 = vunpack.c.l.b16 %v5691
      %v5997 = vunpack.c.h.b16 %v5691
      %v5998 = vunpack.c.l.b16 %v5692
      %v5999 = vunpack.c.h.b16 %v5692
      %v6000 = vunpack.c.l.b16 %v5693
      %v6001 = vunpack.c.h.b16 %v5693
      %v6002 = vunpack.c.l.b16 %v5694
      %v6003 = vunpack.c.h.b16 %v5694
      %v6004 = vunpack.c.l.b16 %v5695
      %v6005 = vunpack.c.h.b16 %v5695
      %v6006 = vunpack.c.l.b16 %v5696
      %v6007 = vunpack.c.h.b16 %v5696
      %v6008 = vunpack.c.l.b16 %v5697
      %v6009 = vunpack.c.h.b16 %v5697
      %v6010 = vunpack.c.l.b16 %v5698
      %v6011 = vunpack.c.h.b16 %v5698
      %v6012 = vunpack.c.l.b16 %v5699
      %v6013 = vunpack.c.h.b16 %v5699
      %v6014 = vunpack.c.l.b16 %v5700
      %v6015 = vunpack.c.h.b16 %v5700
      %v6016 = vunpack.c.l.b16 %v5701
      %v6017 = vunpack.c.h.b16 %v5701
      %v6018 = vunpack.c.l.b16 %v5702
      %v6019 = vunpack.c.h.b16 %v5702
      %v6020 = vunpack.c.l.b16 %v5703
      %v6021 = vunpack.c.h.b16 %v5703
      %v6022 = vunpack.c.l.b16 %v5704
      %v6023 = vunpack.c.h.b16 %v5704
      %v6024 = vunpack.c.l.b16 %v5705
      %v6025 = vunpack.c.h.b16 %v5705
      %v6026 = vunpack.c.l.b16 %v5706
      %v6027 = vunpack.c.h.b16 %v5706
      %v6028 = vunpack.c.l.b16 %v5707
      %v6029 = vunpack.c.h.b16 %v5707
      %v6030 = vunpack.c.l.b16 %v5708
      %v6031 = vunpack.c.h.b16 %v5708
      %v6032 = vunpack.c.l.b16 %v5709
      %v6033 = vunpack.c.h.b16 %v5709
      %v6034 = vunpack.c.l.b16 %v5710
      %v6035 = vunpack.c.h.b16 %v5710
      %v6036 = vunpack.c.l.b16 %v5711
      %v6037 = vunpack.c.h.b16 %v5711
      %v6038 = vunpack.c.l.b16 %v5712
      %v6039 = vunpack.c.h.b16 %v5712
      %v6040 = vunpack.c.l.b16 %v5713
      %v6041 = vunpack.c.h.b16 %v5713
      %v6042 = vunpack.c.l.b16 %v5714
      %v6043 = vunpack.c.h.b16 %v5714
      %v6044 = vunpack.c.l.b16 %v5715
      %v6045 = vunpack.c.h.b16 %v5715
      %v6046 = vunpack.c.l.b16 %v5716
      %v6047 = vunpack.c.h.b16 %v5716
      %v6048 = vunpack.c.l.b16 %v5717
      %v6049 = vunpack.c.h.b16 %v5717
      %v6050 = vunpack.c.l.b16 %v5718
      %v6051 = vunpack.c.h.b16 %v5718
      %v6052 = vunpack.c.l.b16 %v5719
      %v6053 = vunpack.c.h.b16 %v5719
      %v6054 = vunpack.c.l.b16 %v5720
      %v6055 = vunpack.c.h.b16 %v5720
      %v6056 = vunpack.c.l.b16 %v5721
      %v6057 = vunpack.c.h.b16 %v5721
      %v6058 = vunpack.c.l.b16 %v5722
      %v6059 = vunpack.c.h.b16 %v5722
      %v6060 = vunpack.c.l.b16 %v5723
      %v6061 = vunpack.c.h.b16 %v5723
      %v6062 = vunpack.c.l.b16 %v5724
      %v6063 = vunpack.c.h.b16 %v5724
      %v6064 = vunpack.c.l.b16 %v5725
      %v6065 = vunpack.c.h.b16 %v5725
      %v6066 = vunpack.c.l.b16 %v5726
      %v6067 = vunpack.c.h.b16 %v5726
      %v6068 = vunpack.c.l.b16 %v5727
      %v6069 = vunpack.c.h.b16 %v5727
      %v6070 = vunpack.c.l.b16 %v5728
      %v6071 = vunpack.c.h.b16 %v5728
      %v6072 = vunpack.c.l.b16 %v5729
      %v6073 = vunpack.c.h.b16 %v5729
      %v6074 = vunpack.c.l.b16 %v5730
      %v6075 = vunpack.c.h.b16 %v5730
      %v6076 = vunpack.c.l.b16 %v5731
      %v6077 = vunpack.c.h.b16 %v5731
      %v6078 = vunpack.c.l.b16 %v5732
      %v6079 = vunpack.c.h.b16 %v5732
      %v6080 = vunpack.c.l.b16 %v5733
      %v6081 = vunpack.c.h.b16 %v5733
      %v6082 = vunpack.c.l.b16 %v5734
      %v6083 = vunpack.c.h.b16 %v5734
      %v6084 = vunpack.c.l.b16 %v5735
      %v6085 = vunpack.c.h.b16 %v5735
      %v6086 = vunpack.c.l.b16 %v5736
      %v6087 = vunpack.c.h.b16 %v5736
      %v6088 = vunpack.c.l.b16 %v5737
      %v6089 = vunpack.c.h.b16 %v5737
      %v6090 = vunpack.c.l.b16 %v5738
      %v6091 = vunpack.c.h.b16 %v5738
      %v6092 = vunpack.c.l.b16 %v5739
      %v6093 = vunpack.c.h.b16 %v5739
      %v6094 = vunpack.c.l.b16 %v5740
      %v6095 = vunpack.c.h.b16 %v5740
      %v6096 = vunpack.c.l.b16 %v5741
      %v6097 = vunpack.c.h.b16 %v5741
      %v6098 = vunpack.c.l.b16 %v5742
      %v6099 = vunpack.c.h.b16 %v5742
      %v6100 = vunpack.c.l.b16 %v5743
      %v6101 = vunpack.c.h.b16 %v5743
      %v6102 = vunpack.c.l.b16 %v5744
      %v6103 = vunpack.c.h.b16 %v5744
      %v6104 = vunpack.c.l.b16 %v5745
      %v6105 = vunpack.c.h.b16 %v5745
      %v6106 = vunpack.c.l.b16 %v5746
      %v6107 = vunpack.c.h.b16 %v5746
      %v6108 = vunpack.c.l.b16 %v5747
      %v6109 = vunpack.c.h.b16 %v5747
      %v6110 = vunpack.c.l.b16 %v5748
      %v6111 = vunpack.c.h.b16 %v5748
      %v6112 = vunpack.c.l.b16 %v5749
      %v6113 = vunpack.c.h.b16 %v5749
      %v6114 = vunpack.c.l.b16 %v5750
      %v6115 = vunpack.c.h.b16 %v5750
      %v6116 = vunpack.c.l.b16 %v5751
      %v6117 = vunpack.c.h.b16 %v5751
      %v6118 = vunpack.c.l.b16 %v5752
      %v6119 = vunpack.c.h.b16 %v5752
      %v6120 = vunpack.c.l.b16 %v5753
      %v6121 = vunpack.c.h.b16 %v5753
      %v6122 = vunpack.c.l.b16 %v5754
      %v6123 = vunpack.c.h.b16 %v5754
      %v6124 = vunpack.c.l.b16 %v5755
      %v6125 = vunpack.c.h.b16 %v5755
      %v6126 = vunpack.c.l.b16 %v5756
      %v6127 = vunpack.c.h.b16 %v5756
      %v6128 = vunpack.c.l.b16 %v5757
      %v6129 = vunpack.c.h.b16 %v5757
      %v6130 = vunpack.c.l.b16 %v5758
      %v6131 = vunpack.c.h.b16 %v5758
      %v6132 = vunpack.c.l.b16 %v5759
      %v6133 = vunpack.c.h.b16 %v5759
      %v6134 = vunpack.c.l.b16 %v5760
      %v6135 = vunpack.c.h.b16 %v5760
      %v6136 = vunpack.c.l.b16 %v5761
      %v6137 = vunpack.c.h.b16 %v5761
      %v6138 = vunpack.c.l.b16 %v5762
      %v6139 = vunpack.c.h.b16 %v5762
      %v6140 = vunpack.c.l.b16 %v5763
      %v6141 = vunpack.c.h.b16 %v5763
      %v6142 = vunpack.c.l.b16 %v5764
      %v6143 = vunpack.c.h.b16 %v5764
      %v6144 = vunpack.c.l.b16 %v5765
      %v6145 = vunpack.c.h.b16 %v5765
      %v6146 = vunpack.c.l.b16 %v5766
      %v6147 = vunpack.c.h.b16 %v5766
      %v6148 = vunpack.c.l.b16 %v5767
      %v6149 = vunpack.c.h.b16 %v5767
      %v6150 = vunpack.c.l.b16 %v5768
      %v6151 = vunpack.c.h.b16 %v5768
      %v6152 = vunpack.c.l.b16 %v5769
      %v6153 = vunpack.c.h.b16 %v5769
      %v6154 = vpack.c.b16 %v5906, %v5898
      %v6155 = vpack.c.b16 %v5907, %v5899
      %v6156 = vpack.c.b16 %v5908, %v5900
      %v6157 = vpack.c.b16 %v5909, %v5901
      %v6158 = vpack.c.b16 %v5910, %v5902
      %v6159 = vpack.c.b16 %v5911, %v5903
      %v6160 = vpack.c.b16 %v5912, %v5904
      %v6161 = vpack.c.b16 %v5913, %v5905
      %v6162 = vpack.c.b16 %v5922, %v5914
      %v6163 = vpack.c.b16 %v5923, %v5915
      %v6164 = vpack.c.b16 %v5924, %v5916
      %v6165 = vpack.c.b16 %v5925, %v5917
      %v6166 = vpack.c.b16 %v5926, %v5918
      %v6167 = vpack.c.b16 %v5927, %v5919
      %v6168 = vpack.c.b16 %v5928, %v5920
      %v6169 = vpack.c.b16 %v5929, %v5921
      %v6170 = vpack.c.b16 %v5938, %v5930
      %v6171 = vpack.c.b16 %v5939, %v5931
      %v6172 = vpack.c.b16 %v5940, %v5932
      %v6173 = vpack.c.b16 %v5941, %v5933
      %v6174 = vpack.c.b16 %v5942, %v5934
      %v6175 = vpack.c.b16 %v5943, %v5935
      %v6176 = vpack.c.b16 %v5944, %v5936
      %v6177 = vpack.c.b16 %v5945, %v5937
      %v6178 = vpack.c.b16 %v5954, %v5946
      %v6179 = vpack.c.b16 %v5955, %v5947
      %v6180 = vpack.c.b16 %v5956, %v5948
      %v6181 = vpack.c.b16 %v5957, %v5949
      %v6182 = vpack.c.b16 %v5958, %v5950
      %v6183 = vpack.c.b16 %v5959, %v5951
      %v6184 = vpack.c.b16 %v5960, %v5952
      %v6185 = vpack.c.b16 %v5961, %v5953
      %v6186 = vpack.c.b16 %v5970, %v5962
      %v6187 = vpack.c.b16 %v5971, %v5963
      %v6188 = vpack.c.b16 %v5972, %v5964
      %v6189 = vpack.c.b16 %v5973, %v5965
      %v6190 = vpack.c.b16 %v5974, %v5966
      %v6191 = vpack.c.b16 %v5975, %v5967
      %v6192 = vpack.c.b16 %v5976, %v5968
      %v6193 = vpack.c.b16 %v5977, %v5969
      %v6194 = vpack.c.b16 %v5986, %v5978
      %v6195 = vpack.c.b16 %v5987, %v5979
      %v6196 = vpack.c.b16 %v5988, %v5980
      %v6197 = vpack.c.b16 %v5989, %v5981
      %v6198 = vpack.c.b16 %v5990, %v5982
      %v6199 = vpack.c.b16 %v5991, %v5983
      %v6200 = vpack.c.b16 %v5992, %v5984
      %v6201 = vpack.c.b16 %v5993, %v5985
      %v6202 = vpack.c.b16 %v6002, %v5994
      %v6203 = vpack.c.b16 %v6003, %v5995
      %v6204 = vpack.c.b16 %v6004, %v5996
      %v6205 = vpack.c.b16 %v6005, %v5997
      %v6206 = vpack.c.b16 %v6006, %v5998
      %v6207 = vpack.c.b16 %v6007, %v5999
      %v6208 = vpack.c.b16 %v6008, %v6000
      %v6209 = vpack.c.b16 %v6009, %v6001
      %v6210 = vpack.c.b16 %v6018, %v6010
      %v6211 = vpack.c.b16 %v6019, %v6011
      %v6212 = vpack.c.b16 %v6020, %v6012
      %v6213 = vpack.c.b16 %v6021, %v6013
      %v6214 = vpack.c.b16 %v6022, %v6014
      %v6215 = vpack.c.b16 %v6023, %v6015
      %v6216 = vpack.c.b16 %v6024, %v6016
      %v6217 = vpack.c.b16 %v6025, %v6017
      %v6218 = vpack.c.b16 %v6034, %v6026
      %v6219 = vpack.c.b16 %v6035, %v6027
      %v6220 = vpack.c.b16 %v6036, %v6028
      %v6221 = vpack.c.b16 %v6037, %v6029
      %v6222 = vpack.c.b16 %v6038, %v6030
      %v6223 = vpack.c.b16 %v6039, %v6031
      %v6224 = vpack.c.b16 %v6040, %v6032
      %v6225 = vpack.c.b16 %v6041, %v6033
      %v6226 = vpack.c.b16 %v6050, %v6042
      %v6227 = vpack.c.b16 %v6051, %v6043
      %v6228 = vpack.c.b16 %v6052, %v6044
      %v6229 = vpack.c.b16 %v6053, %v6045
      %v6230 = vpack.c.b16 %v6054, %v6046
      %v6231 = vpack.c.b16 %v6055, %v6047
      %v6232 = vpack.c.b16 %v6056, %v6048
      %v6233 = vpack.c.b16 %v6057, %v6049
      %v6234 = vpack.c.b16 %v6066, %v6058
      %v6235 = vpack.c.b16 %v6067, %v6059
      %v6236 = vpack.c.b16 %v6068, %v6060
      %v6237 = vpack.c.b16 %v6069, %v6061
      %v6238 = vpack.c.b16 %v6070, %v6062
      %v6239 = vpack.c.b16 %v6071, %v6063
      %v6240 = vpack.c.b16 %v6072, %v6064
      %v6241 = vpack.c.b16 %v6073, %v6065
      %v6242 = vpack.c.b16 %v6082, %v6074
      %v6243 = vpack.c.b16 %v6083, %v6075
      %v6244 = vpack.c.b16 %v6084, %v6076
      %v6245 = vpack.c.b16 %v6085, %v6077
      %v6246 = vpack.c.b16 %v6086, %v6078
      %v6247 = vpack.c.b16 %v6087, %v6079
      %v6248 = vpack.c.b16 %v6088, %v6080
      %v6249 = vpack.c.b16 %v6089, %v6081
      %v6250 = vpack.c.b16 %v6098, %v6090
      %v6251 = vpack.c.b16 %v6099, %v6091
      %v6252 = vpack.c.b16 %v6100, %v6092
      %v6253 = vpack.c.b16 %v6101, %v6093
      %v6254 = vpack.c.b16 %v6102, %v6094
      %v6255 = vpack.c.b16 %v6103, %v6095
      %v6256 = vpack.c.b16 %v6104, %v6096
      %v6257 = vpack.c.b16 %v6105, %v6097
      %v6258 = vpack.c.b16 %v6114, %v6106
      %v6259 = vpack.c.b16 %v6115, %v6107
      %v6260 = vpack.c.b16 %v6116, %v6108
      %v6261 = vpack.c.b16 %v6117, %v6109
      %v6262 = vpack.c.b16 %v6118, %v6110
      %v6263 = vpack.c.b16 %v6119, %v6111
      %v6264 = vpack.c.b16 %v6120, %v6112
      %v6265 = vpack.c.b16 %v6121, %v6113
      %v6266 = vpack.c.b16 %v6130, %v6122
      %v6267 = vpack.c.b16 %v6131, %v6123
      %v6268 = vpack.c.b16 %v6132, %v6124
      %v6269 = vpack.c.b16 %v6133, %v6125
      %v6270 = vpack.c.b16 %v6134, %v6126
      %v6271 = vpack.c.b16 %v6135, %v6127
      %v6272 = vpack.c.b16 %v6136, %v6128
      %v6273 = vpack.c.b16 %v6137, %v6129
      %v6274 = vpack.c.b16 %v6146, %v6138
      %v6275 = vpack.c.b16 %v6147, %v6139
      %v6276 = vpack.c.b16 %v6148, %v6140
      %v6277 = vpack.c.b16 %v6149, %v6141
      %v6278 = vpack.c.b16 %v6150, %v6142
      %v6279 = vpack.c.b16 %v6151, %v6143
      %v6280 = vpack.c.b16 %v6152, %v6144
      %v6281 = vpack.c.b16 %v6153, %v6145
      %6410 = vmatpush.bf16.msra.mxu0 %v6210
      %6411 = vmatpush.bf16.msra.mxu0 %v6202
      %6412 = vmatpush.bf16.msra.mxu0 %v6194
      %6413 = vmatpush.bf16.msra.mxu0 %v6186
      %6414 = vmatpush.bf16.msra.mxu0 %v6178
      %6415 = vmatpush.bf16.msra.mxu0 %v6170
      %6416 = vmatpush.bf16.msra.mxu0 %v6162
      %6417 = vmatpush.bf16.msra.mxu0 %v6154
      %6418 = vmatmul.bf16.gmra.mxu0 %v5640
      %v6419 = vpop.f32.mrf.mxu0
      %v6420 = vadd.f32 0.0, %v6419
      %v6421 = vpop.f32.mrf.mxu0
      %6422 = vdwg.mxu0
      %6423 = vmatpush.bf16.msra.mxu0 %v6274
      %6424 = vmatpush.bf16.msra.mxu0 %v6266
      %6425 = vmatpush.bf16.msra.mxu0 %v6258
      %6426 = vmatpush.bf16.msra.mxu0 %v6250
      %6427 = vmatpush.bf16.msra.mxu0 %v6242
      %6428 = vmatpush.bf16.msra.mxu0 %v6234
      %6429 = vmatpush.bf16.msra.mxu0 %v6226
      %6430 = vmatpush.bf16.msra.mxu0 %v6218
      %6431 = vmatmul.bf16.gmra.mxu0 %v5641
      %v6432 = vpop.f32.mrf.mxu0
      %v6433 = vadd.f32 %v6420, %v6432
      %v6434 = vpop.f32.mrf.mxu0
      %6435 = vdwg.mxu0
      %6436 = vmatpush.bf16.msra.mxu0 %v6211
      %6437 = vmatpush.bf16.msra.mxu0 %v6203
      %6438 = vmatpush.bf16.msra.mxu0 %v6195
      %6439 = vmatpush.bf16.msra.mxu0 %v6187
      %6440 = vmatpush.bf16.msra.mxu0 %v6179
      %6441 = vmatpush.bf16.msra.mxu0 %v6171
      %6442 = vmatpush.bf16.msra.mxu0 %v6163
      %6443 = vmatpush.bf16.msra.mxu0 %v6155
      %6444 = vmatmul.bf16.gmra.mxu0 %v5640
      %v6445 = vpop.f32.mrf.mxu0
      %v6446 = vadd.f32 0.0, %v6445
      %v6447 = vpop.f32.mrf.mxu0
      %6448 = vdwg.mxu0
      %6449 = vmatpush.bf16.msra.mxu0 %v6275
      %6450 = vmatpush.bf16.msra.mxu0 %v6267
      %6451 = vmatpush.bf16.msra.mxu0 %v6259
      %6452 = vmatpush.bf16.msra.mxu0 %v6251
      %6453 = vmatpush.bf16.msra.mxu0 %v6243
      %6454 = vmatpush.bf16.msra.mxu0 %v6235
      %6455 = vmatpush.bf16.msra.mxu0 %v6227
      %6456 = vmatpush.bf16.msra.mxu0 %v6219
      %6457 = vmatmul.bf16.gmra.mxu0 %v5641
      %v6458 = vpop.f32.mrf.mxu0
      %v6459 = vadd.f32 %v6446, %v6458
      %v6460 = vpop.f32.mrf.mxu0
      %6461 = vdwg.mxu0
      %6462 = vmatpush.bf16.msra.mxu0 %v6212
      %6463 = vmatpush.bf16.msra.mxu0 %v6204
      %6464 = vmatpush.bf16.msra.mxu0 %v6196
      %6465 = vmatpush.bf16.msra.mxu0 %v6188
      %6466 = vmatpush.bf16.msra.mxu0 %v6180
      %6467 = vmatpush.bf16.msra.mxu0 %v6172
      %6468 = vmatpush.bf16.msra.mxu0 %v6164
      %6469 = vmatpush.bf16.msra.mxu0 %v6156
      %6470 = vmatmul.bf16.gmra.mxu0 %v5640
      %v6471 = vpop.f32.mrf.mxu0
      %v6472 = vadd.f32 0.0, %v6471
      %v6473 = vpop.f32.mrf.mxu0
      %6474 = vdwg.mxu0
      %6475 = vmatpush.bf16.msra.mxu0 %v6276
      %6476 = vmatpush.bf16.msra.mxu0 %v6268
      %6477 = vmatpush.bf16.msra.mxu0 %v6260
      %6478 = vmatpush.bf16.msra.mxu0 %v6252
      %6479 = vmatpush.bf16.msra.mxu0 %v6244
      %6480 = vmatpush.bf16.msra.mxu0 %v6236
      %6481 = vmatpush.bf16.msra.mxu0 %v6228
      %6482 = vmatpush.bf16.msra.mxu0 %v6220
      %6483 = vmatmul.bf16.gmra.mxu0 %v5641
      %v6484 = vpop.f32.mrf.mxu0
      %v6485 = vadd.f32 %v6472, %v6484
      %v6486 = vpop.f32.mrf.mxu0
      %6487 = vdwg.mxu0
      %6488 = vmatpush.bf16.msra.mxu0 %v6213
      %6489 = vmatpush.bf16.msra.mxu0 %v6205
      %6490 = vmatpush.bf16.msra.mxu0 %v6197
      %6491 = vmatpush.bf16.msra.mxu0 %v6189
      %6492 = vmatpush.bf16.msra.mxu0 %v6181
      %6493 = vmatpush.bf16.msra.mxu0 %v6173
      %6494 = vmatpush.bf16.msra.mxu0 %v6165
      %6495 = vmatpush.bf16.msra.mxu0 %v6157
      %6496 = vmatmul.bf16.gmra.mxu0 %v5640
      %v6497 = vpop.f32.mrf.mxu0
      %v6498 = vadd.f32 0.0, %v6497
      %v6499 = vpop.f32.mrf.mxu0
      %6500 = vdwg.mxu0
      %6501 = vmatpush.bf16.msra.mxu0 %v6277
      %6502 = vmatpush.bf16.msra.mxu0 %v6269
      %6503 = vmatpush.bf16.msra.mxu0 %v6261
      %6504 = vmatpush.bf16.msra.mxu0 %v6253
      %6505 = vmatpush.bf16.msra.mxu0 %v6245
      %6506 = vmatpush.bf16.msra.mxu0 %v6237
      %6507 = vmatpush.bf16.msra.mxu0 %v6229
      %6508 = vmatpush.bf16.msra.mxu0 %v6221
      %6509 = vmatmul.bf16.gmra.mxu0 %v5641
      %v6510 = vpop.f32.mrf.mxu0
      %v6511 = vadd.f32 %v6498, %v6510
      %v6512 = vpop.f32.mrf.mxu0
      %6513 = vdwg.mxu0
      %6514 = vmatpush.bf16.msra.mxu0 %v6214
      %6515 = vmatpush.bf16.msra.mxu0 %v6206
      %6516 = vmatpush.bf16.msra.mxu0 %v6198
      %6517 = vmatpush.bf16.msra.mxu0 %v6190
      %6518 = vmatpush.bf16.msra.mxu0 %v6182
      %6519 = vmatpush.bf16.msra.mxu0 %v6174
      %6520 = vmatpush.bf16.msra.mxu0 %v6166
      %6521 = vmatpush.bf16.msra.mxu0 %v6158
      %6522 = vmatmul.bf16.gmra.mxu0 %v5640
      %v6523 = vpop.f32.mrf.mxu0
      %v6524 = vadd.f32 0.0, %v6523
      %v6525 = vpop.f32.mrf.mxu0
      %6526 = vdwg.mxu0
      %6527 = vmatpush.bf16.msra.mxu0 %v6278
      %6528 = vmatpush.bf16.msra.mxu0 %v6270
      %6529 = vmatpush.bf16.msra.mxu0 %v6262
      %6530 = vmatpush.bf16.msra.mxu0 %v6254
      %6531 = vmatpush.bf16.msra.mxu0 %v6246
      %6532 = vmatpush.bf16.msra.mxu0 %v6238
      %6533 = vmatpush.bf16.msra.mxu0 %v6230
      %6534 = vmatpush.bf16.msra.mxu0 %v6222
      %6535 = vmatmul.bf16.gmra.mxu0 %v5641
      %v6536 = vpop.f32.mrf.mxu0
      %v6537 = vadd.f32 %v6524, %v6536
      %v6538 = vpop.f32.mrf.mxu0
      %6539 = vdwg.mxu0
      %6540 = vmatpush.bf16.msra.mxu0 %v6215
      %6541 = vmatpush.bf16.msra.mxu0 %v6207
      %6542 = vmatpush.bf16.msra.mxu0 %v6199
      %6543 = vmatpush.bf16.msra.mxu0 %v6191
      %6544 = vmatpush.bf16.msra.mxu0 %v6183
      %6545 = vmatpush.bf16.msra.mxu0 %v6175
      %6546 = vmatpush.bf16.msra.mxu0 %v6167
      %6547 = vmatpush.bf16.msra.mxu0 %v6159
      %6548 = vmatmul.bf16.gmra.mxu0 %v5640
      %v6549 = vpop.f32.mrf.mxu0
      %v6550 = vadd.f32 0.0, %v6549
      %v6551 = vpop.f32.mrf.mxu0
      %6552 = vdwg.mxu0
      %6553 = vmatpush.bf16.msra.mxu0 %v6279
      %6554 = vmatpush.bf16.msra.mxu0 %v6271
      %6555 = vmatpush.bf16.msra.mxu0 %v6263
      %6556 = vmatpush.bf16.msra.mxu0 %v6255
      %6557 = vmatpush.bf16.msra.mxu0 %v6247
      %6558 = vmatpush.bf16.msra.mxu0 %v6239
      %6559 = vmatpush.bf16.msra.mxu0 %v6231
      %6560 = vmatpush.bf16.msra.mxu0 %v6223
      %6561 = vmatmul.bf16.gmra.mxu0 %v5641
      %v6562 = vpop.f32.mrf.mxu0
      %v6563 = vadd.f32 %v6550, %v6562
      %v6564 = vpop.f32.mrf.mxu0
      %6565 = vdwg.mxu0
      %6566 = vmatpush.bf16.msra.mxu0 %v6216
      %6567 = vmatpush.bf16.msra.mxu0 %v6208
      %6568 = vmatpush.bf16.msra.mxu0 %v6200
      %6569 = vmatpush.bf16.msra.mxu0 %v6192
      %6570 = vmatpush.bf16.msra.mxu0 %v6184
      %6571 = vmatpush.bf16.msra.mxu0 %v6176
      %6572 = vmatpush.bf16.msra.mxu0 %v6168
      %6573 = vmatpush.bf16.msra.mxu0 %v6160
      %6574 = vmatmul.bf16.gmra.mxu0 %v5640
      %v6575 = vpop.f32.mrf.mxu0
      %v6576 = vadd.f32 0.0, %v6575
      %v6577 = vpop.f32.mrf.mxu0
      %6578 = vdwg.mxu0
      %6579 = vmatpush.bf16.msra.mxu0 %v6280
      %6580 = vmatpush.bf16.msra.mxu0 %v6272
      %6581 = vmatpush.bf16.msra.mxu0 %v6264
      %6582 = vmatpush.bf16.msra.mxu0 %v6256
      %6583 = vmatpush.bf16.msra.mxu0 %v6248
      %6584 = vmatpush.bf16.msra.mxu0 %v6240
      %6585 = vmatpush.bf16.msra.mxu0 %v6232
      %6586 = vmatpush.bf16.msra.mxu0 %v6224
      %6587 = vmatmul.bf16.gmra.mxu0 %v5641
      %v6588 = vpop.f32.mrf.mxu0
      %v6589 = vadd.f32 %v6576, %v6588
      %v6590 = vpop.f32.mrf.mxu0
      %6591 = vdwg.mxu0
      %6592 = vmatpush.bf16.msra.mxu0 %v6217
      %6593 = vmatpush.bf16.msra.mxu0 %v6209
      %6594 = vmatpush.bf16.msra.mxu0 %v6201
      %6595 = vmatpush.bf16.msra.mxu0 %v6193
      %6596 = vmatpush.bf16.msra.mxu0 %v6185
      %6597 = vmatpush.bf16.msra.mxu0 %v6177
      %6598 = vmatpush.bf16.msra.mxu0 %v6169
      %6599 = vmatpush.bf16.msra.mxu0 %v6161
      %6600 = vmatmul.bf16.gmra.mxu0 %v5640
      %v6601 = vpop.f32.mrf.mxu0
      %v6602 = vadd.f32 0.0, %v6601
      %v6603 = vpop.f32.mrf.mxu0
      %6604 = vdwg.mxu0
      %6605 = vmatpush.bf16.msra.mxu0 %v6281
      %6606 = vmatpush.bf16.msra.mxu0 %v6273
      %6607 = vmatpush.bf16.msra.mxu0 %v6265
      %6608 = vmatpush.bf16.msra.mxu0 %v6257
      %6609 = vmatpush.bf16.msra.mxu0 %v6249
      %6610 = vmatpush.bf16.msra.mxu0 %v6241
      %6611 = vmatpush.bf16.msra.mxu0 %v6233
      %6612 = vmatpush.bf16.msra.mxu0 %v6225
      %6613 = vmatmul.bf16.gmra.mxu0 %v5641
      %v6614 = vpop.f32.mrf.mxu0
      %v6615 = vadd.f32 %v6602, %v6614
      %v6616 = vpop.f32.mrf.mxu0
      %6617 = vdwg.mxu0
      %v6618 = vadd.f32 %v5636, %v6433
      %v6619 = vadd.f32 %v5637, %v6459
      %v6620 = vadd.f32 %v5638, %v6485
      %v6621 = vadd.f32 %v5639, %v6511
      %v6622 = vxor.u32 %v6618, 2147483648
      %v6623 = vxor.u32 %v6619, 2147483648
      %v6624 = vxor.u32 %v6620, 2147483648
      %v6625 = vmul.f32 %v6622, 1.442695
      %v6626 = vpow.pop %v6625
      %v6627 = vmul.f32 %v6623, 1.442695
      %v6628 = vpow.pop %v6627
      %v6629 = vmul.f32 %v6624, 1.442695
      %v6630 = vpow.pop %v6629
      %v6631 = vadd.f32 %v6626, 1.0
      %v6632 = vadd.f32 %v6628, 1.0
      %v6633 = vadd.f32 %v6630, 1.0
      %v6634 = vrcp.pop %v6631
      %v6635 = vmul.f32 %v6631, %v6634
      %v6636 = vsub.f32 1.0, %v6635
      %v6637 = vmul.f32 %v6634, %v6636
      %v6638 = vadd.f32 %v6634, %v6637
      %vm6639 = vweird.f32 %v6631
      %vm6640 = vweird.f32 %v6634
      %vm6641 = vmor %vm6639, %vm6640
      %v6642 = vsel %vm6641, %v6634, %v6638
      %v6643 = vand.u32 2147483647, %v6631
      %vm6644 = vcmp.eq.f32.partialorder %v6643, 8.507059e+37
      %v6645 = vand.u32 %v6631, 2147483648
      %v6646 = vor.u32 1.1754944e-38, %v6645
      %v6647 = vsel %vm6644, %v6646, %v6642
      %v6648 = vmul.f32 1.0, %v6647
      %v6649 = vrcp.pop %v6632
      %v6650 = vmul.f32 %v6632, %v6649
      %v6651 = vsub.f32 1.0, %v6650
      %v6652 = vmul.f32 %v6649, %v6651
      %v6653 = vadd.f32 %v6649, %v6652
      %vm6654 = vweird.f32 %v6632
      %vm6655 = vweird.f32 %v6649
      %vm6656 = vmor %vm6654, %vm6655
      %v6657 = vsel %vm6656, %v6649, %v6653
      %v6658 = vand.u32 2147483647, %v6632
      %vm6659 = vcmp.eq.f32.partialorder %v6658, 8.507059e+37
      %v6660 = vand.u32 %v6632, 2147483648
      %v6661 = vor.u32 1.1754944e-38, %v6660
      %v6662 = vsel %vm6659, %v6661, %v6657
      %v6663 = vmul.f32 1.0, %v6662
      %v6664 = vrcp.pop %v6633
      %v6665 = vmul.f32 %v6633, %v6664
      %v6666 = vsub.f32 1.0, %v6665
      %v6667 = vmul.f32 %v6664, %v6666
      %v6668 = vadd.f32 %v6664, %v6667
      %vm6669 = vweird.f32 %v6633
      %vm6670 = vweird.f32 %v6664
      %vm6671 = vmor %vm6669, %vm6670
      %v6672 = vsel %vm6671, %v6664, %v6668
      %v6673 = vand.u32 2147483647, %v6633
      %vm6674 = vcmp.eq.f32.partialorder %v6673, 8.507059e+37
      %v6675 = vand.u32 %v6633, 2147483648
      %v6676 = vor.u32 1.1754944e-38, %v6675
      %v6677 = vsel %vm6674, %v6676, %v6672
      %v6678 = vmul.f32 1.0, %v6677
      %v6679 = vtanh.pop %v6621
      %v6680 = vmul.f32 %v6663, %v5608
      %v6681 = vmul.f32 %v6648, %v6679
      %v6682 = vadd.f32 %v6680, %v6681
      %v6683 = vtanh.pop %v6682
      %v6684 = vmul.f32 %v6678, %v6683
      %v6685 = vpack.c.bf16 %v6684, %v6684
      %v6686 = vld [vmem:[#allocation11] sm:$0xff]
      %v6687 = vld [vmem:[#allocation11 + $0x8] sm:$0xff]
      %v6688 = vld [vmem:[#allocation11 + $0x10] sm:$0xff]
      %v6689 = vld [vmem:[#allocation11 + $0x18] sm:$0xff]
      %v6690 = vld [vmem:[#allocation11 + $0x20] sm:$0xff]
      %v6691 = vld [vmem:[#allocation11 + $0x28] sm:$0xff]
      %v6692 = vld [vmem:[#allocation11 + $0x30] sm:$0xff]
      %v6693 = vld [vmem:[#allocation11 + $0x38] sm:$0xff]
      %v6694 = vld [vmem:[#allocation11 + $0x40] sm:$0xff]
      %v6695 = vld [vmem:[#allocation11 + $0x48] sm:$0xff]
      %v6696 = vld [vmem:[#allocation11 + $0x50] sm:$0xff]
      %v6697 = vld [vmem:[#allocation11 + $0x58] sm:$0xff]
      %v6698 = vld [vmem:[#allocation11 + $0x60] sm:$0xff]
      %v6699 = vld [vmem:[#allocation11 + $0x68] sm:$0xff]
      %v6700 = vld [vmem:[#allocation11 + $0x70] sm:$0xff]
      %v6701 = vld [vmem:[#allocation11 + $0x78] sm:$0xff]
      %v6702 = vld [vmem:[#allocation11 + $0x80] sm:$0xff]
      %v6703 = vld [vmem:[#allocation11 + $0x88] sm:$0xff]
      %v6704 = vld [vmem:[#allocation11 + $0x90] sm:$0xff]
      %v6705 = vld [vmem:[#allocation11 + $0x98] sm:$0xff]
      %v6706 = vld [vmem:[#allocation11 + $0xa0] sm:$0xff]
      %v6707 = vld [vmem:[#allocation11 + $0xa8] sm:$0xff]
      %v6708 = vld [vmem:[#allocation11 + $0xb0] sm:$0xff]
      %v6709 = vld [vmem:[#allocation11 + $0xb8] sm:$0xff]
      %v6710 = vld [vmem:[#allocation11 + $0xc0] sm:$0xff]
      %v6711 = vld [vmem:[#allocation11 + $0xc8] sm:$0xff]
      %v6712 = vld [vmem:[#allocation11 + $0xd0] sm:$0xff]
      %v6713 = vld [vmem:[#allocation11 + $0xd8] sm:$0xff]
      %v6714 = vld [vmem:[#allocation11 + $0xe0] sm:$0xff]
      %v6715 = vld [vmem:[#allocation11 + $0xe8] sm:$0xff]
      %v6716 = vld [vmem:[#allocation11 + $0xf0] sm:$0xff]
      %v6717 = vld [vmem:[#allocation11 + $0xf8] sm:$0xff]
      %v6750 = vunpack.c.l.b16 %v6686
      %v6751 = vunpack.c.h.b16 %v6686
      %v6752 = vunpack.c.l.b16 %v6687
      %v6753 = vunpack.c.h.b16 %v6687
      %v6754 = vunpack.c.l.b16 %v6688
      %v6755 = vunpack.c.h.b16 %v6688
      %v6756 = vunpack.c.l.b16 %v6689
      %v6757 = vunpack.c.h.b16 %v6689
      %v6758 = vunpack.c.l.b16 %v6690
      %v6759 = vunpack.c.h.b16 %v6690
      %v6760 = vunpack.c.l.b16 %v6691
      %v6761 = vunpack.c.h.b16 %v6691
      %v6762 = vunpack.c.l.b16 %v6692
      %v6763 = vunpack.c.h.b16 %v6692
      %v6764 = vunpack.c.l.b16 %v6693
      %v6765 = vunpack.c.h.b16 %v6693
      %v6766 = vunpack.c.l.b16 %v6694
      %v6767 = vunpack.c.h.b16 %v6694
      %v6768 = vunpack.c.l.b16 %v6695
      %v6769 = vunpack.c.h.b16 %v6695
      %v6770 = vunpack.c.l.b16 %v6696
      %v6771 = vunpack.c.h.b16 %v6696
      %v6772 = vunpack.c.l.b16 %v6697
      %v6773 = vunpack.c.h.b16 %v6697
      %v6774 = vunpack.c.l.b16 %v6698
      %v6775 = vunpack.c.h.b16 %v6698
      %v6776 = vunpack.c.l.b16 %v6699
      %v6777 = vunpack.c.h.b16 %v6699
      %v6778 = vunpack.c.l.b16 %v6700
      %v6779 = vunpack.c.h.b16 %v6700
      %v6780 = vunpack.c.l.b16 %v6701
      %v6781 = vunpack.c.h.b16 %v6701
      %v6782 = vunpack.c.l.b16 %v6702
      %v6783 = vunpack.c.h.b16 %v6702
      %v6784 = vunpack.c.l.b16 %v6703
      %v6785 = vunpack.c.h.b16 %v6703
      %v6786 = vunpack.c.l.b16 %v6704
      %v6787 = vunpack.c.h.b16 %v6704
      %v6788 = vunpack.c.l.b16 %v6705
      %v6789 = vunpack.c.h.b16 %v6705
      %v6790 = vunpack.c.l.b16 %v6706
      %v6791 = vunpack.c.h.b16 %v6706
      %v6792 = vunpack.c.l.b16 %v6707
      %v6793 = vunpack.c.h.b16 %v6707
      %v6794 = vunpack.c.l.b16 %v6708
      %v6795 = vunpack.c.h.b16 %v6708
      %v6796 = vunpack.c.l.b16 %v6709
      %v6797 = vunpack.c.h.b16 %v6709
      %v6798 = vunpack.c.l.b16 %v6710
      %v6799 = vunpack.c.h.b16 %v6710
      %v6800 = vunpack.c.l.b16 %v6711
      %v6801 = vunpack.c.h.b16 %v6711
      %v6802 = vunpack.c.l.b16 %v6712
      %v6803 = vunpack.c.h.b16 %v6712
      %v6804 = vunpack.c.l.b16 %v6713
      %v6805 = vunpack.c.h.b16 %v6713
      %v6806 = vunpack.c.l.b16 %v6714
      %v6807 = vunpack.c.h.b16 %v6714
      %v6808 = vunpack.c.l.b16 %v6715
      %v6809 = vunpack.c.h.b16 %v6715
      %v6810 = vunpack.c.l.b16 %v6716
      %v6811 = vunpack.c.h.b16 %v6716
      %v6812 = vunpack.c.l.b16 %v6717
      %v6813 = vunpack.c.h.b16 %v6717
      %v6814 = vpack.c.b16 %v6754, %v6750
      %v6815 = vpack.c.b16 %v6755, %v6751
      %v6816 = vpack.c.b16 %v6756, %v6752
      %v6817 = vpack.c.b16 %v6757, %v6753
      %v6818 = vpack.c.b16 %v6762, %v6758
      %v6819 = vpack.c.b16 %v6763, %v6759
      %v6820 = vpack.c.b16 %v6764, %v6760
      %v6821 = vpack.c.b16 %v6765, %v6761
      %v6822 = vpack.c.b16 %v6770, %v6766
      %v6823 = vpack.c.b16 %v6771, %v6767
      %v6824 = vpack.c.b16 %v6772, %v6768
      %v6825 = vpack.c.b16 %v6773, %v6769
      %v6826 = vpack.c.b16 %v6778, %v6774
      %v6827 = vpack.c.b16 %v6779, %v6775
      %v6828 = vpack.c.b16 %v6780, %v6776
      %v6829 = vpack.c.b16 %v6781, %v6777
      %v6830 = vpack.c.b16 %v6786, %v6782
      %v6831 = vpack.c.b16 %v6787, %v6783
      %v6832 = vpack.c.b16 %v6788, %v6784
      %v6833 = vpack.c.b16 %v6789, %v6785
      %v6834 = vpack.c.b16 %v6794, %v6790
      %v6835 = vpack.c.b16 %v6795, %v6791
      %v6836 = vpack.c.b16 %v6796, %v6792
      %v6837 = vpack.c.b16 %v6797, %v6793
      %v6838 = vpack.c.b16 %v6802, %v6798
      %v6839 = vpack.c.b16 %v6803, %v6799
      %v6840 = vpack.c.b16 %v6804, %v6800
      %v6841 = vpack.c.b16 %v6805, %v6801
      %v6842 = vpack.c.b16 %v6810, %v6806
      %v6843 = vpack.c.b16 %v6811, %v6807
      %v6844 = vpack.c.b16 %v6812, %v6808
      %v6845 = vpack.c.b16 %v6813, %v6809
      %6878 = vmatpush.bf16.msra.mxu0 %v6842
      %6879 = vmatpush.bf16.msra.mxu0 %v6838
      %6880 = vmatpush.bf16.msra.mxu0 %v6834
      %6881 = vmatpush.bf16.msra.mxu0 %v6830
      %6882 = vmatpush.bf16.msra.mxu0 %v6826
      %6883 = vmatpush.bf16.msra.mxu0 %v6822
      %6884 = vmatpush.bf16.msra.mxu0 %v6818
      %6885 = vmatpush.bf16.msra.mxu0 %v6814
      %6886 = vmatmul.bf16.gmra.mxu0 %v6685
      %v6887 = vpop.f32.mrf.mxu0
      %v6888 = vadd.f32 %v6537, %v6887
      %v6889 = vpop.f32.mrf.mxu0
      %6890 = vdwg.mxu0
      %6891 = vmatpush.bf16.msra.mxu0 %v6843
      %6892 = vmatpush.bf16.msra.mxu0 %v6839
      %6893 = vmatpush.bf16.msra.mxu0 %v6835
      %6894 = vmatpush.bf16.msra.mxu0 %v6831
      %6895 = vmatpush.bf16.msra.mxu0 %v6827
      %6896 = vmatpush.bf16.msra.mxu0 %v6823
      %6897 = vmatpush.bf16.msra.mxu0 %v6819
      %6898 = vmatpush.bf16.msra.mxu0 %v6815
      %6899 = vmatmul.bf16.gmra.mxu0 %v6685
      %v6900 = vpop.f32.mrf.mxu0
      %v6901 = vadd.f32 %v6563, %v6900
      %v6902 = vpop.f32.mrf.mxu0
      %6903 = vdwg.mxu0
      %6904 = vmatpush.bf16.msra.mxu0 %v6844
      %6905 = vmatpush.bf16.msra.mxu0 %v6840
      %6906 = vmatpush.bf16.msra.mxu0 %v6836
      %6907 = vmatpush.bf16.msra.mxu0 %v6832
      %6908 = vmatpush.bf16.msra.mxu0 %v6828
      %6909 = vmatpush.bf16.msra.mxu0 %v6824
      %6910 = vmatpush.bf16.msra.mxu0 %v6820
      %6911 = vmatpush.bf16.msra.mxu0 %v6816
      %6912 = vmatmul.bf16.gmra.mxu0 %v6685
      %v6913 = vpop.f32.mrf.mxu0
      %v6914 = vadd.f32 %v6589, %v6913
      %v6915 = vpop.f32.mrf.mxu0
      %6916 = vdwg.mxu0
      %6917 = vmatpush.bf16.msra.mxu0 %v6845
      %6918 = vmatpush.bf16.msra.mxu0 %v6841
      %6919 = vmatpush.bf16.msra.mxu0 %v6837
      %6920 = vmatpush.bf16.msra.mxu0 %v6833
      %6921 = vmatpush.bf16.msra.mxu0 %v6829
      %6922 = vmatpush.bf16.msra.mxu0 %v6825
      %6923 = vmatpush.bf16.msra.mxu0 %v6821
      %6924 = vmatpush.bf16.msra.mxu0 %v6817
      %6925 = vmatmul.bf16.gmra.mxu0 %v6685
      %v6926 = vpop.f32.mrf.mxu0
      %v6927 = vadd.f32 %v6615, %v6926
      %v6928 = vpop.f32.mrf.mxu0
      %6929 = vdwg.mxu0
      %v6930 = vld [vmem:[%s8] sm:$0xf]
      %v6932 = vperm.slane %v6930, 0
      %v6933 = vperm.slane %v6930, 1
      %v6934 = vperm.slane %v6930, 2
      %v6935 = vperm.slane %v6930, 3
      %v6940 = vadd.f32 %v6888, %v6932
      %v6941 = vadd.f32 %v6901, %v6933
      %v6942 = vadd.f32 %v6914, %v6934
      %v6943 = vadd.f32 %v6927, %v6935
      %v6944 = vxor.u32 %v6940, 2147483648
      %v6945 = vxor.u32 %v6941, 2147483648
      %v6946 = vxor.u32 %v6942, 2147483648
      %v6947 = vmul.f32 %v6944, 1.442695
      %v6948 = vpow.pop %v6947
      %v6949 = vmul.f32 %v6945, 1.442695
      %v6950 = vpow.pop %v6949
      %v6951 = vmul.f32 %v6946, 1.442695
      %v6952 = vpow.pop %v6951
      %v6953 = vadd.f32 %v6948, 1.0
      %v6954 = vadd.f32 %v6950, 1.0
      %v6955 = vadd.f32 %v6952, 1.0
      %v6956 = vrcp.pop %v6953
      %v6957 = vmul.f32 %v6953, %v6956
      %v6958 = vsub.f32 1.0, %v6957
      %v6959 = vmul.f32 %v6956, %v6958
      %v6960 = vadd.f32 %v6956, %v6959
      %vm6961 = vweird.f32 %v6953
      %vm6962 = vweird.f32 %v6956
      %vm6963 = vmor %vm6961, %vm6962
      %v6964 = vsel %vm6963, %v6956, %v6960
      %v6965 = vand.u32 2147483647, %v6953
      %vm6966 = vcmp.eq.f32.partialorder %v6965, 8.507059e+37
      %v6967 = vand.u32 %v6953, 2147483648
      %v6968 = vor.u32 1.1754944e-38, %v6967
      %v6969 = vsel %vm6966, %v6968, %v6964
      %v6970 = vmul.f32 1.0, %v6969
      %v6971 = vrcp.pop %v6954
      %v6972 = vmul.f32 %v6954, %v6971
      %v6973 = vsub.f32 1.0, %v6972
      %v6974 = vmul.f32 %v6971, %v6973
      %v6975 = vadd.f32 %v6971, %v6974
      %vm6976 = vweird.f32 %v6954
      %vm6977 = vweird.f32 %v6971
      %vm6978 = vmor %vm6976, %vm6977
      %v6979 = vsel %vm6978, %v6971, %v6975
      %v6980 = vand.u32 2147483647, %v6954
      %vm6981 = vcmp.eq.f32.partialorder %v6980, 8.507059e+37
      %v6982 = vand.u32 %v6954, 2147483648
      %v6983 = vor.u32 1.1754944e-38, %v6982
      %v6984 = vsel %vm6981, %v6983, %v6979
      %v6985 = vmul.f32 1.0, %v6984
      %v6986 = vrcp.pop %v6955
      %v6987 = vmul.f32 %v6955, %v6986
      %v6988 = vsub.f32 1.0, %v6987
      %v6989 = vmul.f32 %v6986, %v6988
      %v6990 = vadd.f32 %v6986, %v6989
      %vm6991 = vweird.f32 %v6955
      %vm6992 = vweird.f32 %v6986
      %vm6993 = vmor %vm6991, %vm6992
      %v6994 = vsel %vm6993, %v6986, %v6990
      %v6995 = vand.u32 2147483647, %v6955
      %vm6996 = vcmp.eq.f32.partialorder %v6995, 8.507059e+37
      %v6997 = vand.u32 %v6955, 2147483648
      %v6998 = vor.u32 1.1754944e-38, %v6997
      %v6999 = vsel %vm6996, %v6998, %v6994
      %v7000 = vmul.f32 1.0, %v6999
      %v7001 = vtanh.pop %v6943
      %v7002 = vmul.f32 %v6985, %v5610
      %v7003 = vmul.f32 %v6970, %v7001
      %v7004 = vadd.f32 %v7002, %v7003
      %v7005 = vtanh.pop %v7004
      %v7006 = vmul.f32 %v7000, %v7005
      %v7007 = vld [vmem:[%s9] sm:$0x1]
      %v7008 = vmul.f32 %v7006, %v7007
      %vm7009 = vcmask 1040384
      %v7010 = vsel %vm7009, %v7008, 0.0
      %7011 = vadd.xlane.f32.xlu0 %v7010
      %v7012 = vpop.xlane.xlu0 %7011
      %s7013 = sld [smem:[#allocation2]]
      %v7014 = vstv %s7013
      %v7015 = vadd.f32 %v7012, %v7014
      %s7016 = vtos %v7015
      %s7017 = scalar_lea.smem [#allocation14], %s5602
      %7018 = sst [smem:[%s7017]] %s7016
    $region77: #{tpu_custom_call.1} parent=1 // loop_footer
      %s5606 = sadd.s32 1, %s5602
    $region78: #{tpu_custom_call.1} parent=1 // loop_footer_branch
      %5601 = sbr.rel target = $region74
    $region79: #{tpu_custom_call.1} parent=1 // loop_exit
      _
    // Predicated region
    $region80: #{tpu_custom_call.1} parent=1 // pred_check
      _
    $region81: #{tpu_custom_call.1} parent=1 // pred_check_branch
      %7020 = sbr.rel (0) target = $region83
    $region82: #{tpu_custom_call.1} parent=1 // pred_region
      %7022 = vsyncadd [#allocation5], 0
      %s7024 = sshll.u32 %s10, 4
      %s7025 = int_to_ptr.hbm [resolvable:$true] %s7024
      %7027 = dma.smem_to_hbm [#allocation14], 16, %s7025, [#allocation5]
    $region83: #{tpu_custom_call.1} parent=1 // pred_fallthru
      _
    // Predicated region
    $region84: #{tpu_custom_call.1} parent=1 // pred_check
      _
    $region85: #{tpu_custom_call.1} parent=1 // pred_check_branch
      %7029 = sbr.rel (0) target = $region87
    $region86: #{tpu_custom_call.1} parent=1 // pred_region
      %7031 = dma.done [#allocation5], 16
    $region87: #{tpu_custom_call.1} parent=1 // pred_fallthru
      _
    %7032 = sfence
    %7033 = vsyncpa [#allocation4], 1
    %7034 = vsyncpa [#allocation7], 1
    %7035 = vsyncpa [#allocation10], 1
    %7036 = vsyncpa [#allocation13], 1
    %7037 = vsyncpa [#allocation5], 1

</llo_original>
